<compile_context>
chip_gen: v7x
topology: tpu7x:2x2x1
jax: 0.10.0
libtpu: 0.0.40
codegen_flags: <defaults>
</compile_context>

<pallas_src>
import numpy as np

import jax
import jax.numpy as jnp
from jax import lax
from jax.experimental import pallas as pl
from jax.experimental.pallas import tpu as pltpu


_CIN_PAD = 8   # conv1 input channels padded 3 -> 8 (aligned sublanes, K = 128)


# ----------------------------------------------------------------------------
# In-kernel helpers
# ----------------------------------------------------------------------------
def _shift_flat(x, off):
    """out[:, t] = x[:, (t + off) % P]; wrapped lanes are zeroed by the caller's mask."""
    P = x.shape[-1]
    off = off % P
    if off == 0:
        return x
    if P % 128 == 0:
        # Lane rotation on the XLU (== jnp.roll(x, -off, axis=-1)); shift >= 0.
        return pltpu.roll(x, shift=P - off, axis=1)
    # Tiny maps (< one vreg of lanes, P = 64): slice+concat fallback.
    return jnp.concatenate([x[:, off:], x[:, :off]], axis=1)


def _instance_norm(y, eps=1e-5):
    """InstanceNorm2d (affine=False, biased var, eps=1e-5) over the flat spatial axis."""
    inv_n = 1.0 / y.shape[-1]
    mean = jnp.sum(y, axis=-1, keepdims=True) * inv_n
    mean_sq = jnp.sum(y * y, axis=-1, keepdims=True) * inv_n
    var = jnp.maximum(mean_sq - mean * mean, 0.0)
    return (y - mean) * lax.rsqrt(var + eps)


def _conv_layer(x, w_fused, masks, ksize, H, W, pad=1):
    """Full-resolution 2-D cross-correlation as a single MXU matmul.

    x:       (Cin, H*W) f32, flattened NCHW activation of one sample.
    w_fused: (Cout, KH*KW*Cin) bf16, columns ordered (kh, kw, ci).
    masks:   (KH*KW, H*W) f32 precomputed zero-padding masks, one row per tap.
    Returns  (Cout, H*W) f32 with entry (co, h*W + w) =
        sum_{kh,kw,ci} w[co, ci, kh, kw] * x[ci, h + kh - pad, w + kw - pad]
    (zero outside the image).  Stride-2 is applied afterwards via a constant
    0/1 subsample matmul.
    """
    cols = []
    t = 0
    for kh in range(ksize):
        for kw in range(ksize):
            dh, dw = kh - pad, kw - pad
            shifted = _shift_flat(x, dh * W + dw)
            if dh == 0 and dw == 0:
                cols.append(shifted)                      # centre tap: mask is all-ones
            else:
                cols.append(shifted * masks[t:t + 1, :])
            t += 1
    stacked = jnp.concatenate(cols, axis=0).astype(jnp.bfloat16)   # (K*K*Cin, P)
    return jnp.dot(w_fused, stacked, preferred_element_type=jnp.float32)


# ----------------------------------------------------------------------------
# The fused CycleGenerator kernel (entire network, one sample per grid step)
# ----------------------------------------------------------------------------
def _cycle_generator_kernel(x_ref, w1_ref, w2_ref, w3_ref, w4_ref, w5_ref,
                            m1_ref, m2_ref, m3_ref, m4_ref, m5_ref,
                            s1_ref, s2_ref, u1_ref, u2_ref, out_ref):
    x = x_ref[0]                                                   # (8, 1024) f32

    # conv1: Conv4x4 s2 p1 + InstanceNorm + ReLU : 32x32x3 -> 16x16x(cd)
    acc = _conv_layer(x, w1_ref[...], m1_ref[...], 4, 32, 32)      # (cd, 1024)
    h = jnp.dot(acc.astype(jnp.bfloat16), s1_ref[...],
                preferred_element_type=jnp.float32)                 # (cd, 256)
    h = jnp.maximum(_instance_norm(h), 0.0)

    # conv2: Conv4x4 s2 p1 + InstanceNorm + ReLU : 16x16 -> 8x8x(2cd)
    acc = _conv_layer(h, w2_ref[...], m2_ref[...], 4, 16, 16)       # (2cd, 256)
    h = jnp.dot(acc.astype(jnp.bfloat16), s2_ref[...],
                preferred_element_type=jnp.float32)                 # (2cd, 64)
    h = jnp.maximum(_instance_norm(h), 0.0)

    # resnet block: h = h + relu(IN(conv3x3(h)))
    acc = _conv_layer(h, w3_ref[...], m3_ref[...], 3, 8, 8)         # (2cd, 64)
    h = h + jnp.maximum(_instance_norm(acc), 0.0)

    # up_conv1: Upsample x2 + Conv3x3 + IN + ReLU : 8x8 -> 16x16x(cd)
    up = jnp.dot(h.astype(jnp.bfloat16), u1_ref[...],
                 preferred_element_type=jnp.float32)                # (2cd, 256)
    acc = _conv_layer(up, w4_ref[...], m4_ref[...], 3, 16, 16)      # (cd, 256)
    h = jnp.maximum(_instance_norm(acc), 0.0)

    # up_conv2: Upsample x2 + Conv3x3 + Tanh : 16x16 -> 32x32x3 (no norm, no bias)
    up = jnp.dot(h.astype(jnp.bfloat16), u2_ref[...],
                 preferred_element_type=jnp.float32)                # (cd, 1024)
    acc = _conv_layer(up, w5_ref[...], m5_ref[...], 3, 32, 32)      # (3, 1024)
    out_ref[0] = jnp.tanh(acc)                                      # lane-dense store


# ----------------------------------------------------------------------------
# Host-side constants (exact 0/1 matrices, precomputed boundary masks)
# ----------------------------------------------------------------------------
def _stride2_subsample_matrix(H, W):
    Ho, Wo = H // 2, W // 2
    src = np.arange(H * W); dst = np.arange(Ho * Wo)
    sh, sw = src // W, src % W
    dh, dw = dst // Wo, dst % Wo
    m = (sh[:, None] == 2 * dh[None, :]) & (sw[:, None] == 2 * dw[None, :])
    return jnp.asarray(m.astype(np.float32), dtype=jnp.bfloat16)


def _upsample2_matrix(H, W):
    Ho, Wo = 2 * H, 2 * W
    src = np.arange(H * W); dst = np.arange(Ho * Wo)
    sh, sw = src // W, src % W
    dh, dw = dst // Wo, dst % Wo
    m = (sh[:, None] == dh[None, :] // 2) & (sw[:, None] == dw[None, :] // 2)
    return jnp.asarray(m.astype(np.float32), dtype=jnp.bfloat16)


def _tap_masks(H, W, ksize, pad=1):
    """(KH*KW, H*W) f32: mask[t, h*W+w] = 1 iff input (h+dh, w+dw) is in-bounds."""
    P = H * W
    hh = np.arange(P) // W
    ww = np.arange(P) % W
    rows = []
    for kh in range(ksize):
        for kw in range(ksize):
            dh, dw = kh - pad, kw - pad
            rows.append((hh + dh >= 0) & (hh + dh < H) &
                        (ww + dw >= 0) & (ww + dw < W))
    return jnp.asarray(np.stack(rows).astype(np.float32))


# ----------------------------------------------------------------------------
# Parameters (PyTorch OIHW layout; all convs are bias-free, matching the module)
# ----------------------------------------------------------------------------
def init_params(conv_dim=8, key=jax.random.PRNGKey(0)):
    ks = jax.random.split(key, 5)
    scale = 0.05
    cd = conv_dim
    return {
        "w1": scale * jax.random.normal(ks[0], (cd, 3, 4, 4), jnp.float32),
        "w2": scale * jax.random.normal(ks[1], (2 * cd, cd, 4, 4), jnp.float32),
        "w3": scale * jax.random.normal(ks[2], (2 * cd, 2 * cd, 3, 3), jnp.float32),
        "w4": scale * jax.random.normal(ks[3], (cd, 2 * cd, 3, 3), jnp.float32),
        "w5": scale * jax.random.normal(ks[4], (3, cd, 3, 3), jnp.float32),
        # constant 0/1 selection matrices
        "s_32to16": _stride2_subsample_matrix(32, 32),
        "s_16to8": _stride2_subsample_matrix(16, 16),
        "u_8to16": _upsample2_matrix(8, 8),
        "u_16to32": _upsample2_matrix(16, 16),
        # precomputed per-tap boundary masks
        "m_4x4_32": _tap_masks(32, 32, 4),
        "m_4x4_16": _tap_masks(16, 16, 4),
        "m_3x3_8": _tap_masks(8, 8, 3),
        "m_3x3_16": _tap_masks(16, 16, 3),
        "m_3x3_32": _tap_masks(32, 32, 3),
    }


# ----------------------------------------------------------------------------
# Forward wrapper (single fused pallas_call, grid over batch)
# ----------------------------------------------------------------------------
def _fuse_weight(w, cin_pad=None):
    """OIHW (Cout, Cin, KH, KW) -> (Cout, KH*KW*Cin) bf16, im2col column order."""
    co, ci, kh, kw = w.shape
    if cin_pad is not None and cin_pad > ci:
        w = jnp.pad(w, ((0, 0), (0, cin_pad - ci), (0, 0), (0, 0)))
        ci = cin_pad
    return jnp.transpose(w, (0, 2, 3, 1)).reshape(co, kh * kw * ci).astype(jnp.bfloat16)


def _const_spec(shape):
    zero = (0,) * len(shape)
    return pl.BlockSpec(shape, lambda b, zero=zero: zero)


@jax.jit
def cycle_generator_forward(params, x_nchw):
    """x_nchw: (B, 3, 32, 32) -> (B, 3, 32, 32), squeezed like the reference."""
    B = x_nchw.shape[0]
    P_IN = 32 * 32

    x_flat = x_nchw.reshape(B, 3, P_IN).astype(jnp.float32)
    x_flat = jnp.pad(x_flat, ((0, 0), (0, _CIN_PAD - 3), (0, 0)))   # pad channels 3 -> 8

    w1 = _fuse_weight(params["w1"], cin_pad=_CIN_PAD)   # (cd, 128)
    w2 = _fuse_weight(params["w2"])                     # (2cd, 16*cd)
    w3 = _fuse_weight(params["w3"])                     # (2cd, 9*2cd)
    w4 = _fuse_weight(params["w4"])                     # (cd, 9*2cd)
    w5 = _fuse_weight(params["w5"])                     # (3, 9*cd)

    args = (x_flat, w1, w2, w3, w4, w5,
            params["m_4x4_32"], params["m_4x4_16"], params["m_3x3_8"],
            params["m_3x3_16"], params["m_3x3_32"],
            params["s_32to16"], params["s_16to8"],
            params["u_8to16"], params["u_16to32"])

    in_specs = [pl.BlockSpec((1, _CIN_PAD, P_IN), lambda b: (b, 0, 0))]
    in_specs += [_const_spec(a.shape) for a in args[1:]]

    out_flat = pl.pallas_call(
        _cycle_generator_kernel,
        out_shape=jax.ShapeDtypeStruct((B, 3, P_IN), jnp.float32),
        grid=(B,),
        in_specs=in_specs,
        out_specs=pl.BlockSpec((1, 3, P_IN), lambda b: (b, 0, 0)),
        compiler_params=pltpu.CompilerParams(
            dimension_semantics=("parallel",),         # 2x on v7x, neutral on v5e/v6e
            vmem_limit_bytes=32 * 1024 * 1024,
        ),
    )(*args)

    out = out_flat.reshape(B, 3, 32, 32)                # free reshape, already NCHW
    return jnp.squeeze(out)


# ----------------------------------------------------------------------------
# Pure-JAX reference (for in-script verification)
# ----------------------------------------------------------------------------
def _reference_forward(params, x):
    def cv(h, w, stride):
        return lax.conv_general_dilated(
            h, w, (stride, stride), [(1, 1), (1, 1)],
            dimension_numbers=("NCHW", "OIHW", "NCHW"),
            precision=lax.Precision.HIGHEST)

    def inorm(h, eps=1e-5):
        m = jnp.mean(h, axis=(2, 3), keepdims=True)
        v = jnp.var(h, axis=(2, 3), keepdims=True)
        return (h - m) * lax.rsqrt(v + eps)

    def up2(h):
        return jnp.repeat(jnp.repeat(h, 2, axis=2), 2, axis=3)

    h = jax.nn.relu(inorm(cv(x, params["w1"], 2)))
    h = jax.nn.relu(inorm(cv(h, params["w2"], 2)))
    h = h + jax.nn.relu(inorm(cv(h, params["w3"], 1)))
    h = jax.nn.relu(inorm(cv(up2(h), params["w4"], 1)))
    h = jnp.tanh(cv(up2(h), params["w5"], 1))
    return jnp.squeeze(h)


if __name__ == "__main__":
    key = jax.random.PRNGKey(0)
    k_param, k_x = jax.random.split(key)

    conv_dim = 8                    # small stand-in for the default 64
    B = 2
    x = jax.random.normal(k_x, (B, 3, 32, 32), jnp.float32)
    params = init_params(conv_dim=conv_dim, key=k_param)

    out = jax.block_until_ready(cycle_generator_forward(params, x))

    assert out.shape == (B, 3, 32, 32), out.shape
    assert bool(jnp.all(jnp.isfinite(out)))

    # Verify against the pure-JAX reference (bf16 MXU inputs -> loose tolerance).
    ref = _reference_forward(params, x)
    err = float(jnp.max(jnp.abs(out - ref)))
    assert err < 1e-1, f"max |pallas - reference| = {err}"

    print("KERNEL_OK")
</pallas_src>

<mosaic_0001>
module attributes {stable_mosaic.version = 11 : i64} {
  func.func @_cycle_generator_kernel(%arg0: i32, %arg1: memref<1x8x1024xf32, #tpu.memory_space<vmem>>, %arg2: memref<8x128xbf16, #tpu.memory_space<vmem>>, %arg3: memref<16x128xbf16, #tpu.memory_space<vmem>>, %arg4: memref<16x144xbf16, #tpu.memory_space<vmem>>, %arg5: memref<8x144xbf16, #tpu.memory_space<vmem>>, %arg6: memref<3x72xbf16, #tpu.memory_space<vmem>>, %arg7: memref<16x1024xf32, #tpu.memory_space<vmem>>, %arg8: memref<16x256xf32, #tpu.memory_space<vmem>>, %arg9: memref<9x64xf32, #tpu.memory_space<vmem>>, %arg10: memref<9x256xf32, #tpu.memory_space<vmem>>, %arg11: memref<9x1024xf32, #tpu.memory_space<vmem>>, %arg12: memref<1024x256xbf16, #tpu.memory_space<vmem>>, %arg13: memref<256x64xbf16, #tpu.memory_space<vmem>>, %arg14: memref<64x256xbf16, #tpu.memory_space<vmem>>, %arg15: memref<256x1024xbf16, #tpu.memory_space<vmem>>, %arg16: memref<1x3x1024xf32, #tpu.memory_space<vmem>>) attributes {dimension_semantics = [#tpu.dimension_semantics<parallel>], iteration_bounds = array<i64: 2>, scalar_prefetch = 0 : i64, scratch_operands = 0 : i64, tpu.core_type = #tpu.core_type<tc>, window_params = [{transform_indices = @transform_0, window_bounds = array<i64: 1, 8, 1024>}, {pipeline_mode = #tpu.pipeline_mode<synchronous>, transform_indices = @transform_1, window_bounds = array<i64: 8, 128>}, {pipeline_mode = #tpu.pipeline_mode<synchronous>, transform_indices = @transform_2, window_bounds = array<i64: 16, 128>}, {pipeline_mode = #tpu.pipeline_mode<synchronous>, transform_indices = @transform_3, window_bounds = array<i64: 16, 144>}, {pipeline_mode = #tpu.pipeline_mode<synchronous>, transform_indices = @transform_4, window_bounds = array<i64: 8, 144>}, {pipeline_mode = #tpu.pipeline_mode<synchronous>, transform_indices = @transform_5, window_bounds = array<i64: 3, 72>}, {pipeline_mode = #tpu.pipeline_mode<synchronous>, transform_indices = @transform_6, window_bounds = array<i64: 16, 1024>}, {pipeline_mode = #tpu.pipeline_mode<synchronous>, transform_indices = @transform_7, window_bounds = array<i64: 16, 256>}, {pipeline_mode = #tpu.pipeline_mode<synchronous>, transform_indices = @transform_8, window_bounds = array<i64: 9, 64>}, {pipeline_mode = #tpu.pipeline_mode<synchronous>, transform_indices = @transform_9, window_bounds = array<i64: 9, 256>}, {pipeline_mode = #tpu.pipeline_mode<synchronous>, transform_indices = @transform_10, window_bounds = array<i64: 9, 1024>}, {pipeline_mode = #tpu.pipeline_mode<synchronous>, transform_indices = @transform_11, window_bounds = array<i64: 1024, 256>}, {pipeline_mode = #tpu.pipeline_mode<synchronous>, transform_indices = @transform_12, window_bounds = array<i64: 256, 64>}, {pipeline_mode = #tpu.pipeline_mode<synchronous>, transform_indices = @transform_13, window_bounds = array<i64: 64, 256>}, {pipeline_mode = #tpu.pipeline_mode<synchronous>, transform_indices = @transform_14, window_bounds = array<i64: 256, 1024>}, {transform_indices = @transform_15, window_bounds = array<i64: 1, 3, 1024>}]} {
    %c0 = arith.constant 0 : index
    %c0_0 = arith.constant 0 : index
    %c0_1 = arith.constant 0 : index
    %0 = vector.load %arg1[%c0, %c0_0, %c0_1] : memref<1x8x1024xf32, #tpu.memory_space<vmem>>, vector<1x8x1024xf32>
    %1 = vector.shape_cast %0 : vector<1x8x1024xf32> to vector<8x1024xf32>
    %c0_2 = arith.constant 0 : index
    %c0_3 = arith.constant 0 : index
    %2 = vector.load %arg2[%c0_2, %c0_3] : memref<8x128xbf16, #tpu.memory_space<vmem>>, vector<8x128xbf16>
    %c0_4 = arith.constant 0 : index
    %c0_5 = arith.constant 0 : index
    %3 = vector.load %arg7[%c0_4, %c0_5] : memref<16x1024xf32, #tpu.memory_space<vmem>>, vector<16x1024xf32>
    %c33_i32 = arith.constant 33 : i32
    %4 = tpu.dynamic_rotate %1 by %c33_i32 dim 1 : vector<8x1024xf32>, i32 -> vector<8x1024xf32>
    %5 = vector.extract_strided_slice %3 {offsets = [0, 0], sizes = [1, 1024], strides = [1, 1]} : vector<16x1024xf32> to vector<1x1024xf32>
    %6 = vector.broadcast %5 : vector<1x1024xf32> to vector<8x1024xf32>
    %7 = arith.mulf %4, %6 : vector<8x1024xf32>
    %c32_i32 = arith.constant 32 : i32
    %8 = tpu.dynamic_rotate %1 by %c32_i32 dim 1 : vector<8x1024xf32>, i32 -> vector<8x1024xf32>
    %9 = vector.extract_strided_slice %3 {offsets = [1, 0], sizes = [1, 1024], strides = [1, 1]} : vector<16x1024xf32> to vector<1x1024xf32>
    %10 = vector.broadcast %9 : vector<1x1024xf32> to vector<8x1024xf32>
    %11 = arith.mulf %8, %10 : vector<8x1024xf32>
    %c31_i32 = arith.constant 31 : i32
    %12 = tpu.dynamic_rotate %1 by %c31_i32 dim 1 : vector<8x1024xf32>, i32 -> vector<8x1024xf32>
    %13 = vector.extract_strided_slice %3 {offsets = [2, 0], sizes = [1, 1024], strides = [1, 1]} : vector<16x1024xf32> to vector<1x1024xf32>
    %14 = vector.broadcast %13 : vector<1x1024xf32> to vector<8x1024xf32>
    %15 = arith.mulf %12, %14 : vector<8x1024xf32>
    %c30_i32 = arith.constant 30 : i32
    %16 = tpu.dynamic_rotate %1 by %c30_i32 dim 1 : vector<8x1024xf32>, i32 -> vector<8x1024xf32>
    %17 = vector.extract_strided_slice %3 {offsets = [3, 0], sizes = [1, 1024], strides = [1, 1]} : vector<16x1024xf32> to vector<1x1024xf32>
    %18 = vector.broadcast %17 : vector<1x1024xf32> to vector<8x1024xf32>
    %19 = arith.mulf %16, %18 : vector<8x1024xf32>
    %c1_i32 = arith.constant 1 : i32
    %20 = tpu.dynamic_rotate %1 by %c1_i32 dim 1 : vector<8x1024xf32>, i32 -> vector<8x1024xf32>
    %21 = vector.extract_strided_slice %3 {offsets = [4, 0], sizes = [1, 1024], strides = [1, 1]} : vector<16x1024xf32> to vector<1x1024xf32>
    %22 = vector.broadcast %21 : vector<1x1024xf32> to vector<8x1024xf32>
    %23 = arith.mulf %20, %22 : vector<8x1024xf32>
    %c1023_i32 = arith.constant 1023 : i32
    %24 = tpu.dynamic_rotate %1 by %c1023_i32 dim 1 : vector<8x1024xf32>, i32 -> vector<8x1024xf32>
    %25 = vector.extract_strided_slice %3 {offsets = [6, 0], sizes = [1, 1024], strides = [1, 1]} : vector<16x1024xf32> to vector<1x1024xf32>
    %26 = vector.broadcast %25 : vector<1x1024xf32> to vector<8x1024xf32>
    %27 = arith.mulf %24, %26 : vector<8x1024xf32>
    %c1022_i32 = arith.constant 1022 : i32
    %28 = tpu.dynamic_rotate %1 by %c1022_i32 dim 1 : vector<8x1024xf32>, i32 -> vector<8x1024xf32>
    %29 = vector.extract_strided_slice %3 {offsets = [7, 0], sizes = [1, 1024], strides = [1, 1]} : vector<16x1024xf32> to vector<1x1024xf32>
    %30 = vector.broadcast %29 : vector<1x1024xf32> to vector<8x1024xf32>
    %31 = arith.mulf %28, %30 : vector<8x1024xf32>
    %c993_i32 = arith.constant 993 : i32
    %32 = tpu.dynamic_rotate %1 by %c993_i32 dim 1 : vector<8x1024xf32>, i32 -> vector<8x1024xf32>
    %33 = vector.extract_strided_slice %3 {offsets = [8, 0], sizes = [1, 1024], strides = [1, 1]} : vector<16x1024xf32> to vector<1x1024xf32>
    %34 = vector.broadcast %33 : vector<1x1024xf32> to vector<8x1024xf32>
    %35 = arith.mulf %32, %34 : vector<8x1024xf32>
    %c992_i32 = arith.constant 992 : i32
    %36 = tpu.dynamic_rotate %1 by %c992_i32 dim 1 : vector<8x1024xf32>, i32 -> vector<8x1024xf32>
    %37 = vector.extract_strided_slice %3 {offsets = [9, 0], sizes = [1, 1024], strides = [1, 1]} : vector<16x1024xf32> to vector<1x1024xf32>
    %38 = vector.broadcast %37 : vector<1x1024xf32> to vector<8x1024xf32>
    %39 = arith.mulf %36, %38 : vector<8x1024xf32>
    %c991_i32 = arith.constant 991 : i32
    %40 = tpu.dynamic_rotate %1 by %c991_i32 dim 1 : vector<8x1024xf32>, i32 -> vector<8x1024xf32>
    %41 = vector.extract_strided_slice %3 {offsets = [10, 0], sizes = [1, 1024], strides = [1, 1]} : vector<16x1024xf32> to vector<1x1024xf32>
    %42 = vector.broadcast %41 : vector<1x1024xf32> to vector<8x1024xf32>
    %43 = arith.mulf %40, %42 : vector<8x1024xf32>
    %c990_i32 = arith.constant 990 : i32
    %44 = tpu.dynamic_rotate %1 by %c990_i32 dim 1 : vector<8x1024xf32>, i32 -> vector<8x1024xf32>
    %45 = vector.extract_strided_slice %3 {offsets = [11, 0], sizes = [1, 1024], strides = [1, 1]} : vector<16x1024xf32> to vector<1x1024xf32>
    %46 = vector.broadcast %45 : vector<1x1024xf32> to vector<8x1024xf32>
    %47 = arith.mulf %44, %46 : vector<8x1024xf32>
    %c961_i32 = arith.constant 961 : i32
    %48 = tpu.dynamic_rotate %1 by %c961_i32 dim 1 : vector<8x1024xf32>, i32 -> vector<8x1024xf32>
    %49 = vector.extract_strided_slice %3 {offsets = [12, 0], sizes = [1, 1024], strides = [1, 1]} : vector<16x1024xf32> to vector<1x1024xf32>
    %50 = vector.broadcast %49 : vector<1x1024xf32> to vector<8x1024xf32>
    %51 = arith.mulf %48, %50 : vector<8x1024xf32>
    %c960_i32 = arith.constant 960 : i32
    %52 = tpu.dynamic_rotate %1 by %c960_i32 dim 1 : vector<8x1024xf32>, i32 -> vector<8x1024xf32>
    %53 = vector.extract_strided_slice %3 {offsets = [13, 0], sizes = [1, 1024], strides = [1, 1]} : vector<16x1024xf32> to vector<1x1024xf32>
    %54 = vector.broadcast %53 : vector<1x1024xf32> to vector<8x1024xf32>
    %55 = arith.mulf %52, %54 : vector<8x1024xf32>
    %c959_i32 = arith.constant 959 : i32
    %56 = tpu.dynamic_rotate %1 by %c959_i32 dim 1 : vector<8x1024xf32>, i32 -> vector<8x1024xf32>
    %57 = vector.extract_strided_slice %3 {offsets = [14, 0], sizes = [1, 1024], strides = [1, 1]} : vector<16x1024xf32> to vector<1x1024xf32>
    %58 = vector.broadcast %57 : vector<1x1024xf32> to vector<8x1024xf32>
    %59 = arith.mulf %56, %58 : vector<8x1024xf32>
    %c958_i32 = arith.constant 958 : i32
    %60 = tpu.dynamic_rotate %1 by %c958_i32 dim 1 : vector<8x1024xf32>, i32 -> vector<8x1024xf32>
    %61 = vector.extract_strided_slice %3 {offsets = [15, 0], sizes = [1, 1024], strides = [1, 1]} : vector<16x1024xf32> to vector<1x1024xf32>
    %62 = vector.broadcast %61 : vector<1x1024xf32> to vector<8x1024xf32>
    %63 = arith.mulf %60, %62 : vector<8x1024xf32>
    %64 = tpu.concatenate %7, %11, %15, %19, %23, %1, %27, %31, %35, %39, %43, %47, %51, %55, %59, %63 in 0 : vector<8x1024xf32>, vector<8x1024xf32>, vector<8x1024xf32>, vector<8x1024xf32>, vector<8x1024xf32>, vector<8x1024xf32>, vector<8x1024xf32>, vector<8x1024xf32>, vector<8x1024xf32>, vector<8x1024xf32>, vector<8x1024xf32>, vector<8x1024xf32>, vector<8x1024xf32>, vector<8x1024xf32>, vector<8x1024xf32>, vector<8x1024xf32> -> vector<128x1024xf32>
    %65 = arith.truncf %64 : vector<128x1024xf32> to vector<128x1024xbf16>
    %cst = arith.constant dense<0.000000e+00> : vector<8x1024xf32>
    %66 = tpu.matmul %2, %65, %cst {dimension_numbers = #tpu.dot_dimension_numbers<[1], [0], [0], [1], [0, 0, 1, 1], [], []>} : vector<8x128xbf16>, vector<128x1024xbf16>, vector<8x1024xf32> -> vector<8x1024xf32>
    %67 = arith.truncf %66 : vector<8x1024xf32> to vector<8x1024xbf16>
    %c0_6 = arith.constant 0 : index
    %c0_7 = arith.constant 0 : index
    %68 = vector.load %arg12[%c0_6, %c0_7] : memref<1024x256xbf16, #tpu.memory_space<vmem>>, vector<1024x256xbf16>
    %cst_8 = arith.constant dense<0.000000e+00> : vector<8x256xf32>
    %69 = tpu.matmul %67, %68, %cst_8 {dimension_numbers = #tpu.dot_dimension_numbers<[1], [0], [0], [1], [0, 0, 1, 1], [], []>} : vector<8x1024xbf16>, vector<1024x256xbf16>, vector<8x256xf32> -> vector<8x256xf32>
    %cst_9 = arith.constant dense<0.000000e+00> : vector<8xf32>
    %70 = vector.multi_reduction <add>, %69, %cst_9 [1] : vector<8x256xf32> to vector<8xf32>
    %71 = vector.shape_cast %70 : vector<8xf32> to vector<8x1xf32>
    %cst_10 = arith.constant 3.906250e-03 : f32
    %72 = vector.broadcast %cst_10 : f32 to vector<8x1xf32>
    %73 = arith.mulf %71, %72 : vector<8x1xf32>
    %74 = arith.mulf %69, %69 : vector<8x256xf32>
    %cst_11 = arith.constant dense<0.000000e+00> : vector<8xf32>
    %75 = vector.multi_reduction <add>, %74, %cst_11 [1] : vector<8x256xf32> to vector<8xf32>
    %76 = vector.shape_cast %75 : vector<8xf32> to vector<8x1xf32>
    %cst_12 = arith.constant 3.906250e-03 : f32
    %77 = vector.broadcast %cst_12 : f32 to vector<8x1xf32>
    %78 = arith.mulf %76, %77 : vector<8x1xf32>
    %79 = arith.mulf %73, %73 : vector<8x1xf32>
    %80 = arith.subf %78, %79 : vector<8x1xf32>
    %cst_13 = arith.constant 0.000000e+00 : f32
    %81 = vector.broadcast %cst_13 : f32 to vector<8x1xf32>
    %82 = arith.maximumf %80, %81 : vector<8x1xf32>
    %83 = vector.broadcast %73 : vector<8x1xf32> to vector<8x256xf32>
    %84 = arith.subf %69, %83 : vector<8x256xf32>
    %cst_14 = arith.constant 9.99999974E-6 : f32
    %85 = vector.broadcast %cst_14 : f32 to vector<8x1xf32>
    %86 = arith.addf %82, %85 : vector<8x1xf32>
    %87 = math.rsqrt %86 : vector<8x1xf32>
    %88 = vector.broadcast %87 : vector<8x1xf32> to vector<8x256xf32>
    %89 = arith.mulf %84, %88 : vector<8x256xf32>
    %cst_15 = arith.constant 0.000000e+00 : f32
    %90 = vector.broadcast %cst_15 : f32 to vector<8x256xf32>
    %91 = arith.maximumf %89, %90 : vector<8x256xf32>
    %c0_16 = arith.constant 0 : index
    %c0_17 = arith.constant 0 : index
    %92 = vector.load %arg3[%c0_16, %c0_17] : memref<16x128xbf16, #tpu.memory_space<vmem>>, vector<16x128xbf16>
    %c0_18 = arith.constant 0 : index
    %c0_19 = arith.constant 0 : index
    %93 = vector.load %arg8[%c0_18, %c0_19] : memref<16x256xf32, #tpu.memory_space<vmem>>, vector<16x256xf32>
    %c17_i32 = arith.constant 17 : i32
    %94 = tpu.dynamic_rotate %91 by %c17_i32 dim 1 : vector<8x256xf32>, i32 -> vector<8x256xf32>
    %95 = vector.extract_strided_slice %93 {offsets = [0, 0], sizes = [1, 256], strides = [1, 1]} : vector<16x256xf32> to vector<1x256xf32>
    %96 = vector.broadcast %95 : vector<1x256xf32> to vector<8x256xf32>
    %97 = arith.mulf %94, %96 : vector<8x256xf32>
    %c16_i32 = arith.constant 16 : i32
    %98 = tpu.dynamic_rotate %91 by %c16_i32 dim 1 : vector<8x256xf32>, i32 -> vector<8x256xf32>
    %99 = vector.extract_strided_slice %93 {offsets = [1, 0], sizes = [1, 256], strides = [1, 1]} : vector<16x256xf32> to vector<1x256xf32>
    %100 = vector.broadcast %99 : vector<1x256xf32> to vector<8x256xf32>
    %101 = arith.mulf %98, %100 : vector<8x256xf32>
    %c15_i32 = arith.constant 15 : i32
    %102 = tpu.dynamic_rotate %91 by %c15_i32 dim 1 : vector<8x256xf32>, i32 -> vector<8x256xf32>
    %103 = vector.extract_strided_slice %93 {offsets = [2, 0], sizes = [1, 256], strides = [1, 1]} : vector<16x256xf32> to vector<1x256xf32>
    %104 = vector.broadcast %103 : vector<1x256xf32> to vector<8x256xf32>
    %105 = arith.mulf %102, %104 : vector<8x256xf32>
    %c14_i32 = arith.constant 14 : i32
    %106 = tpu.dynamic_rotate %91 by %c14_i32 dim 1 : vector<8x256xf32>, i32 -> vector<8x256xf32>
    %107 = vector.extract_strided_slice %93 {offsets = [3, 0], sizes = [1, 256], strides = [1, 1]} : vector<16x256xf32> to vector<1x256xf32>
    %108 = vector.broadcast %107 : vector<1x256xf32> to vector<8x256xf32>
    %109 = arith.mulf %106, %108 : vector<8x256xf32>
    %c1_i32_20 = arith.constant 1 : i32
    %110 = tpu.dynamic_rotate %91 by %c1_i32_20 dim 1 : vector<8x256xf32>, i32 -> vector<8x256xf32>
    %111 = vector.extract_strided_slice %93 {offsets = [4, 0], sizes = [1, 256], strides = [1, 1]} : vector<16x256xf32> to vector<1x256xf32>
    %112 = vector.broadcast %111 : vector<1x256xf32> to vector<8x256xf32>
    %113 = arith.mulf %110, %112 : vector<8x256xf32>
    %c255_i32 = arith.constant 255 : i32
    %114 = tpu.dynamic_rotate %91 by %c255_i32 dim 1 : vector<8x256xf32>, i32 -> vector<8x256xf32>
    %115 = vector.extract_strided_slice %93 {offsets = [6, 0], sizes = [1, 256], strides = [1, 1]} : vector<16x256xf32> to vector<1x256xf32>
    %116 = vector.broadcast %115 : vector<1x256xf32> to vector<8x256xf32>
    %117 = arith.mulf %114, %116 : vector<8x256xf32>
    %c254_i32 = arith.constant 254 : i32
    %118 = tpu.dynamic_rotate %91 by %c254_i32 dim 1 : vector<8x256xf32>, i32 -> vector<8x256xf32>
    %119 = vector.extract_strided_slice %93 {offsets = [7, 0], sizes = [1, 256], strides = [1, 1]} : vector<16x256xf32> to vector<1x256xf32>
    %120 = vector.broadcast %119 : vector<1x256xf32> to vector<8x256xf32>
    %121 = arith.mulf %118, %120 : vector<8x256xf32>
    %c241_i32 = arith.constant 241 : i32
    %122 = tpu.dynamic_rotate %91 by %c241_i32 dim 1 : vector<8x256xf32>, i32 -> vector<8x256xf32>
    %123 = vector.extract_strided_slice %93 {offsets = [8, 0], sizes = [1, 256], strides = [1, 1]} : vector<16x256xf32> to vector<1x256xf32>
    %124 = vector.broadcast %123 : vector<1x256xf32> to vector<8x256xf32>
    %125 = arith.mulf %122, %124 : vector<8x256xf32>
    %c240_i32 = arith.constant 240 : i32
    %126 = tpu.dynamic_rotate %91 by %c240_i32 dim 1 : vector<8x256xf32>, i32 -> vector<8x256xf32>
    %127 = vector.extract_strided_slice %93 {offsets = [9, 0], sizes = [1, 256], strides = [1, 1]} : vector<16x256xf32> to vector<1x256xf32>
    %128 = vector.broadcast %127 : vector<1x256xf32> to vector<8x256xf32>
    %129 = arith.mulf %126, %128 : vector<8x256xf32>
    %c239_i32 = arith.constant 239 : i32
    %130 = tpu.dynamic_rotate %91 by %c239_i32 dim 1 : vector<8x256xf32>, i32 -> vector<8x256xf32>
    %131 = vector.extract_strided_slice %93 {offsets = [10, 0], sizes = [1, 256], strides = [1, 1]} : vector<16x256xf32> to vector<1x256xf32>
    %132 = vector.broadcast %131 : vector<1x256xf32> to vector<8x256xf32>
    %133 = arith.mulf %130, %132 : vector<8x256xf32>
    %c238_i32 = arith.constant 238 : i32
    %134 = tpu.dynamic_rotate %91 by %c238_i32 dim 1 : vector<8x256xf32>, i32 -> vector<8x256xf32>
    %135 = vector.extract_strided_slice %93 {offsets = [11, 0], sizes = [1, 256], strides = [1, 1]} : vector<16x256xf32> to vector<1x256xf32>
    %136 = vector.broadcast %135 : vector<1x256xf32> to vector<8x256xf32>
    %137 = arith.mulf %134, %136 : vector<8x256xf32>
    %c225_i32 = arith.constant 225 : i32
    %138 = tpu.dynamic_rotate %91 by %c225_i32 dim 1 : vector<8x256xf32>, i32 -> vector<8x256xf32>
    %139 = vector.extract_strided_slice %93 {offsets = [12, 0], sizes = [1, 256], strides = [1, 1]} : vector<16x256xf32> to vector<1x256xf32>
    %140 = vector.broadcast %139 : vector<1x256xf32> to vector<8x256xf32>
    %141 = arith.mulf %138, %140 : vector<8x256xf32>
    %c224_i32 = arith.constant 224 : i32
    %142 = tpu.dynamic_rotate %91 by %c224_i32 dim 1 : vector<8x256xf32>, i32 -> vector<8x256xf32>
    %143 = vector.extract_strided_slice %93 {offsets = [13, 0], sizes = [1, 256], strides = [1, 1]} : vector<16x256xf32> to vector<1x256xf32>
    %144 = vector.broadcast %143 : vector<1x256xf32> to vector<8x256xf32>
    %145 = arith.mulf %142, %144 : vector<8x256xf32>
    %c223_i32 = arith.constant 223 : i32
    %146 = tpu.dynamic_rotate %91 by %c223_i32 dim 1 : vector<8x256xf32>, i32 -> vector<8x256xf32>
    %147 = vector.extract_strided_slice %93 {offsets = [14, 0], sizes = [1, 256], strides = [1, 1]} : vector<16x256xf32> to vector<1x256xf32>
    %148 = vector.broadcast %147 : vector<1x256xf32> to vector<8x256xf32>
    %149 = arith.mulf %146, %148 : vector<8x256xf32>
    %c222_i32 = arith.constant 222 : i32
    %150 = tpu.dynamic_rotate %91 by %c222_i32 dim 1 : vector<8x256xf32>, i32 -> vector<8x256xf32>
    %151 = vector.extract_strided_slice %93 {offsets = [15, 0], sizes = [1, 256], strides = [1, 1]} : vector<16x256xf32> to vector<1x256xf32>
    %152 = vector.broadcast %151 : vector<1x256xf32> to vector<8x256xf32>
    %153 = arith.mulf %150, %152 : vector<8x256xf32>
    %154 = tpu.concatenate %97, %101, %105, %109, %113, %91, %117, %121, %125, %129, %133, %137, %141, %145, %149, %153 in 0 : vector<8x256xf32>, vector<8x256xf32>, vector<8x256xf32>, vector<8x256xf32>, vector<8x256xf32>, vector<8x256xf32>, vector<8x256xf32>, vector<8x256xf32>, vector<8x256xf32>, vector<8x256xf32>, vector<8x256xf32>, vector<8x256xf32>, vector<8x256xf32>, vector<8x256xf32>, vector<8x256xf32>, vector<8x256xf32> -> vector<128x256xf32>
    %155 = arith.truncf %154 : vector<128x256xf32> to vector<128x256xbf16>
    %cst_21 = arith.constant dense<0.000000e+00> : vector<16x256xf32>
    %156 = tpu.matmul %92, %155, %cst_21 {dimension_numbers = #tpu.dot_dimension_numbers<[1], [0], [0], [1], [0, 0, 1, 1], [], []>} : vector<16x128xbf16>, vector<128x256xbf16>, vector<16x256xf32> -> vector<16x256xf32>
    %157 = arith.truncf %156 : vector<16x256xf32> to vector<16x256xbf16>
    %c0_22 = arith.constant 0 : index
    %c0_23 = arith.constant 0 : index
    %158 = vector.load %arg13[%c0_22, %c0_23] : memref<256x64xbf16, #tpu.memory_space<vmem>>, vector<256x64xbf16>
    %cst_24 = arith.constant dense<0.000000e+00> : vector<16x64xf32>
    %159 = tpu.matmul %157, %158, %cst_24 {dimension_numbers = #tpu.dot_dimension_numbers<[1], [0], [0], [1], [0, 0, 1, 1], [], []>} : vector<16x256xbf16>, vector<256x64xbf16>, vector<16x64xf32> -> vector<16x64xf32>
    %cst_25 = arith.constant dense<0.000000e+00> : vector<16xf32>
    %160 = vector.multi_reduction <add>, %159, %cst_25 [1] : vector<16x64xf32> to vector<16xf32>
    %161 = vector.shape_cast %160 : vector<16xf32> to vector<16x1xf32>
    %cst_26 = arith.constant 1.562500e-02 : f32
    %162 = vector.broadcast %cst_26 : f32 to vector<16x1xf32>
    %163 = arith.mulf %161, %162 : vector<16x1xf32>
    %164 = arith.mulf %159, %159 : vector<16x64xf32>
    %cst_27 = arith.constant dense<0.000000e+00> : vector<16xf32>
    %165 = vector.multi_reduction <add>, %164, %cst_27 [1] : vector<16x64xf32> to vector<16xf32>
    %166 = vector.shape_cast %165 : vector<16xf32> to vector<16x1xf32>
    %cst_28 = arith.constant 1.562500e-02 : f32
    %167 = vector.broadcast %cst_28 : f32 to vector<16x1xf32>
    %168 = arith.mulf %166, %167 : vector<16x1xf32>
    %169 = arith.mulf %163, %163 : vector<16x1xf32>
    %170 = arith.subf %168, %169 : vector<16x1xf32>
    %cst_29 = arith.constant 0.000000e+00 : f32
    %171 = vector.broadcast %cst_29 : f32 to vector<16x1xf32>
    %172 = arith.maximumf %170, %171 : vector<16x1xf32>
    %173 = vector.broadcast %163 : vector<16x1xf32> to vector<16x64xf32>
    %174 = arith.subf %159, %173 : vector<16x64xf32>
    %cst_30 = arith.constant 9.99999974E-6 : f32
    %175 = vector.broadcast %cst_30 : f32 to vector<16x1xf32>
    %176 = arith.addf %172, %175 : vector<16x1xf32>
    %177 = math.rsqrt %176 : vector<16x1xf32>
    %178 = vector.broadcast %177 : vector<16x1xf32> to vector<16x64xf32>
    %179 = arith.mulf %174, %178 : vector<16x64xf32>
    %cst_31 = arith.constant 0.000000e+00 : f32
    %180 = vector.broadcast %cst_31 : f32 to vector<16x64xf32>
    %181 = arith.maximumf %179, %180 : vector<16x64xf32>
    %c0_32 = arith.constant 0 : index
    %c0_33 = arith.constant 0 : index
    %182 = vector.load %arg4[%c0_32, %c0_33] : memref<16x144xbf16, #tpu.memory_space<vmem>>, vector<16x144xbf16>
    %c0_34 = arith.constant 0 : index
    %c0_35 = arith.constant 0 : index
    %183 = vector.load %arg9[%c0_34, %c0_35] : memref<9x64xf32, #tpu.memory_space<vmem>>, vector<9x64xf32>
    %184 = vector.extract_strided_slice %181 {offsets = [0, 55], sizes = [16, 9], strides = [1, 1]} : vector<16x64xf32> to vector<16x9xf32>
    %185 = vector.extract_strided_slice %181 {offsets = [0, 0], sizes = [16, 55], strides = [1, 1]} : vector<16x64xf32> to vector<16x55xf32>
    %186 = tpu.concatenate %184, %185 in 1 : vector<16x9xf32>, vector<16x55xf32> -> vector<16x64xf32>
    %187 = vector.extract_strided_slice %183 {offsets = [0, 0], sizes = [1, 64], strides = [1, 1]} : vector<9x64xf32> to vector<1x64xf32>
    %188 = vector.broadcast %187 : vector<1x64xf32> to vector<16x64xf32>
    %189 = arith.mulf %186, %188 : vector<16x64xf32>
    %190 = vector.extract_strided_slice %181 {offsets = [0, 56], sizes = [16, 8], strides = [1, 1]} : vector<16x64xf32> to vector<16x8xf32>
    %191 = vector.extract_strided_slice %181 {offsets = [0, 0], sizes = [16, 56], strides = [1, 1]} : vector<16x64xf32> to vector<16x56xf32>
    %192 = tpu.concatenate %190, %191 in 1 : vector<16x8xf32>, vector<16x56xf32> -> vector<16x64xf32>
    %193 = vector.extract_strided_slice %183 {offsets = [1, 0], sizes = [1, 64], strides = [1, 1]} : vector<9x64xf32> to vector<1x64xf32>
    %194 = vector.broadcast %193 : vector<1x64xf32> to vector<16x64xf32>
    %195 = arith.mulf %192, %194 : vector<16x64xf32>
    %196 = vector.extract_strided_slice %181 {offsets = [0, 57], sizes = [16, 7], strides = [1, 1]} : vector<16x64xf32> to vector<16x7xf32>
    %197 = vector.extract_strided_slice %181 {offsets = [0, 0], sizes = [16, 57], strides = [1, 1]} : vector<16x64xf32> to vector<16x57xf32>
    %198 = tpu.concatenate %196, %197 in 1 : vector<16x7xf32>, vector<16x57xf32> -> vector<16x64xf32>
    %199 = vector.extract_strided_slice %183 {offsets = [2, 0], sizes = [1, 64], strides = [1, 1]} : vector<9x64xf32> to vector<1x64xf32>
    %200 = vector.broadcast %199 : vector<1x64xf32> to vector<16x64xf32>
    %201 = arith.mulf %198, %200 : vector<16x64xf32>
    %202 = vector.extract_strided_slice %181 {offsets = [0, 63], sizes = [16, 1], strides = [1, 1]} : vector<16x64xf32> to vector<16x1xf32>
    %203 = vector.extract_strided_slice %181 {offsets = [0, 0], sizes = [16, 63], strides = [1, 1]} : vector<16x64xf32> to vector<16x63xf32>
    %204 = tpu.concatenate %202, %203 in 1 : vector<16x1xf32>, vector<16x63xf32> -> vector<16x64xf32>
    %205 = vector.extract_strided_slice %183 {offsets = [3, 0], sizes = [1, 64], strides = [1, 1]} : vector<9x64xf32> to vector<1x64xf32>
    %206 = vector.broadcast %205 : vector<1x64xf32> to vector<16x64xf32>
    %207 = arith.mulf %204, %206 : vector<16x64xf32>
    %208 = vector.extract_strided_slice %181 {offsets = [0, 1], sizes = [16, 63], strides = [1, 1]} : vector<16x64xf32> to vector<16x63xf32>
    %209 = vector.extract_strided_slice %181 {offsets = [0, 0], sizes = [16, 1], strides = [1, 1]} : vector<16x64xf32> to vector<16x1xf32>
    %210 = tpu.concatenate %208, %209 in 1 : vector<16x63xf32>, vector<16x1xf32> -> vector<16x64xf32>
    %211 = vector.extract_strided_slice %183 {offsets = [5, 0], sizes = [1, 64], strides = [1, 1]} : vector<9x64xf32> to vector<1x64xf32>
    %212 = vector.broadcast %211 : vector<1x64xf32> to vector<16x64xf32>
    %213 = arith.mulf %210, %212 : vector<16x64xf32>
    %214 = vector.extract_strided_slice %181 {offsets = [0, 7], sizes = [16, 57], strides = [1, 1]} : vector<16x64xf32> to vector<16x57xf32>
    %215 = vector.extract_strided_slice %181 {offsets = [0, 0], sizes = [16, 7], strides = [1, 1]} : vector<16x64xf32> to vector<16x7xf32>
    %216 = tpu.concatenate %214, %215 in 1 : vector<16x57xf32>, vector<16x7xf32> -> vector<16x64xf32>
    %217 = vector.extract_strided_slice %183 {offsets = [6, 0], sizes = [1, 64], strides = [1, 1]} : vector<9x64xf32> to vector<1x64xf32>
    %218 = vector.broadcast %217 : vector<1x64xf32> to vector<16x64xf32>
    %219 = arith.mulf %216, %218 : vector<16x64xf32>
    %220 = vector.extract_strided_slice %181 {offsets = [0, 8], sizes = [16, 56], strides = [1, 1]} : vector<16x64xf32> to vector<16x56xf32>
    %221 = vector.extract_strided_slice %181 {offsets = [0, 0], sizes = [16, 8], strides = [1, 1]} : vector<16x64xf32> to vector<16x8xf32>
    %222 = tpu.concatenate %220, %221 in 1 : vector<16x56xf32>, vector<16x8xf32> -> vector<16x64xf32>
    %223 = vector.extract_strided_slice %183 {offsets = [7, 0], sizes = [1, 64], strides = [1, 1]} : vector<9x64xf32> to vector<1x64xf32>
    %224 = vector.broadcast %223 : vector<1x64xf32> to vector<16x64xf32>
    %225 = arith.mulf %222, %224 : vector<16x64xf32>
    %226 = vector.extract_strided_slice %181 {offsets = [0, 9], sizes = [16, 55], strides = [1, 1]} : vector<16x64xf32> to vector<16x55xf32>
    %227 = vector.extract_strided_slice %181 {offsets = [0, 0], sizes = [16, 9], strides = [1, 1]} : vector<16x64xf32> to vector<16x9xf32>
    %228 = tpu.concatenate %226, %227 in 1 : vector<16x55xf32>, vector<16x9xf32> -> vector<16x64xf32>
    %229 = vector.extract_strided_slice %183 {offsets = [8, 0], sizes = [1, 64], strides = [1, 1]} : vector<9x64xf32> to vector<1x64xf32>
    %230 = vector.broadcast %229 : vector<1x64xf32> to vector<16x64xf32>
    %231 = arith.mulf %228, %230 : vector<16x64xf32>
    %232 = tpu.concatenate %189, %195, %201, %207, %181, %213, %219, %225, %231 in 0 : vector<16x64xf32>, vector<16x64xf32>, vector<16x64xf32>, vector<16x64xf32>, vector<16x64xf32>, vector<16x64xf32>, vector<16x64xf32>, vector<16x64xf32>, vector<16x64xf32> -> vector<144x64xf32>
    %233 = arith.truncf %232 : vector<144x64xf32> to vector<144x64xbf16>
    %cst_36 = arith.constant dense<0.000000e+00> : vector<16x64xf32>
    %234 = tpu.matmul %182, %233, %cst_36 {dimension_numbers = #tpu.dot_dimension_numbers<[1], [0], [0], [1], [0, 0, 1, 1], [], []>} : vector<16x144xbf16>, vector<144x64xbf16>, vector<16x64xf32> -> vector<16x64xf32>
    %cst_37 = arith.constant dense<0.000000e+00> : vector<16xf32>
    %235 = vector.multi_reduction <add>, %234, %cst_37 [1] : vector<16x64xf32> to vector<16xf32>
    %236 = vector.shape_cast %235 : vector<16xf32> to vector<16x1xf32>
    %cst_38 = arith.constant 1.562500e-02 : f32
    %237 = vector.broadcast %cst_38 : f32 to vector<16x1xf32>
    %238 = arith.mulf %236, %237 : vector<16x1xf32>
    %239 = arith.mulf %234, %234 : vector<16x64xf32>
    %cst_39 = arith.constant dense<0.000000e+00> : vector<16xf32>
    %240 = vector.multi_reduction <add>, %239, %cst_39 [1] : vector<16x64xf32> to vector<16xf32>
    %241 = vector.shape_cast %240 : vector<16xf32> to vector<16x1xf32>
    %cst_40 = arith.constant 1.562500e-02 : f32
    %242 = vector.broadcast %cst_40 : f32 to vector<16x1xf32>
    %243 = arith.mulf %241, %242 : vector<16x1xf32>
    %244 = arith.mulf %238, %238 : vector<16x1xf32>
    %245 = arith.subf %243, %244 : vector<16x1xf32>
    %cst_41 = arith.constant 0.000000e+00 : f32
    %246 = vector.broadcast %cst_41 : f32 to vector<16x1xf32>
    %247 = arith.maximumf %245, %246 : vector<16x1xf32>
    %248 = vector.broadcast %238 : vector<16x1xf32> to vector<16x64xf32>
    %249 = arith.subf %234, %248 : vector<16x64xf32>
    %cst_42 = arith.constant 9.99999974E-6 : f32
    %250 = vector.broadcast %cst_42 : f32 to vector<16x1xf32>
    %251 = arith.addf %247, %250 : vector<16x1xf32>
    %252 = math.rsqrt %251 : vector<16x1xf32>
    %253 = vector.broadcast %252 : vector<16x1xf32> to vector<16x64xf32>
    %254 = arith.mulf %249, %253 : vector<16x64xf32>
    %cst_43 = arith.constant 0.000000e+00 : f32
    %255 = vector.broadcast %cst_43 : f32 to vector<16x64xf32>
    %256 = arith.maximumf %254, %255 : vector<16x64xf32>
    %257 = arith.addf %181, %256 : vector<16x64xf32>
    %258 = arith.truncf %257 : vector<16x64xf32> to vector<16x64xbf16>
    %c0_44 = arith.constant 0 : index
    %c0_45 = arith.constant 0 : index
    %259 = vector.load %arg14[%c0_44, %c0_45] : memref<64x256xbf16, #tpu.memory_space<vmem>>, vector<64x256xbf16>
    %cst_46 = arith.constant dense<0.000000e+00> : vector<16x256xf32>
    %260 = tpu.matmul %258, %259, %cst_46 {dimension_numbers = #tpu.dot_dimension_numbers<[1], [0], [0], [1], [0, 0, 1, 1], [], []>} : vector<16x64xbf16>, vector<64x256xbf16>, vector<16x256xf32> -> vector<16x256xf32>
    %c0_47 = arith.constant 0 : index
    %c0_48 = arith.constant 0 : index
    %261 = vector.load %arg5[%c0_47, %c0_48] : memref<8x144xbf16, #tpu.memory_space<vmem>>, vector<8x144xbf16>
    %c0_49 = arith.constant 0 : index
    %c0_50 = arith.constant 0 : index
    %262 = vector.load %arg10[%c0_49, %c0_50] : memref<9x256xf32, #tpu.memory_space<vmem>>, vector<9x256xf32>
    %c17_i32_51 = arith.constant 17 : i32
    %263 = tpu.dynamic_rotate %260 by %c17_i32_51 dim 1 : vector<16x256xf32>, i32 -> vector<16x256xf32>
    %264 = vector.extract_strided_slice %262 {offsets = [0, 0], sizes = [1, 256], strides = [1, 1]} : vector<9x256xf32> to vector<1x256xf32>
    %265 = vector.broadcast %264 : vector<1x256xf32> to vector<16x256xf32>
    %266 = arith.mulf %263, %265 : vector<16x256xf32>
    %c16_i32_52 = arith.constant 16 : i32
    %267 = tpu.dynamic_rotate %260 by %c16_i32_52 dim 1 : vector<16x256xf32>, i32 -> vector<16x256xf32>
    %268 = vector.extract_strided_slice %262 {offsets = [1, 0], sizes = [1, 256], strides = [1, 1]} : vector<9x256xf32> to vector<1x256xf32>
    %269 = vector.broadcast %268 : vector<1x256xf32> to vector<16x256xf32>
    %270 = arith.mulf %267, %269 : vector<16x256xf32>
    %c15_i32_53 = arith.constant 15 : i32
    %271 = tpu.dynamic_rotate %260 by %c15_i32_53 dim 1 : vector<16x256xf32>, i32 -> vector<16x256xf32>
    %272 = vector.extract_strided_slice %262 {offsets = [2, 0], sizes = [1, 256], strides = [1, 1]} : vector<9x256xf32> to vector<1x256xf32>
    %273 = vector.broadcast %272 : vector<1x256xf32> to vector<16x256xf32>
    %274 = arith.mulf %271, %273 : vector<16x256xf32>
    %c1_i32_54 = arith.constant 1 : i32
    %275 = tpu.dynamic_rotate %260 by %c1_i32_54 dim 1 : vector<16x256xf32>, i32 -> vector<16x256xf32>
    %276 = vector.extract_strided_slice %262 {offsets = [3, 0], sizes = [1, 256], strides = [1, 1]} : vector<9x256xf32> to vector<1x256xf32>
    %277 = vector.broadcast %276 : vector<1x256xf32> to vector<16x256xf32>
    %278 = arith.mulf %275, %277 : vector<16x256xf32>
    %c255_i32_55 = arith.constant 255 : i32
    %279 = tpu.dynamic_rotate %260 by %c255_i32_55 dim 1 : vector<16x256xf32>, i32 -> vector<16x256xf32>
    %280 = vector.extract_strided_slice %262 {offsets = [5, 0], sizes = [1, 256], strides = [1, 1]} : vector<9x256xf32> to vector<1x256xf32>
    %281 = vector.broadcast %280 : vector<1x256xf32> to vector<16x256xf32>
    %282 = arith.mulf %279, %281 : vector<16x256xf32>
    %c241_i32_56 = arith.constant 241 : i32
    %283 = tpu.dynamic_rotate %260 by %c241_i32_56 dim 1 : vector<16x256xf32>, i32 -> vector<16x256xf32>
    %284 = vector.extract_strided_slice %262 {offsets = [6, 0], sizes = [1, 256], strides = [1, 1]} : vector<9x256xf32> to vector<1x256xf32>
    %285 = vector.broadcast %284 : vector<1x256xf32> to vector<16x256xf32>
    %286 = arith.mulf %283, %285 : vector<16x256xf32>
    %c240_i32_57 = arith.constant 240 : i32
    %287 = tpu.dynamic_rotate %260 by %c240_i32_57 dim 1 : vector<16x256xf32>, i32 -> vector<16x256xf32>
    %288 = vector.extract_strided_slice %262 {offsets = [7, 0], sizes = [1, 256], strides = [1, 1]} : vector<9x256xf32> to vector<1x256xf32>
    %289 = vector.broadcast %288 : vector<1x256xf32> to vector<16x256xf32>
    %290 = arith.mulf %287, %289 : vector<16x256xf32>
    %c239_i32_58 = arith.constant 239 : i32
    %291 = tpu.dynamic_rotate %260 by %c239_i32_58 dim 1 : vector<16x256xf32>, i32 -> vector<16x256xf32>
    %292 = vector.extract_strided_slice %262 {offsets = [8, 0], sizes = [1, 256], strides = [1, 1]} : vector<9x256xf32> to vector<1x256xf32>
    %293 = vector.broadcast %292 : vector<1x256xf32> to vector<16x256xf32>
    %294 = arith.mulf %291, %293 : vector<16x256xf32>
    %295 = tpu.concatenate %266, %270, %274, %278, %260, %282, %286, %290, %294 in 0 : vector<16x256xf32>, vector<16x256xf32>, vector<16x256xf32>, vector<16x256xf32>, vector<16x256xf32>, vector<16x256xf32>, vector<16x256xf32>, vector<16x256xf32>, vector<16x256xf32> -> vector<144x256xf32>
    %296 = arith.truncf %295 : vector<144x256xf32> to vector<144x256xbf16>
    %cst_59 = arith.constant dense<0.000000e+00> : vector<8x256xf32>
    %297 = tpu.matmul %261, %296, %cst_59 {dimension_numbers = #tpu.dot_dimension_numbers<[1], [0], [0], [1], [0, 0, 1, 1], [], []>} : vector<8x144xbf16>, vector<144x256xbf16>, vector<8x256xf32> -> vector<8x256xf32>
    %cst_60 = arith.constant dense<0.000000e+00> : vector<8xf32>
    %298 = vector.multi_reduction <add>, %297, %cst_60 [1] : vector<8x256xf32> to vector<8xf32>
    %299 = vector.shape_cast %298 : vector<8xf32> to vector<8x1xf32>
    %cst_61 = arith.constant 3.906250e-03 : f32
    %300 = vector.broadcast %cst_61 : f32 to vector<8x1xf32>
    %301 = arith.mulf %299, %300 : vector<8x1xf32>
    %302 = arith.mulf %297, %297 : vector<8x256xf32>
    %cst_62 = arith.constant dense<0.000000e+00> : vector<8xf32>
    %303 = vector.multi_reduction <add>, %302, %cst_62 [1] : vector<8x256xf32> to vector<8xf32>
    %304 = vector.shape_cast %303 : vector<8xf32> to vector<8x1xf32>
    %cst_63 = arith.constant 3.906250e-03 : f32
    %305 = vector.broadcast %cst_63 : f32 to vector<8x1xf32>
    %306 = arith.mulf %304, %305 : vector<8x1xf32>
    %307 = arith.mulf %301, %301 : vector<8x1xf32>
    %308 = arith.subf %306, %307 : vector<8x1xf32>
    %cst_64 = arith.constant 0.000000e+00 : f32
    %309 = vector.broadcast %cst_64 : f32 to vector<8x1xf32>
    %310 = arith.maximumf %308, %309 : vector<8x1xf32>
    %311 = vector.broadcast %301 : vector<8x1xf32> to vector<8x256xf32>
    %312 = arith.subf %297, %311 : vector<8x256xf32>
    %cst_65 = arith.constant 9.99999974E-6 : f32
    %313 = vector.broadcast %cst_65 : f32 to vector<8x1xf32>
    %314 = arith.addf %310, %313 : vector<8x1xf32>
    %315 = math.rsqrt %314 : vector<8x1xf32>
    %316 = vector.broadcast %315 : vector<8x1xf32> to vector<8x256xf32>
    %317 = arith.mulf %312, %316 : vector<8x256xf32>
    %cst_66 = arith.constant 0.000000e+00 : f32
    %318 = vector.broadcast %cst_66 : f32 to vector<8x256xf32>
    %319 = arith.maximumf %317, %318 : vector<8x256xf32>
    %320 = arith.truncf %319 : vector<8x256xf32> to vector<8x256xbf16>
    %c0_67 = arith.constant 0 : index
    %c0_68 = arith.constant 0 : index
    %321 = vector.load %arg15[%c0_67, %c0_68] : memref<256x1024xbf16, #tpu.memory_space<vmem>>, vector<256x1024xbf16>
    %cst_69 = arith.constant dense<0.000000e+00> : vector<8x1024xf32>
    %322 = tpu.matmul %320, %321, %cst_69 {dimension_numbers = #tpu.dot_dimension_numbers<[1], [0], [0], [1], [0, 0, 1, 1], [], []>} : vector<8x256xbf16>, vector<256x1024xbf16>, vector<8x1024xf32> -> vector<8x1024xf32>
    %c0_70 = arith.constant 0 : index
    %c0_71 = arith.constant 0 : index
    %323 = vector.load %arg6[%c0_70, %c0_71] : memref<3x72xbf16, #tpu.memory_space<vmem>>, vector<3x72xbf16>
    %c0_72 = arith.constant 0 : index
    %c0_73 = arith.constant 0 : index
    %324 = vector.load %arg11[%c0_72, %c0_73] : memref<9x1024xf32, #tpu.memory_space<vmem>>, vector<9x1024xf32>
    %c33_i32_74 = arith.constant 33 : i32
    %325 = tpu.dynamic_rotate %322 by %c33_i32_74 dim 1 : vector<8x1024xf32>, i32 -> vector<8x1024xf32>
    %326 = vector.extract_strided_slice %324 {offsets = [0, 0], sizes = [1, 1024], strides = [1, 1]} : vector<9x1024xf32> to vector<1x1024xf32>
    %327 = vector.broadcast %326 : vector<1x1024xf32> to vector<8x1024xf32>
    %328 = arith.mulf %325, %327 : vector<8x1024xf32>
    %c32_i32_75 = arith.constant 32 : i32
    %329 = tpu.dynamic_rotate %322 by %c32_i32_75 dim 1 : vector<8x1024xf32>, i32 -> vector<8x1024xf32>
    %330 = vector.extract_strided_slice %324 {offsets = [1, 0], sizes = [1, 1024], strides = [1, 1]} : vector<9x1024xf32> to vector<1x1024xf32>
    %331 = vector.broadcast %330 : vector<1x1024xf32> to vector<8x1024xf32>
    %332 = arith.mulf %329, %331 : vector<8x1024xf32>
    %c31_i32_76 = arith.constant 31 : i32
    %333 = tpu.dynamic_rotate %322 by %c31_i32_76 dim 1 : vector<8x1024xf32>, i32 -> vector<8x1024xf32>
    %334 = vector.extract_strided_slice %324 {offsets = [2, 0], sizes = [1, 1024], strides = [1, 1]} : vector<9x1024xf32> to vector<1x1024xf32>
    %335 = vector.broadcast %334 : vector<1x1024xf32> to vector<8x1024xf32>
    %336 = arith.mulf %333, %335 : vector<8x1024xf32>
    %c1_i32_77 = arith.constant 1 : i32
    %337 = tpu.dynamic_rotate %322 by %c1_i32_77 dim 1 : vector<8x1024xf32>, i32 -> vector<8x1024xf32>
    %338 = vector.extract_strided_slice %324 {offsets = [3, 0], sizes = [1, 1024], strides = [1, 1]} : vector<9x1024xf32> to vector<1x1024xf32>
    %339 = vector.broadcast %338 : vector<1x1024xf32> to vector<8x1024xf32>
    %340 = arith.mulf %337, %339 : vector<8x1024xf32>
    %c1023_i32_78 = arith.constant 1023 : i32
    %341 = tpu.dynamic_rotate %322 by %c1023_i32_78 dim 1 : vector<8x1024xf32>, i32 -> vector<8x1024xf32>
    %342 = vector.extract_strided_slice %324 {offsets = [5, 0], sizes = [1, 1024], strides = [1, 1]} : vector<9x1024xf32> to vector<1x1024xf32>
    %343 = vector.broadcast %342 : vector<1x1024xf32> to vector<8x1024xf32>
    %344 = arith.mulf %341, %343 : vector<8x1024xf32>
    %c993_i32_79 = arith.constant 993 : i32
    %345 = tpu.dynamic_rotate %322 by %c993_i32_79 dim 1 : vector<8x1024xf32>, i32 -> vector<8x1024xf32>
    %346 = vector.extract_strided_slice %324 {offsets = [6, 0], sizes = [1, 1024], strides = [1, 1]} : vector<9x1024xf32> to vector<1x1024xf32>
    %347 = vector.broadcast %346 : vector<1x1024xf32> to vector<8x1024xf32>
    %348 = arith.mulf %345, %347 : vector<8x1024xf32>
    %c992_i32_80 = arith.constant 992 : i32
    %349 = tpu.dynamic_rotate %322 by %c992_i32_80 dim 1 : vector<8x1024xf32>, i32 -> vector<8x1024xf32>
    %350 = vector.extract_strided_slice %324 {offsets = [7, 0], sizes = [1, 1024], strides = [1, 1]} : vector<9x1024xf32> to vector<1x1024xf32>
    %351 = vector.broadcast %350 : vector<1x1024xf32> to vector<8x1024xf32>
    %352 = arith.mulf %349, %351 : vector<8x1024xf32>
    %c991_i32_81 = arith.constant 991 : i32
    %353 = tpu.dynamic_rotate %322 by %c991_i32_81 dim 1 : vector<8x1024xf32>, i32 -> vector<8x1024xf32>
    %354 = vector.extract_strided_slice %324 {offsets = [8, 0], sizes = [1, 1024], strides = [1, 1]} : vector<9x1024xf32> to vector<1x1024xf32>
    %355 = vector.broadcast %354 : vector<1x1024xf32> to vector<8x1024xf32>
    %356 = arith.mulf %353, %355 : vector<8x1024xf32>
    %357 = tpu.concatenate %328, %332, %336, %340, %322, %344, %348, %352, %356 in 0 : vector<8x1024xf32>, vector<8x1024xf32>, vector<8x1024xf32>, vector<8x1024xf32>, vector<8x1024xf32>, vector<8x1024xf32>, vector<8x1024xf32>, vector<8x1024xf32>, vector<8x1024xf32> -> vector<72x1024xf32>
    %358 = arith.truncf %357 : vector<72x1024xf32> to vector<72x1024xbf16>
    %cst_82 = arith.constant dense<0.000000e+00> : vector<3x1024xf32>
    %359 = tpu.matmul %323, %358, %cst_82 {dimension_numbers = #tpu.dot_dimension_numbers<[1], [0], [0], [1], [0, 0, 1, 1], [], []>} : vector<3x72xbf16>, vector<72x1024xbf16>, vector<3x1024xf32> -> vector<3x1024xf32>
    %360 = math.tanh %359 : vector<3x1024xf32>
    %c0_83 = arith.constant 0 : index
    %c0_84 = arith.constant 0 : index
    %c0_85 = arith.constant 0 : index
    %361 = vector.load %arg16[%c0_83, %c0_84, %c0_85] : memref<1x3x1024xf32, #tpu.memory_space<vmem>>, vector<1x3x1024xf32>
    %362 = vector.shape_cast %361 : vector<1x3x1024xf32> to vector<3x1024xf32>
    %363 = vector.shape_cast %360 : vector<3x1024xf32> to vector<1x3x1024xf32>
    tpu.vector_store %arg16[%c0_83, %c0_84, %c0_85], %363 {strides = array<i32>} : memref<1x3x1024xf32, #tpu.memory_space<vmem>>, vector<1x3x1024xf32>,
    return
  }
  func.func @transform_0(%arg0: i32) -> (i32, i32, i32) {
    %c0_i32 = arith.constant 0 : i32
    %c0_i32_0 = arith.constant 0 : i32
    %c0_i32_1 = arith.constant 0 : i32
    return %arg0, %c0_i32, %c0_i32_0 : i32, i32, i32
  }
  func.func @transform_1(%arg0: i32) -> (i32, i32) {
    %c0_i32 = arith.constant 0 : i32
    %c0_i32_0 = arith.constant 0 : i32
    %c0_i32_1 = arith.constant 0 : i32
    return %c0_i32, %c0_i32_0 : i32, i32
  }
  func.func @transform_2(%arg0: i32) -> (i32, i32) {
    %c0_i32 = arith.constant 0 : i32
    %c0_i32_0 = arith.constant 0 : i32
    %c0_i32_1 = arith.constant 0 : i32
    return %c0_i32, %c0_i32_0 : i32, i32
  }
  func.func @transform_3(%arg0: i32) -> (i32, i32) {
    %c0_i32 = arith.constant 0 : i32
    %c0_i32_0 = arith.constant 0 : i32
    %c0_i32_1 = arith.constant 0 : i32
    return %c0_i32, %c0_i32_0 : i32, i32
  }
  func.func @transform_4(%arg0: i32) -> (i32, i32) {
    %c0_i32 = arith.constant 0 : i32
    %c0_i32_0 = arith.constant 0 : i32
    %c0_i32_1 = arith.constant 0 : i32
    return %c0_i32, %c0_i32_0 : i32, i32
  }
  func.func @transform_5(%arg0: i32) -> (i32, i32) {
    %c0_i32 = arith.constant 0 : i32
    %c0_i32_0 = arith.constant 0 : i32
    %c0_i32_1 = arith.constant 0 : i32
    return %c0_i32, %c0_i32_0 : i32, i32
  }
  func.func @transform_6(%arg0: i32) -> (i32, i32) {
    %c0_i32 = arith.constant 0 : i32
    %c0_i32_0 = arith.constant 0 : i32
    %c0_i32_1 = arith.constant 0 : i32
    return %c0_i32, %c0_i32_0 : i32, i32
  }
  func.func @transform_7(%arg0: i32) -> (i32, i32) {
    %c0_i32 = arith.constant 0 : i32
    %c0_i32_0 = arith.constant 0 : i32
    %c0_i32_1 = arith.constant 0 : i32
    return %c0_i32, %c0_i32_0 : i32, i32
  }
  func.func @transform_8(%arg0: i32) -> (i32, i32) {
    %c0_i32 = arith.constant 0 : i32
    %c0_i32_0 = arith.constant 0 : i32
    %c0_i32_1 = arith.constant 0 : i32
    return %c0_i32, %c0_i32_0 : i32, i32
  }
  func.func @transform_9(%arg0: i32) -> (i32, i32) {
    %c0_i32 = arith.constant 0 : i32
    %c0_i32_0 = arith.constant 0 : i32
    %c0_i32_1 = arith.constant 0 : i32
    return %c0_i32, %c0_i32_0 : i32, i32
  }
  func.func @transform_10(%arg0: i32) -> (i32, i32) {
    %c0_i32 = arith.constant 0 : i32
    %c0_i32_0 = arith.constant 0 : i32
    %c0_i32_1 = arith.constant 0 : i32
    return %c0_i32, %c0_i32_0 : i32, i32
  }
  func.func @transform_11(%arg0: i32) -> (i32, i32) {
    %c0_i32 = arith.constant 0 : i32
    %c0_i32_0 = arith.constant 0 : i32
    %c0_i32_1 = arith.constant 0 : i32
    return %c0_i32, %c0_i32_0 : i32, i32
  }
  func.func @transform_12(%arg0: i32) -> (i32, i32) {
    %c0_i32 = arith.constant 0 : i32
    %c0_i32_0 = arith.constant 0 : i32
    %c0_i32_1 = arith.constant 0 : i32
    return %c0_i32, %c0_i32_0 : i32, i32
  }
  func.func @transform_13(%arg0: i32) -> (i32, i32) {
    %c0_i32 = arith.constant 0 : i32
    %c0_i32_0 = arith.constant 0 : i32
    %c0_i32_1 = arith.constant 0 : i32
    return %c0_i32, %c0_i32_0 : i32, i32
  }
  func.func @transform_14(%arg0: i32) -> (i32, i32) {
    %c0_i32 = arith.constant 0 : i32
    %c0_i32_0 = arith.constant 0 : i32
    %c0_i32_1 = arith.constant 0 : i32
    return %c0_i32, %c0_i32_0 : i32, i32
  }
  func.func @transform_15(%arg0: i32) -> (i32, i32, i32) {
    %c0_i32 = arith.constant 0 : i32
    %c0_i32_0 = arith.constant 0 : i32
    %c0_i32_1 = arith.constant 0 : i32
    return %arg0, %c0_i32, %c0_i32_0 : i32, i32, i32
  }
}

</mosaic_0001>

<llo_original>
// kernel: cycle_generator_forward.1
$region0: #{cycle_generator_forward.1}
  #allocation0 [shape = 'u32[]', space=smem, size = 0x4, offset = 0x4, fixed_abs, tag = 'smem constant byte address 0x4 - core index']
  #allocation1 [shape = 'u32[144,128]{1,0:T(1,128)}', space=vmem, size = 0x12000, scoped, tag = 'internal scratch']
  %s0 = inlined_call_operand.vmem [shape: f32[2,8,1024], index: 0, kind: input, shape index: {}]
  %s1 = inlined_call_operand.vmem [shape: bf16[8,128], index: 1, kind: input, shape index: {}]
  %s2 = inlined_call_operand.vmem [shape: bf16[16,128], index: 2, kind: input, shape index: {}]
  %s3 = inlined_call_operand.vmem [shape: bf16[16,144], index: 3, kind: input, shape index: {}]
  %s4 = inlined_call_operand.vmem [shape: bf16[8,144], index: 4, kind: input, shape index: {}]
  %s5 = inlined_call_operand.vmem [shape: bf16[3,72], index: 5, kind: input, shape index: {}]
  %s6 = inlined_call_operand.hbm [shape: f32[16,1024], index: 6, kind: input, shape index: {}]
  %s7 = inlined_call_operand.hbm [shape: f32[16,256], index: 7, kind: input, shape index: {}]
  %s8 = inlined_call_operand.hbm [shape: f32[9,64], index: 8, kind: input, shape index: {}]
  %s9 = inlined_call_operand.hbm [shape: f32[9,256], index: 9, kind: input, shape index: {}]
  %s10 = inlined_call_operand.hbm [shape: f32[9,1024], index: 10, kind: input, shape index: {}]
  %s11 = inlined_call_operand.vmem [shape: bf16[1024,256], index: 11, kind: input, shape index: {}]
  %s12 = inlined_call_operand.vmem [shape: bf16[256,64], index: 12, kind: input, shape index: {}]
  %s13 = inlined_call_operand.hbm [shape: bf16[64,256], index: 13, kind: input, shape index: {}]
  %s14 = inlined_call_operand.vmem [shape: bf16[256,1024], index: 14, kind: input, shape index: {}]
  %s15 = inlined_call_operand.vmem [shape: f32[2,3,1024], index: 15, kind: output, shape index: {}]
  %s16 = sld [smem:[#allocation0]]
  $region117: #{cycle_generator_forward.1} parent=0
    _
  %s18 = ssub.s32 1, %s16
  %s19 = scalar_select 0, %s18, %s16
  $region1: #{cycle_generator_forward.1} parent=0
    #allocation2 [shape = 'u8[65536]{0}', space=vmem, size = 0x10000, scoped, tag = 'input window, operand 6, single buffered']
    #allocation3 [shape = 's32[2]{0}', space=sflag, size = 0x8, scoped, tag = 'scoped memory for cycle_generator_forward.1']
    #allocation4 [shape = 'u8[16384]{0}', space=vmem, size = 0x4000, scoped, tag = 'input window, operand 7, single buffered']
    #allocation5 [shape = 's32[1]{0}', space=sflag, size = 0x4, scoped, tag = 'scoped memory for cycle_generator_forward.1']
    #allocation6 [shape = 'u8[8192]{0}', space=vmem, size = 0x2000, scoped, tag = 'input window, operand 8, single buffered']
    #allocation7 [shape = 'u8[16384]{0}', space=vmem, size = 0x4000, scoped, tag = 'input window, operand 9, single buffered']
    #allocation8 [shape = 's32[1]{0}', space=sflag, size = 0x4, scoped, tag = 'scoped memory for cycle_generator_forward.1']
    #allocation9 [shape = 'u8[65536]{0}', space=vmem, size = 0x10000, scoped, tag = 'input window, operand 10, single buffered']
    #allocation10 [shape = 'u8[32768]{0}', space=vmem, size = 0x8000, scoped, tag = 'input window, operand 13, single buffered']
    #allocation11 [shape = 's32[1]{0}', space=sflag, size = 0x4, scoped, tag = 'scoped memory for cycle_generator_forward.1']
    %20 = vsyncpa [#allocation3], 0
    %21 = vsyncpa [#allocation5], 0
    %22 = vsyncpa [#allocation8], 0
    %23 = vsyncpa [#allocation11], 0
    loop: start=0, step=1, limit=4
    $region2: #{cycle_generator_forward.1} parent=1 // loop_pre_header
      _
    $region3: #{cycle_generator_forward.1} parent=1 // loop_header
      %s25 = sphi 0, %s29
      %p26 = scmp.ge.s32.totalorder %s25, 4
      %s35 = sphi 0, %s37
      %s38 = sphi 0, %s35
      %s39 = sphi 0, %s38
      %s55 = sphi 0, %s39
      %s59 = sphi 0, %s59
      %s61 = sphi 0, %s59
      %s62 = sphi 0, %s61
      %s76 = sphi 0, %s62
      %s80 = sphi 0, %s80
      %s82 = sphi 0, %s80
      %s83 = sphi 0, %s82
      %s97 = sphi 0, %s83
      %s101 = sphi 0, %s101
      %s103 = sphi 0, %s101
      %s104 = sphi 0, %s103
      %s118 = sphi 0, %s104
      %s122 = sphi 0, %s122
      %s124 = sphi 0, %s122
      %s125 = sphi 0, %s124
      %s139 = sphi 0, %s125
      %s143 = sphi 0, %s143
      %s145 = sphi 0, %s143
      %s146 = sphi 0, %s145
      %s160 = sphi 0, %s146
      %s164 = sphi 0, %s164
      %s166 = sphi 0, %s164
      %s167 = sphi 0, %s166
      %s181 = sphi 0, %s167
      %s185 = sphi 0, %s185
      %s187 = sphi 0, %s185
      %s188 = sphi 0, %s187
      %s202 = sphi 0, %s188
      %s206 = sphi 0, %s206
      %s208 = sphi 0, %s206
      %s209 = sphi 0, %s208
      %s223 = sphi 0, %s209
      %s227 = sphi 0, %s227
      %s229 = sphi 0, %s227
      %s230 = sphi 0, %s229
      %s244 = sphi 0, %s230
      %s248 = sphi 0, %s248
      %s250 = sphi 0, %s248
      %s251 = sphi 0, %s250
      %s265 = sphi 0, %s251
      %s269 = sphi 0, %s269
      %s271 = sphi 0, %s269
      %s272 = sphi 0, %s271
      %s286 = sphi 0, %s272
      %s290 = sphi 0, %s290
      %s292 = sphi 0, %s290
      %s293 = sphi 0, %s292
      %s307 = sphi 0, %s293
      %s311 = sphi 0, %s311
      %s313 = sphi 0, %s311
      %s314 = sphi 0, %s313
      %s328 = sphi 0, %s314
      %s332 = sphi 0, %s332
      %s334 = sphi 0, %s332
      %s335 = sphi 0, %s334
      %s349 = sphi 0, %s335
      %s355 = sphi 0, %s357
      %s358 = sphi 0, %s355
      %s359 = sphi 0, %s358
      %s375 = sphi 0, %s359
    $region4: #{cycle_generator_forward.1} parent=1 // loop_header_branch
      %28 = sbr.rel (%p26) target = $region8
    $region5: #{cycle_generator_forward.1} parent=1 // loop_body
      %s30 = ssub.s32 %s25, 1
      %s31 = ssub.s32 %s25, 2
      %s32 = sadd.s32 %s25, 1
      %s33 = ssub.s32 %s25, %s32
      %p34 = scmp.eq.s32.totalorder %s33, 0
      %s36 = sadd.s32 %s35, 1
      %s37 = scalar_select %p34, %s35, %s36
      %p40 = pneg %p34
      %p41 = scmp.eq.s32.totalorder %s25, 1
      %p42 = por %p40, %p41
      %p43 = scmp.ne.s32.totalorder %s35, %s38
      %p44 = scmp.eq.s32.totalorder %s25, 0
      %p45 = por %p43, %p44
      %p46 = scmp.ne.s32.totalorder %s35, %s38
      %p47 = scmp.eq.s32.totalorder %s30, 1
      %p48 = por %p46, %p47
      %p49 = scmp.ne.s32.totalorder %s38, %s39
      %p50 = scmp.eq.s32.totalorder %s30, 0
      %p51 = por %p49, %p50
      %p52 = scmp.ne.s32.totalorder %s38, %s39
      %p53 = scmp.eq.s32.totalorder %s31, 1
      %p54 = por %p52, %p53
      %p56 = scmp.ne.s32.totalorder %s39, %s55
      %p57 = scmp.eq.s32.totalorder %s31, 0
      %p58 = por %p56, %p57
      %s60 = sadd.s32 %s59, 1
      %p63 = scmp.eq.s32.totalorder %s25, 1
      %p64 = scmp.ne.s32.totalorder %s59, %s61
      %p65 = scmp.eq.s32.totalorder %s25, 0
      %p66 = por %p64, %p65
      %p67 = scmp.ne.s32.totalorder %s59, %s61
      %p68 = scmp.eq.s32.totalorder %s30, 1
      %p69 = por %p67, %p68
      %p70 = scmp.ne.s32.totalorder %s61, %s62
      %p71 = scmp.eq.s32.totalorder %s30, 0
      %p72 = por %p70, %p71
      %p73 = scmp.ne.s32.totalorder %s61, %s62
      %p74 = scmp.eq.s32.totalorder %s31, 1
      %p75 = por %p73, %p74
      %p77 = scmp.ne.s32.totalorder %s62, %s76
      %p78 = scmp.eq.s32.totalorder %s31, 0
      %p79 = por %p77, %p78
      %s81 = sadd.s32 %s80, 1
      %p84 = scmp.eq.s32.totalorder %s25, 1
      %p85 = scmp.ne.s32.totalorder %s80, %s82
      %p86 = scmp.eq.s32.totalorder %s25, 0
      %p87 = por %p85, %p86
      %p88 = scmp.ne.s32.totalorder %s80, %s82
      %p89 = scmp.eq.s32.totalorder %s30, 1
      %p90 = por %p88, %p89
      %p91 = scmp.ne.s32.totalorder %s82, %s83
      %p92 = scmp.eq.s32.totalorder %s30, 0
      %p93 = por %p91, %p92
      %p94 = scmp.ne.s32.totalorder %s82, %s83
      %p95 = scmp.eq.s32.totalorder %s31, 1
      %p96 = por %p94, %p95
      %p98 = scmp.ne.s32.totalorder %s83, %s97
      %p99 = scmp.eq.s32.totalorder %s31, 0
      %p100 = por %p98, %p99
      %s102 = sadd.s32 %s101, 1
      %p105 = scmp.eq.s32.totalorder %s25, 1
      %p106 = scmp.ne.s32.totalorder %s101, %s103
      %p107 = scmp.eq.s32.totalorder %s25, 0
      %p108 = por %p106, %p107
      %p109 = scmp.ne.s32.totalorder %s101, %s103
      %p110 = scmp.eq.s32.totalorder %s30, 1
      %p111 = por %p109, %p110
      %p112 = scmp.ne.s32.totalorder %s103, %s104
      %p113 = scmp.eq.s32.totalorder %s30, 0
      %p114 = por %p112, %p113
      %p115 = scmp.ne.s32.totalorder %s103, %s104
      %p116 = scmp.eq.s32.totalorder %s31, 1
      %p117 = por %p115, %p116
      %p119 = scmp.ne.s32.totalorder %s104, %s118
      %p120 = scmp.eq.s32.totalorder %s31, 0
      %p121 = por %p119, %p120
      %s123 = sadd.s32 %s122, 1
      %p126 = scmp.eq.s32.totalorder %s25, 1
      %p127 = scmp.ne.s32.totalorder %s122, %s124
      %p128 = scmp.eq.s32.totalorder %s25, 0
      %p129 = por %p127, %p128
      %p130 = scmp.ne.s32.totalorder %s122, %s124
      %p131 = scmp.eq.s32.totalorder %s30, 1
      %p132 = por %p130, %p131
      %p133 = scmp.ne.s32.totalorder %s124, %s125
      %p134 = scmp.eq.s32.totalorder %s30, 0
      %p135 = por %p133, %p134
      %p136 = scmp.ne.s32.totalorder %s124, %s125
      %p137 = scmp.eq.s32.totalorder %s31, 1
      %p138 = por %p136, %p137
      %p140 = scmp.ne.s32.totalorder %s125, %s139
      %p141 = scmp.eq.s32.totalorder %s31, 0
      %p142 = por %p140, %p141
      %s144 = sadd.s32 %s143, 1
      %p147 = scmp.eq.s32.totalorder %s25, 1
      %p148 = scmp.ne.s32.totalorder %s143, %s145
      %p149 = scmp.eq.s32.totalorder %s25, 0
      %p150 = por %p148, %p149
      %p151 = scmp.ne.s32.totalorder %s143, %s145
      %p152 = scmp.eq.s32.totalorder %s30, 1
      %p153 = por %p151, %p152
      %p154 = scmp.ne.s32.totalorder %s145, %s146
      %p155 = scmp.eq.s32.totalorder %s30, 0
      %p156 = por %p154, %p155
      %p157 = scmp.ne.s32.totalorder %s145, %s146
      %p158 = scmp.eq.s32.totalorder %s31, 1
      %p159 = por %p157, %p158
      %p161 = scmp.ne.s32.totalorder %s146, %s160
      %p162 = scmp.eq.s32.totalorder %s31, 0
      %p163 = por %p161, %p162
      %s165 = sadd.s32 %s164, 1
      %p168 = scmp.eq.s32.totalorder %s25, 1
      %p169 = scmp.ne.s32.totalorder %s164, %s166
      %p170 = scmp.eq.s32.totalorder %s25, 0
      %p171 = por %p169, %p170
      %p172 = scmp.ne.s32.totalorder %s164, %s166
      %p173 = scmp.eq.s32.totalorder %s30, 1
      %p174 = por %p172, %p173
      %p175 = scmp.ne.s32.totalorder %s166, %s167
      %p176 = scmp.eq.s32.totalorder %s30, 0
      %p177 = por %p175, %p176
      %p178 = scmp.ne.s32.totalorder %s166, %s167
      %p179 = scmp.eq.s32.totalorder %s31, 1
      %p180 = por %p178, %p179
      %p182 = scmp.ne.s32.totalorder %s167, %s181
      %p183 = scmp.eq.s32.totalorder %s31, 0
      %p184 = por %p182, %p183
      %s186 = sadd.s32 %s185, 1
      %p189 = scmp.eq.s32.totalorder %s25, 1
      %p190 = scmp.ne.s32.totalorder %s185, %s187
      %p191 = scmp.eq.s32.totalorder %s25, 0
      %p192 = por %p190, %p191
      %p193 = scmp.ne.s32.totalorder %s185, %s187
      %p194 = scmp.eq.s32.totalorder %s30, 1
      %p195 = por %p193, %p194
      %p196 = scmp.ne.s32.totalorder %s187, %s188
      %p197 = scmp.eq.s32.totalorder %s30, 0
      %p198 = por %p196, %p197
      %p199 = scmp.ne.s32.totalorder %s187, %s188
      %p200 = scmp.eq.s32.totalorder %s31, 1
      %p201 = por %p199, %p200
      %p203 = scmp.ne.s32.totalorder %s188, %s202
      %p204 = scmp.eq.s32.totalorder %s31, 0
      %p205 = por %p203, %p204
      %s207 = sadd.s32 %s206, 1
      %p210 = scmp.eq.s32.totalorder %s25, 1
      %p211 = scmp.ne.s32.totalorder %s206, %s208
      %p212 = scmp.eq.s32.totalorder %s25, 0
      %p213 = por %p211, %p212
      %p214 = scmp.ne.s32.totalorder %s206, %s208
      %p215 = scmp.eq.s32.totalorder %s30, 1
      %p216 = por %p214, %p215
      %p217 = scmp.ne.s32.totalorder %s208, %s209
      %p218 = scmp.eq.s32.totalorder %s30, 0
      %p219 = por %p217, %p218
      %p220 = scmp.ne.s32.totalorder %s208, %s209
      %p221 = scmp.eq.s32.totalorder %s31, 1
      %p222 = por %p220, %p221
      %p224 = scmp.ne.s32.totalorder %s209, %s223
      %p225 = scmp.eq.s32.totalorder %s31, 0
      %p226 = por %p224, %p225
      %s228 = sadd.s32 %s227, 1
      %p231 = scmp.eq.s32.totalorder %s25, 1
      %p232 = scmp.ne.s32.totalorder %s227, %s229
      %p233 = scmp.eq.s32.totalorder %s25, 0
      %p234 = por %p232, %p233
      %p235 = scmp.ne.s32.totalorder %s227, %s229
      %p236 = scmp.eq.s32.totalorder %s30, 1
      %p237 = por %p235, %p236
      %p238 = scmp.ne.s32.totalorder %s229, %s230
      %p239 = scmp.eq.s32.totalorder %s30, 0
      %p240 = por %p238, %p239
      %p241 = scmp.ne.s32.totalorder %s229, %s230
      %p242 = scmp.eq.s32.totalorder %s31, 1
      %p243 = por %p241, %p242
      %p245 = scmp.ne.s32.totalorder %s230, %s244
      %p246 = scmp.eq.s32.totalorder %s31, 0
      %p247 = por %p245, %p246
      %s249 = sadd.s32 %s248, 1
      %p252 = scmp.eq.s32.totalorder %s25, 1
      %p253 = scmp.ne.s32.totalorder %s248, %s250
      %p254 = scmp.eq.s32.totalorder %s25, 0
      %p255 = por %p253, %p254
      %p256 = scmp.ne.s32.totalorder %s248, %s250
      %p257 = scmp.eq.s32.totalorder %s30, 1
      %p258 = por %p256, %p257
      %p259 = scmp.ne.s32.totalorder %s250, %s251
      %p260 = scmp.eq.s32.totalorder %s30, 0
      %p261 = por %p259, %p260
      %p262 = scmp.ne.s32.totalorder %s250, %s251
      %p263 = scmp.eq.s32.totalorder %s31, 1
      %p264 = por %p262, %p263
      %p266 = scmp.ne.s32.totalorder %s251, %s265
      %p267 = scmp.eq.s32.totalorder %s31, 0
      %p268 = por %p266, %p267
      %s270 = sadd.s32 %s269, 1
      %p273 = scmp.eq.s32.totalorder %s25, 1
      %p274 = scmp.ne.s32.totalorder %s269, %s271
      %p275 = scmp.eq.s32.totalorder %s25, 0
      %p276 = por %p274, %p275
      %p277 = scmp.ne.s32.totalorder %s269, %s271
      %p278 = scmp.eq.s32.totalorder %s30, 1
      %p279 = por %p277, %p278
      %p280 = scmp.ne.s32.totalorder %s271, %s272
      %p281 = scmp.eq.s32.totalorder %s30, 0
      %p282 = por %p280, %p281
      %p283 = scmp.ne.s32.totalorder %s271, %s272
      %p284 = scmp.eq.s32.totalorder %s31, 1
      %p285 = por %p283, %p284
      %p287 = scmp.ne.s32.totalorder %s272, %s286
      %p288 = scmp.eq.s32.totalorder %s31, 0
      %p289 = por %p287, %p288
      %s291 = sadd.s32 %s290, 1
      %p294 = scmp.eq.s32.totalorder %s25, 1
      %p295 = scmp.ne.s32.totalorder %s290, %s292
      %p296 = scmp.eq.s32.totalorder %s25, 0
      %p297 = por %p295, %p296
      %p298 = scmp.ne.s32.totalorder %s290, %s292
      %p299 = scmp.eq.s32.totalorder %s30, 1
      %p300 = por %p298, %p299
      %p301 = scmp.ne.s32.totalorder %s292, %s293
      %p302 = scmp.eq.s32.totalorder %s30, 0
      %p303 = por %p301, %p302
      %p304 = scmp.ne.s32.totalorder %s292, %s293
      %p305 = scmp.eq.s32.totalorder %s31, 1
      %p306 = por %p304, %p305
      %p308 = scmp.ne.s32.totalorder %s293, %s307
      %p309 = scmp.eq.s32.totalorder %s31, 0
      %p310 = por %p308, %p309
      %s312 = sadd.s32 %s311, 1
      %p315 = scmp.eq.s32.totalorder %s25, 1
      %p316 = scmp.ne.s32.totalorder %s311, %s313
      %p317 = scmp.eq.s32.totalorder %s25, 0
      %p318 = por %p316, %p317
      %p319 = scmp.ne.s32.totalorder %s311, %s313
      %p320 = scmp.eq.s32.totalorder %s30, 1
      %p321 = por %p319, %p320
      %p322 = scmp.ne.s32.totalorder %s313, %s314
      %p323 = scmp.eq.s32.totalorder %s30, 0
      %p324 = por %p322, %p323
      %p325 = scmp.ne.s32.totalorder %s313, %s314
      %p326 = scmp.eq.s32.totalorder %s31, 1
      %p327 = por %p325, %p326
      %p329 = scmp.ne.s32.totalorder %s314, %s328
      %p330 = scmp.eq.s32.totalorder %s31, 0
      %p331 = por %p329, %p330
      %s333 = sadd.s32 %s332, 1
      %p336 = scmp.eq.s32.totalorder %s25, 1
      %p337 = scmp.ne.s32.totalorder %s332, %s334
      %p338 = scmp.eq.s32.totalorder %s25, 0
      %p339 = por %p337, %p338
      %p340 = scmp.ne.s32.totalorder %s332, %s334
      %p341 = scmp.eq.s32.totalorder %s30, 1
      %p342 = por %p340, %p341
      %p343 = scmp.ne.s32.totalorder %s334, %s335
      %p344 = scmp.eq.s32.totalorder %s30, 0
      %p345 = por %p343, %p344
      %p346 = scmp.ne.s32.totalorder %s334, %s335
      %p347 = scmp.eq.s32.totalorder %s31, 1
      %p348 = por %p346, %p347
      %p350 = scmp.ne.s32.totalorder %s335, %s349
      %p351 = scmp.eq.s32.totalorder %s31, 0
      %p352 = por %p350, %p351
      %s353 = ssub.s32 %s25, %s32
      %p354 = scmp.eq.s32.totalorder %s353, 0
      %s356 = sadd.s32 %s355, 1
      %s357 = scalar_select %p354, %s355, %s356
      %p360 = pneg %p354
      %p361 = scmp.eq.s32.totalorder %s25, 1
      %p362 = por %p360, %p361
      %p363 = scmp.ne.s32.totalorder %s355, %s358
      %p364 = scmp.eq.s32.totalorder %s25, 0
      %p365 = por %p363, %p364
      %p366 = scmp.ne.s32.totalorder %s355, %s358
      %p367 = scmp.eq.s32.totalorder %s30, 1
      %p368 = por %p366, %p367
      %p369 = scmp.ne.s32.totalorder %s358, %s359
      %p370 = scmp.eq.s32.totalorder %s30, 0
      %p371 = por %p369, %p370
      %p372 = scmp.ne.s32.totalorder %s358, %s359
      %p373 = scmp.eq.s32.totalorder %s31, 1
      %p374 = por %p372, %p373
      %p376 = scmp.ne.s32.totalorder %s359, %s375
      %p377 = scmp.eq.s32.totalorder %s31, 0
      %p378 = por %p376, %p377
      %p379 = scmp.le.s32.totalorder 1, %s25
      %p380 = scmp.lt.s32.totalorder %s25, 3
      %p381 = pnand %p379, %p380
      %p382 = pneg %p381
      // Predicated region
      $region9: #{cycle_generator_forward.1} parent=5 // pred_check
        _
      $region10: #{cycle_generator_forward.1} parent=5 // pred_check_branch
        %384 = sbr.rel (%p381) target = $region12
      $region11: #{cycle_generator_forward.1} parent=5 // pred_region
        %s385 = ssub.s32 %s25, 1
        // Predicated region
        $region13: #{cycle_generator_forward.1} parent=11 // pred_check
          %p386 = pneg %p72
        $region14: #{cycle_generator_forward.1} parent=11 // pred_check_branch
          %388 = sbr.rel (%p386) target = $region16
        $region15: #{cycle_generator_forward.1} parent=11 // pred_region
          _
        $region16: #{cycle_generator_forward.1} parent=11 // pred_fallthru
          _
        // Predicated region
        $region17: #{cycle_generator_forward.1} parent=11 // pred_check
          %p389 = pneg %p93
        $region18: #{cycle_generator_forward.1} parent=11 // pred_check_branch
          %391 = sbr.rel (%p389) target = $region20
        $region19: #{cycle_generator_forward.1} parent=11 // pred_region
          _
        $region20: #{cycle_generator_forward.1} parent=11 // pred_fallthru
          _
        // Predicated region
        $region21: #{cycle_generator_forward.1} parent=11 // pred_check
          %p392 = pneg %p114
        $region22: #{cycle_generator_forward.1} parent=11 // pred_check_branch
          %394 = sbr.rel (%p392) target = $region24
        $region23: #{cycle_generator_forward.1} parent=11 // pred_region
          _
        $region24: #{cycle_generator_forward.1} parent=11 // pred_fallthru
          _
        // Predicated region
        $region25: #{cycle_generator_forward.1} parent=11 // pred_check
          %p395 = pneg %p135
        $region26: #{cycle_generator_forward.1} parent=11 // pred_check_branch
          %397 = sbr.rel (%p395) target = $region28
        $region27: #{cycle_generator_forward.1} parent=11 // pred_region
          _
        $region28: #{cycle_generator_forward.1} parent=11 // pred_fallthru
          _
        // Predicated region
        $region29: #{cycle_generator_forward.1} parent=11 // pred_check
          %p398 = pneg %p156
        $region30: #{cycle_generator_forward.1} parent=11 // pred_check_branch
          %400 = sbr.rel (%p398) target = $region32
        $region31: #{cycle_generator_forward.1} parent=11 // pred_region
          _
        $region32: #{cycle_generator_forward.1} parent=11 // pred_fallthru
          _
        // Predicated region
        $region33: #{cycle_generator_forward.1} parent=11 // pred_check
          %p401 = pneg %p177
        $region34: #{cycle_generator_forward.1} parent=11 // pred_check_branch
          %403 = sbr.rel (%p401) target = $region36
        $region35: #{cycle_generator_forward.1} parent=11 // pred_region
          %s405 = ssub.s32 2048, 2048
          %406 = vsyncadd [#allocation3], %s405
          %s407 = sshll.u32 [#allocation2], 4
          %s408 = int_to_ptr.vmem [resolvable:$true] %s407
          %413 = dma.hbm_to_vmem [thread:$0]  %s6, 2048, %s408, [#allocation3], 1024, 1024, 64
        $region36: #{cycle_generator_forward.1} parent=11 // pred_fallthru
          _
        // Predicated region
        $region37: #{cycle_generator_forward.1} parent=11 // pred_check
          %p414 = pneg %p198
        $region38: #{cycle_generator_forward.1} parent=11 // pred_check_branch
          %416 = sbr.rel (%p414) target = $region40
        $region39: #{cycle_generator_forward.1} parent=11 // pred_region
          %s418 = ssub.s32 512, 512
          %419 = vsyncadd [#allocation5], %s418
          %s420 = sshll.u32 [#allocation4], 4
          %s421 = int_to_ptr.vmem [resolvable:$true] %s420
          %426 = dma.hbm_to_vmem [thread:$0]  %s7, 512, %s421, [#allocation5], 256, 256, 16
        $region40: #{cycle_generator_forward.1} parent=11 // pred_fallthru
          _
        // Predicated region
        $region41: #{cycle_generator_forward.1} parent=11 // pred_check
          %p427 = pneg %p219
        $region42: #{cycle_generator_forward.1} parent=11 // pred_check_branch
          %429 = sbr.rel (%p427) target = $region44
        $region43: #{cycle_generator_forward.1} parent=11 // pred_region
          %s431 = ssub.s32 256, 256
          %432 = vsyncadd [#allocation5], %s431
          %s433 = sshll.u32 [#allocation6], 4
          %s434 = int_to_ptr.vmem [resolvable:$true] %s433
          %439 = dma.hbm_to_vmem [thread:$0]  %s8, 256, %s434, [#allocation5], 128, 128, 8
        $region44: #{cycle_generator_forward.1} parent=11 // pred_fallthru
          _
        // Predicated region
        $region45: #{cycle_generator_forward.1} parent=11 // pred_check
          %p440 = pneg %p240
        $region46: #{cycle_generator_forward.1} parent=11 // pred_check_branch
          %442 = sbr.rel (%p440) target = $region48
        $region47: #{cycle_generator_forward.1} parent=11 // pred_region
          %s444 = ssub.s32 512, 512
          %445 = vsyncadd [#allocation8], %s444
          %s446 = sshll.u32 [#allocation7], 4
          %s447 = int_to_ptr.vmem [resolvable:$true] %s446
          %452 = dma.hbm_to_vmem [thread:$0]  %s9, 512, %s447, [#allocation8], 256, 256, 16
        $region48: #{cycle_generator_forward.1} parent=11 // pred_fallthru
          _
        // Predicated region
        $region49: #{cycle_generator_forward.1} parent=11 // pred_check
          %p453 = pneg %p261
        $region50: #{cycle_generator_forward.1} parent=11 // pred_check_branch
          %455 = sbr.rel (%p453) target = $region52
        $region51: #{cycle_generator_forward.1} parent=11 // pred_region
          %s457 = ssub.s32 2048, 2048
          %458 = vsyncadd [#allocation8], %s457
          %s459 = sshll.u32 [#allocation9], 4
          %s460 = int_to_ptr.vmem [resolvable:$true] %s459
          %465 = dma.hbm_to_vmem [thread:$0]  %s10, 2048, %s460, [#allocation8], 1024, 1024, 64
        $region52: #{cycle_generator_forward.1} parent=11 // pred_fallthru
          _
        // Predicated region
        $region53: #{cycle_generator_forward.1} parent=11 // pred_check
          %p466 = pneg %p282
        $region54: #{cycle_generator_forward.1} parent=11 // pred_check_branch
          %468 = sbr.rel (%p466) target = $region56
        $region55: #{cycle_generator_forward.1} parent=11 // pred_region
          _
        $region56: #{cycle_generator_forward.1} parent=11 // pred_fallthru
          _
        // Predicated region
        $region57: #{cycle_generator_forward.1} parent=11 // pred_check
          %p469 = pneg %p303
        $region58: #{cycle_generator_forward.1} parent=11 // pred_check_branch
          %471 = sbr.rel (%p469) target = $region60
        $region59: #{cycle_generator_forward.1} parent=11 // pred_region
          _
        $region60: #{cycle_generator_forward.1} parent=11 // pred_fallthru
          _
        // Predicated region
        $region61: #{cycle_generator_forward.1} parent=11 // pred_check
          %p472 = pneg %p324
        $region62: #{cycle_generator_forward.1} parent=11 // pred_check_branch
          %474 = sbr.rel (%p472) target = $region64
        $region63: #{cycle_generator_forward.1} parent=11 // pred_region
          %s476 = ssub.s32 1024, 1024
          %477 = vsyncadd [#allocation11], %s476
          %s478 = sshll.u32 [#allocation10], 4
          %s479 = int_to_ptr.vmem [resolvable:$true] %s478
          %484 = dma.hbm_to_vmem [thread:$0]  %s13, 1024, %s479, [#allocation11], 128, 128, 8
        $region64: #{cycle_generator_forward.1} parent=11 // pred_fallthru
          _
        // Predicated region
        $region65: #{cycle_generator_forward.1} parent=11 // pred_check
          %p485 = pneg %p345
        $region66: #{cycle_generator_forward.1} parent=11 // pred_check_branch
          %487 = sbr.rel (%p485) target = $region68
        $region67: #{cycle_generator_forward.1} parent=11 // pred_region
          _
        $region68: #{cycle_generator_forward.1} parent=11 // pred_fallthru
          _
      $region12: #{cycle_generator_forward.1} parent=5 // pred_fallthru
        _
      %p488 = scmp.lt.s32.totalorder %s25, 2
      // Predicated region
      $region69: #{cycle_generator_forward.1} parent=5 // pred_check
        %p489 = pneg %p488
      $region70: #{cycle_generator_forward.1} parent=5 // pred_check_branch
        %491 = sbr.rel (%p489) target = $region72
      $region71: #{cycle_generator_forward.1} parent=5 // pred_region
        // Predicated region
        $region73: #{cycle_generator_forward.1} parent=71 // pred_check
          %p492 = pneg %p45
        $region74: #{cycle_generator_forward.1} parent=71 // pred_check_branch
          %494 = sbr.rel (%p492) target = $region76
        $region75: #{cycle_generator_forward.1} parent=71 // pred_region
          %p495 = scmp.lt.s32.totalorder %s25, 1
          %s496 = scalar_select %p495, %s25, 1
          %s497 = smul.addr %s496, 8
          %s498 = smul.addr %s497, 8
          %s499 = scalar_lea.vmem %s0, %s498
        $region76: #{cycle_generator_forward.1} parent=71 // pred_fallthru
          _
      $region72: #{cycle_generator_forward.1} parent=5 // pred_fallthru
        _
      %p500 = scmp.le.s32.totalorder 1, %s25
      %p501 = scmp.lt.s32.totalorder %s25, 3
      %p502 = pnand %p500, %p501
      %p503 = pneg %p502
      // Predicated region
      $region77: #{cycle_generator_forward.1} parent=5 // pred_check
        _
      $region78: #{cycle_generator_forward.1} parent=5 // pred_check_branch
        %505 = sbr.rel (%p502) target = $region80
      $region79: #{cycle_generator_forward.1} parent=5 // pred_region
        %s506 = ssub.s32 %s25, 1
        // Predicated region
        $region81: #{cycle_generator_forward.1} parent=79 // pred_check
          %p507 = pneg %p177
        $region82: #{cycle_generator_forward.1} parent=79 // pred_check_branch
          %509 = sbr.rel (%p507) target = $region84
        $region83: #{cycle_generator_forward.1} parent=79 // pred_region
          %510 = dma.done [#allocation3], 2048
        $region84: #{cycle_generator_forward.1} parent=79 // pred_fallthru
          _
        // Predicated region
        $region85: #{cycle_generator_forward.1} parent=79 // pred_check
          %p511 = pneg %p198
        $region86: #{cycle_generator_forward.1} parent=79 // pred_check_branch
          %513 = sbr.rel (%p511) target = $region88
        $region87: #{cycle_generator_forward.1} parent=79 // pred_region
          %514 = dma.done [#allocation5], 512
        $region88: #{cycle_generator_forward.1} parent=79 // pred_fallthru
          _
        // Predicated region
        $region89: #{cycle_generator_forward.1} parent=79 // pred_check
          %p515 = pneg %p219
        $region90: #{cycle_generator_forward.1} parent=79 // pred_check_branch
          %517 = sbr.rel (%p515) target = $region92
        $region91: #{cycle_generator_forward.1} parent=79 // pred_region
          %518 = dma.done [#allocation5], 256
        $region92: #{cycle_generator_forward.1} parent=79 // pred_fallthru
          _
        // Predicated region
        $region93: #{cycle_generator_forward.1} parent=79 // pred_check
          %p519 = pneg %p240
        $region94: #{cycle_generator_forward.1} parent=79 // pred_check_branch
          %521 = sbr.rel (%p519) target = $region96
        $region95: #{cycle_generator_forward.1} parent=79 // pred_region
          %522 = dma.done [#allocation8], 512
        $region96: #{cycle_generator_forward.1} parent=79 // pred_fallthru
          _
        // Predicated region
        $region97: #{cycle_generator_forward.1} parent=79 // pred_check
          %p523 = pneg %p261
        $region98: #{cycle_generator_forward.1} parent=79 // pred_check_branch
          %525 = sbr.rel (%p523) target = $region100
        $region99: #{cycle_generator_forward.1} parent=79 // pred_region
          %526 = dma.done [#allocation8], 2048
        $region100: #{cycle_generator_forward.1} parent=79 // pred_fallthru
          _
        // Predicated region
        $region101: #{cycle_generator_forward.1} parent=79 // pred_check
          %p527 = pneg %p324
        $region102: #{cycle_generator_forward.1} parent=79 // pred_check_branch
          %529 = sbr.rel (%p527) target = $region104
        $region103: #{cycle_generator_forward.1} parent=79 // pred_region
          %530 = dma.done [#allocation11], 1024
        $region104: #{cycle_generator_forward.1} parent=79 // pred_fallthru
          _
        %p531 = scmp.lt.s32.totalorder %s30, 1
        %s532 = scalar_select %p531, %s30, 1
        %s533 = smul.addr %s532, 8
        %s534 = smul.addr %s533, 8
        %s535 = scalar_lea.vmem %s0, %s534
        %p536 = pneg %p51
        %p537 = pneg %p48
        %p538 = pneg %p72
        %p539 = pneg %p69
        %p540 = pneg %p93
        %p541 = pneg %p90
        %p542 = pneg %p114
        %p543 = pneg %p111
        %p544 = pneg %p135
        %p545 = pneg %p132
        %p546 = pneg %p156
        %p547 = pneg %p153
        %p548 = pneg %p177
        %p549 = pneg %p174
        %p550 = pneg %p198
        %p551 = pneg %p195
        %p552 = pneg %p219
        %p553 = pneg %p216
        %p554 = pneg %p240
        %p555 = pneg %p237
        %p556 = pneg %p261
        %p557 = pneg %p258
        %p558 = pneg %p282
        %p559 = pneg %p279
        %p560 = pneg %p303
        %p561 = pneg %p300
        %p562 = pneg %p324
        %p563 = pneg %p321
        %p564 = pneg %p345
        %p565 = pneg %p342
        %p566 = pneg %p371
        %p567 = pneg %p368
        %p568 = scmp.lt.s32.totalorder %s30, 1
        %s569 = scalar_select %p568, %s30, 1
        %s570 = smul.addr %s569, 8
        %s571 = smul.addr %s570, 4
        %s572 = scalar_lea.vmem %s15, %s571
        %p573 = scmp.lt.s32.totalorder %s30, 1
        %s574 = scalar_select %p573, %s30, 1
        %s575 = smul.addr %s574, 8
        %s576 = smul.addr %s575, 8
        %s577 = scalar_lea.vmem %s0, %s576
        %p578 = scmp.lt.s32.totalorder %s30, 1
        %s579 = scalar_select %p578, %s30, 1
        %s580 = smul.addr %s579, 8
        %s581 = smul.addr %s580, 4
        %s582 = scalar_lea.vmem %s15, %s581
        %v584 = vld [vmem:[%s577] sm:$0xff]
        %v585 = vld [vmem:[%s577 + $0x8] sm:$0xff]
        %v586 = vld [vmem:[%s577 + $0x10] sm:$0xff]
        %v587 = vld [vmem:[%s577 + $0x18] sm:$0xff]
        %v588 = vld [vmem:[%s577 + $0x20] sm:$0xff]
        %v589 = vld [vmem:[%s577 + $0x28] sm:$0xff]
        %v590 = vld [vmem:[%s577 + $0x30] sm:$0xff]
        %v591 = vld [vmem:[%s577 + $0x38] sm:$0xff]
        %v592 = vld [vmem:[%s1] sm:$0xf]
        %v593 = vld [vmem:[#allocation2] sm:$0xff]
        %v594 = vld [vmem:[#allocation2 + $0x8] sm:$0xff]
        %v595 = vld [vmem:[#allocation2 + $0x10] sm:$0xff]
        %v596 = vld [vmem:[#allocation2 + $0x18] sm:$0xff]
        %v597 = vld [vmem:[#allocation2 + $0x20] sm:$0xff]
        %v598 = vld [vmem:[#allocation2 + $0x28] sm:$0xff]
        %v599 = vld [vmem:[#allocation2 + $0x30] sm:$0xff]
        %v600 = vld [vmem:[#allocation2 + $0x38] sm:$0xff]
        %v601 = vld [vmem:[#allocation2 + $0x40] sm:$0xff]
        %v602 = vld [vmem:[#allocation2 + $0x48] sm:$0xff]
        %v603 = vld [vmem:[#allocation2 + $0x50] sm:$0xff]
        %v604 = vld [vmem:[#allocation2 + $0x58] sm:$0xff]
        %v605 = vld [vmem:[#allocation2 + $0x60] sm:$0xff]
        %v606 = vld [vmem:[#allocation2 + $0x68] sm:$0xff]
        %v607 = vld [vmem:[#allocation2 + $0x70] sm:$0xff]
        %v608 = vld [vmem:[#allocation2 + $0x78] sm:$0xff]
        %609 = vrot.lane.b32.xlu0 %v584, 33
        %v610 = vpop.permute.xlu0 %609
        %611 = vrot.lane.b32.xlu0 %v585, 33
        %v612 = vpop.permute.xlu0 %611
        %613 = vrot.lane.b32.xlu0 %v586, 33
        %v614 = vpop.permute.xlu0 %613
        %615 = vrot.lane.b32.xlu0 %v587, 33
        %v616 = vpop.permute.xlu0 %615
        %617 = vrot.lane.b32.xlu0 %v588, 33
        %v618 = vpop.permute.xlu0 %617
        %619 = vrot.lane.b32.xlu0 %v589, 33
        %v620 = vpop.permute.xlu0 %619
        %621 = vrot.lane.b32.xlu0 %v590, 33
        %v622 = vpop.permute.xlu0 %621
        %623 = vrot.lane.b32.xlu0 %v591, 33
        %v624 = vpop.permute.xlu0 %623
        %v625 = vlaneseq
        %v626 = vand.u32 %v625, 127
        %vm627 = vcmp.lt.s32.totalorder %v626, 33
        %v628 = vsel %vm627, %v622, %v624
        %v629 = vsel %vm627, %v620, %v622
        %v630 = vsel %vm627, %v618, %v620
        %v631 = vsel %vm627, %v616, %v618
        %v632 = vsel %vm627, %v614, %v616
        %v633 = vsel %vm627, %v612, %v614
        %v634 = vsel %vm627, %v610, %v612
        %v635 = vsel %vm627, %v624, %v610
        %v636 = vlaneseq
        %v637 = vshrl.u32 %v636, 7
        %v638 = vsub.s32 0, %v637
        %v639 = vrot.slane %v593, %v638
        %v640 = vlaneseq
        %v641 = vshrl.u32 %v640, 7
        %v642 = vsub.s32 0, %v641
        %v643 = vrot.slane %v594, %v642
        %v644 = vlaneseq
        %v645 = vshrl.u32 %v644, 7
        %v646 = vsub.s32 0, %v645
        %v647 = vrot.slane %v595, %v646
        %v648 = vlaneseq
        %v649 = vshrl.u32 %v648, 7
        %v650 = vsub.s32 0, %v649
        %v651 = vrot.slane %v596, %v650
        %v652 = vlaneseq
        %v653 = vshrl.u32 %v652, 7
        %v654 = vsub.s32 0, %v653
        %v655 = vrot.slane %v597, %v654
        %v656 = vlaneseq
        %v657 = vshrl.u32 %v656, 7
        %v658 = vsub.s32 0, %v657
        %v659 = vrot.slane %v598, %v658
        %v660 = vlaneseq
        %v661 = vshrl.u32 %v660, 7
        %v662 = vsub.s32 0, %v661
        %v663 = vrot.slane %v599, %v662
        %v664 = vlaneseq
        %v665 = vshrl.u32 %v664, 7
        %v666 = vsub.s32 0, %v665
        %v667 = vrot.slane %v600, %v666
        %v668 = vmul.f32 %v635, %v639
        %v669 = vmul.f32 %v634, %v643
        %v670 = vmul.f32 %v633, %v647
        %v671 = vmul.f32 %v632, %v651
        %v672 = vmul.f32 %v631, %v655
        %v673 = vmul.f32 %v630, %v659
        %v674 = vmul.f32 %v629, %v663
        %v675 = vmul.f32 %v628, %v667
        %676 = vrot.lane.b32.xlu0 %v584, 32
        %v677 = vpop.permute.xlu0 %676
        %678 = vrot.lane.b32.xlu0 %v585, 32
        %v679 = vpop.permute.xlu0 %678
        %680 = vrot.lane.b32.xlu0 %v586, 32
        %v681 = vpop.permute.xlu0 %680
        %682 = vrot.lane.b32.xlu0 %v587, 32
        %v683 = vpop.permute.xlu0 %682
        %684 = vrot.lane.b32.xlu0 %v588, 32
        %v685 = vpop.permute.xlu0 %684
        %686 = vrot.lane.b32.xlu0 %v589, 32
        %v687 = vpop.permute.xlu0 %686
        %688 = vrot.lane.b32.xlu0 %v590, 32
        %v689 = vpop.permute.xlu0 %688
        %690 = vrot.lane.b32.xlu0 %v591, 32
        %v691 = vpop.permute.xlu0 %690
        %vm692 = vcmp.lt.s32.totalorder %v626, 32
        %v693 = vsel %vm692, %v689, %v691
        %v694 = vsel %vm692, %v687, %v689
        %v695 = vsel %vm692, %v685, %v687
        %v696 = vsel %vm692, %v683, %v685
        %v697 = vsel %vm692, %v681, %v683
        %v698 = vsel %vm692, %v679, %v681
        %v699 = vsel %vm692, %v677, %v679
        %v700 = vsel %vm692, %v691, %v677
        %v701 = vlaneseq
        %v702 = vshrl.u32 %v701, 7
        %v703 = vsub.s32 1, %v702
        %v704 = vrot.slane %v593, %v703
        %v705 = vlaneseq
        %v706 = vshrl.u32 %v705, 7
        %v707 = vsub.s32 1, %v706
        %v708 = vrot.slane %v594, %v707
        %v709 = vlaneseq
        %v710 = vshrl.u32 %v709, 7
        %v711 = vsub.s32 1, %v710
        %v712 = vrot.slane %v595, %v711
        %v713 = vlaneseq
        %v714 = vshrl.u32 %v713, 7
        %v715 = vsub.s32 1, %v714
        %v716 = vrot.slane %v596, %v715
        %v717 = vlaneseq
        %v718 = vshrl.u32 %v717, 7
        %v719 = vsub.s32 1, %v718
        %v720 = vrot.slane %v597, %v719
        %v721 = vlaneseq
        %v722 = vshrl.u32 %v721, 7
        %v723 = vsub.s32 1, %v722
        %v724 = vrot.slane %v598, %v723
        %v725 = vlaneseq
        %v726 = vshrl.u32 %v725, 7
        %v727 = vsub.s32 1, %v726
        %v728 = vrot.slane %v599, %v727
        %v729 = vlaneseq
        %v730 = vshrl.u32 %v729, 7
        %v731 = vsub.s32 1, %v730
        %v732 = vrot.slane %v600, %v731
        %v733 = vmul.f32 %v700, %v704
        %v734 = vmul.f32 %v699, %v708
        %v735 = vmul.f32 %v698, %v712
        %v736 = vmul.f32 %v697, %v716
        %v737 = vmul.f32 %v696, %v720
        %v738 = vmul.f32 %v695, %v724
        %v739 = vmul.f32 %v694, %v728
        %v740 = vmul.f32 %v693, %v732
        %741 = vrot.lane.b32.xlu0 %v584, 31
        %v742 = vpop.permute.xlu0 %741
        %743 = vrot.lane.b32.xlu0 %v585, 31
        %v744 = vpop.permute.xlu0 %743
        %745 = vrot.lane.b32.xlu0 %v586, 31
        %v746 = vpop.permute.xlu0 %745
        %747 = vrot.lane.b32.xlu0 %v587, 31
        %v748 = vpop.permute.xlu0 %747
        %749 = vrot.lane.b32.xlu0 %v588, 31
        %v750 = vpop.permute.xlu0 %749
        %751 = vrot.lane.b32.xlu0 %v589, 31
        %v752 = vpop.permute.xlu0 %751
        %753 = vrot.lane.b32.xlu0 %v590, 31
        %v754 = vpop.permute.xlu0 %753
        %755 = vrot.lane.b32.xlu0 %v591, 31
        %v756 = vpop.permute.xlu0 %755
        %vm757 = vcmp.lt.s32.totalorder %v626, 31
        %v758 = vsel %vm757, %v754, %v756
        %v759 = vsel %vm757, %v752, %v754
        %v760 = vsel %vm757, %v750, %v752
        %v761 = vsel %vm757, %v748, %v750
        %v762 = vsel %vm757, %v746, %v748
        %v763 = vsel %vm757, %v744, %v746
        %v764 = vsel %vm757, %v742, %v744
        %v765 = vsel %vm757, %v756, %v742
        %v766 = vlaneseq
        %v767 = vshrl.u32 %v766, 7
        %v768 = vsub.s32 2, %v767
        %v769 = vrot.slane %v593, %v768
        %v770 = vlaneseq
        %v771 = vshrl.u32 %v770, 7
        %v772 = vsub.s32 2, %v771
        %v773 = vrot.slane %v594, %v772
        %v774 = vlaneseq
        %v775 = vshrl.u32 %v774, 7
        %v776 = vsub.s32 2, %v775
        %v777 = vrot.slane %v595, %v776
        %v778 = vlaneseq
        %v779 = vshrl.u32 %v778, 7
        %v780 = vsub.s32 2, %v779
        %v781 = vrot.slane %v596, %v780
        %v782 = vlaneseq
        %v783 = vshrl.u32 %v782, 7
        %v784 = vsub.s32 2, %v783
        %v785 = vrot.slane %v597, %v784
        %v786 = vlaneseq
        %v787 = vshrl.u32 %v786, 7
        %v788 = vsub.s32 2, %v787
        %v789 = vrot.slane %v598, %v788
        %v790 = vlaneseq
        %v791 = vshrl.u32 %v790, 7
        %v792 = vsub.s32 2, %v791
        %v793 = vrot.slane %v599, %v792
        %v794 = vlaneseq
        %v795 = vshrl.u32 %v794, 7
        %v796 = vsub.s32 2, %v795
        %v797 = vrot.slane %v600, %v796
        %v798 = vmul.f32 %v765, %v769
        %v799 = vmul.f32 %v764, %v773
        %v800 = vmul.f32 %v763, %v777
        %v801 = vmul.f32 %v762, %v781
        %v802 = vmul.f32 %v761, %v785
        %v803 = vmul.f32 %v760, %v789
        %v804 = vmul.f32 %v759, %v793
        %v805 = vmul.f32 %v758, %v797
        %806 = vrot.lane.b32.xlu0 %v584, 30
        %v807 = vpop.permute.xlu0 %806
        %808 = vrot.lane.b32.xlu0 %v585, 30
        %v809 = vpop.permute.xlu0 %808
        %810 = vrot.lane.b32.xlu0 %v586, 30
        %v811 = vpop.permute.xlu0 %810
        %812 = vrot.lane.b32.xlu0 %v587, 30
        %v813 = vpop.permute.xlu0 %812
        %814 = vrot.lane.b32.xlu0 %v588, 30
        %v815 = vpop.permute.xlu0 %814
        %816 = vrot.lane.b32.xlu0 %v589, 30
        %v817 = vpop.permute.xlu0 %816
        %818 = vrot.lane.b32.xlu0 %v590, 30
        %v819 = vpop.permute.xlu0 %818
        %820 = vrot.lane.b32.xlu0 %v591, 30
        %v821 = vpop.permute.xlu0 %820
        %vm822 = vcmp.lt.s32.totalorder %v626, 30
        %v823 = vsel %vm822, %v819, %v821
        %v824 = vsel %vm822, %v817, %v819
        %v825 = vsel %vm822, %v815, %v817
        %v826 = vsel %vm822, %v813, %v815
        %v827 = vsel %vm822, %v811, %v813
        %v828 = vsel %vm822, %v809, %v811
        %v829 = vsel %vm822, %v807, %v809
        %v830 = vsel %vm822, %v821, %v807
        %v831 = vlaneseq
        %v832 = vshrl.u32 %v831, 7
        %v833 = vsub.s32 3, %v832
        %v834 = vrot.slane %v593, %v833
        %v835 = vlaneseq
        %v836 = vshrl.u32 %v835, 7
        %v837 = vsub.s32 3, %v836
        %v838 = vrot.slane %v594, %v837
        %v839 = vlaneseq
        %v840 = vshrl.u32 %v839, 7
        %v841 = vsub.s32 3, %v840
        %v842 = vrot.slane %v595, %v841
        %v843 = vlaneseq
        %v844 = vshrl.u32 %v843, 7
        %v845 = vsub.s32 3, %v844
        %v846 = vrot.slane %v596, %v845
        %v847 = vlaneseq
        %v848 = vshrl.u32 %v847, 7
        %v849 = vsub.s32 3, %v848
        %v850 = vrot.slane %v597, %v849
        %v851 = vlaneseq
        %v852 = vshrl.u32 %v851, 7
        %v853 = vsub.s32 3, %v852
        %v854 = vrot.slane %v598, %v853
        %v855 = vlaneseq
        %v856 = vshrl.u32 %v855, 7
        %v857 = vsub.s32 3, %v856
        %v858 = vrot.slane %v599, %v857
        %v859 = vlaneseq
        %v860 = vshrl.u32 %v859, 7
        %v861 = vsub.s32 3, %v860
        %v862 = vrot.slane %v600, %v861
        %v863 = vmul.f32 %v830, %v834
        %v864 = vmul.f32 %v829, %v838
        %v865 = vmul.f32 %v828, %v842
        %v866 = vmul.f32 %v827, %v846
        %v867 = vmul.f32 %v826, %v850
        %v868 = vmul.f32 %v825, %v854
        %v869 = vmul.f32 %v824, %v858
        %v870 = vmul.f32 %v823, %v862
        %871 = vrot.lane.b32.xlu0 %v584, 1
        %v872 = vpop.permute.xlu0 %871
        %873 = vrot.lane.b32.xlu0 %v585, 1
        %v874 = vpop.permute.xlu0 %873
        %875 = vrot.lane.b32.xlu0 %v586, 1
        %v876 = vpop.permute.xlu0 %875
        %877 = vrot.lane.b32.xlu0 %v587, 1
        %v878 = vpop.permute.xlu0 %877
        %879 = vrot.lane.b32.xlu0 %v588, 1
        %v880 = vpop.permute.xlu0 %879
        %881 = vrot.lane.b32.xlu0 %v589, 1
        %v882 = vpop.permute.xlu0 %881
        %883 = vrot.lane.b32.xlu0 %v590, 1
        %v884 = vpop.permute.xlu0 %883
        %885 = vrot.lane.b32.xlu0 %v591, 1
        %v886 = vpop.permute.xlu0 %885
        %vm887 = vcmp.lt.s32.totalorder %v626, 1
        %v888 = vsel %vm887, %v884, %v886
        %v889 = vsel %vm887, %v882, %v884
        %v890 = vsel %vm887, %v880, %v882
        %v891 = vsel %vm887, %v878, %v880
        %v892 = vsel %vm887, %v876, %v878
        %v893 = vsel %vm887, %v874, %v876
        %v894 = vsel %vm887, %v872, %v874
        %v895 = vsel %vm887, %v886, %v872
        %v896 = vlaneseq
        %v897 = vshrl.u32 %v896, 7
        %v898 = vsub.s32 4, %v897
        %v899 = vrot.slane %v593, %v898
        %v900 = vlaneseq
        %v901 = vshrl.u32 %v900, 7
        %v902 = vsub.s32 4, %v901
        %v903 = vrot.slane %v594, %v902
        %v904 = vlaneseq
        %v905 = vshrl.u32 %v904, 7
        %v906 = vsub.s32 4, %v905
        %v907 = vrot.slane %v595, %v906
        %v908 = vlaneseq
        %v909 = vshrl.u32 %v908, 7
        %v910 = vsub.s32 4, %v909
        %v911 = vrot.slane %v596, %v910
        %v912 = vlaneseq
        %v913 = vshrl.u32 %v912, 7
        %v914 = vsub.s32 4, %v913
        %v915 = vrot.slane %v597, %v914
        %v916 = vlaneseq
        %v917 = vshrl.u32 %v916, 7
        %v918 = vsub.s32 4, %v917
        %v919 = vrot.slane %v598, %v918
        %v920 = vlaneseq
        %v921 = vshrl.u32 %v920, 7
        %v922 = vsub.s32 4, %v921
        %v923 = vrot.slane %v599, %v922
        %v924 = vlaneseq
        %v925 = vshrl.u32 %v924, 7
        %v926 = vsub.s32 4, %v925
        %v927 = vrot.slane %v600, %v926
        %v928 = vmul.f32 %v895, %v899
        %v929 = vmul.f32 %v894, %v903
        %v930 = vmul.f32 %v893, %v907
        %v931 = vmul.f32 %v892, %v911
        %v932 = vmul.f32 %v891, %v915
        %v933 = vmul.f32 %v890, %v919
        %v934 = vmul.f32 %v889, %v923
        %v935 = vmul.f32 %v888, %v927
        %936 = vrot.lane.b32.xlu0 %v584, 127
        %v937 = vpop.permute.xlu0 %936
        %938 = vrot.lane.b32.xlu0 %v585, 127
        %v939 = vpop.permute.xlu0 %938
        %940 = vrot.lane.b32.xlu0 %v586, 127
        %v941 = vpop.permute.xlu0 %940
        %942 = vrot.lane.b32.xlu0 %v587, 127
        %v943 = vpop.permute.xlu0 %942
        %944 = vrot.lane.b32.xlu0 %v588, 127
        %v945 = vpop.permute.xlu0 %944
        %946 = vrot.lane.b32.xlu0 %v589, 127
        %v947 = vpop.permute.xlu0 %946
        %948 = vrot.lane.b32.xlu0 %v590, 127
        %v949 = vpop.permute.xlu0 %948
        %950 = vrot.lane.b32.xlu0 %v591, 127
        %v951 = vpop.permute.xlu0 %950
        %vm952 = vcmp.lt.s32.totalorder %v626, 127
        %v953 = vsel %vm952, %v949, %v951
        %v954 = vsel %vm952, %v947, %v949
        %v955 = vsel %vm952, %v945, %v947
        %v956 = vsel %vm952, %v943, %v945
        %v957 = vsel %vm952, %v941, %v943
        %v958 = vsel %vm952, %v939, %v941
        %v959 = vsel %vm952, %v937, %v939
        %v960 = vsel %vm952, %v951, %v937
        %v961 = vlaneseq
        %v962 = vshrl.u32 %v961, 7
        %v963 = vsub.s32 6, %v962
        %v964 = vrot.slane %v593, %v963
        %v965 = vlaneseq
        %v966 = vshrl.u32 %v965, 7
        %v967 = vsub.s32 6, %v966
        %v968 = vrot.slane %v594, %v967
        %v969 = vlaneseq
        %v970 = vshrl.u32 %v969, 7
        %v971 = vsub.s32 6, %v970
        %v972 = vrot.slane %v595, %v971
        %v973 = vlaneseq
        %v974 = vshrl.u32 %v973, 7
        %v975 = vsub.s32 6, %v974
        %v976 = vrot.slane %v596, %v975
        %v977 = vlaneseq
        %v978 = vshrl.u32 %v977, 7
        %v979 = vsub.s32 6, %v978
        %v980 = vrot.slane %v597, %v979
        %v981 = vlaneseq
        %v982 = vshrl.u32 %v981, 7
        %v983 = vsub.s32 6, %v982
        %v984 = vrot.slane %v598, %v983
        %v985 = vlaneseq
        %v986 = vshrl.u32 %v985, 7
        %v987 = vsub.s32 6, %v986
        %v988 = vrot.slane %v599, %v987
        %v989 = vlaneseq
        %v990 = vshrl.u32 %v989, 7
        %v991 = vsub.s32 6, %v990
        %v992 = vrot.slane %v600, %v991
        %v993 = vmul.f32 %v959, %v964
        %v994 = vmul.f32 %v958, %v968
        %v995 = vmul.f32 %v957, %v972
        %v996 = vmul.f32 %v956, %v976
        %v997 = vmul.f32 %v955, %v980
        %v998 = vmul.f32 %v954, %v984
        %v999 = vmul.f32 %v953, %v988
        %v1000 = vmul.f32 %v960, %v992
        %1001 = vrot.lane.b32.xlu0 %v584, 126
        %v1002 = vpop.permute.xlu0 %1001
        %1003 = vrot.lane.b32.xlu0 %v585, 126
        %v1004 = vpop.permute.xlu0 %1003
        %1005 = vrot.lane.b32.xlu0 %v586, 126
        %v1006 = vpop.permute.xlu0 %1005
        %1007 = vrot.lane.b32.xlu0 %v587, 126
        %v1008 = vpop.permute.xlu0 %1007
        %1009 = vrot.lane.b32.xlu0 %v588, 126
        %v1010 = vpop.permute.xlu0 %1009
        %1011 = vrot.lane.b32.xlu0 %v589, 126
        %v1012 = vpop.permute.xlu0 %1011
        %1013 = vrot.lane.b32.xlu0 %v590, 126
        %v1014 = vpop.permute.xlu0 %1013
        %1015 = vrot.lane.b32.xlu0 %v591, 126
        %v1016 = vpop.permute.xlu0 %1015
        %vm1017 = vcmp.lt.s32.totalorder %v626, 126
        %v1018 = vsel %vm1017, %v1014, %v1016
        %v1019 = vsel %vm1017, %v1012, %v1014
        %v1020 = vsel %vm1017, %v1010, %v1012
        %v1021 = vsel %vm1017, %v1008, %v1010
        %v1022 = vsel %vm1017, %v1006, %v1008
        %v1023 = vsel %vm1017, %v1004, %v1006
        %v1024 = vsel %vm1017, %v1002, %v1004
        %v1025 = vsel %vm1017, %v1016, %v1002
        %v1026 = vlaneseq
        %v1027 = vshrl.u32 %v1026, 7
        %v1028 = vsub.s32 7, %v1027
        %v1029 = vrot.slane %v593, %v1028
        %v1030 = vlaneseq
        %v1031 = vshrl.u32 %v1030, 7
        %v1032 = vsub.s32 7, %v1031
        %v1033 = vrot.slane %v594, %v1032
        %v1034 = vlaneseq
        %v1035 = vshrl.u32 %v1034, 7
        %v1036 = vsub.s32 7, %v1035
        %v1037 = vrot.slane %v595, %v1036
        %v1038 = vlaneseq
        %v1039 = vshrl.u32 %v1038, 7
        %v1040 = vsub.s32 7, %v1039
        %v1041 = vrot.slane %v596, %v1040
        %v1042 = vlaneseq
        %v1043 = vshrl.u32 %v1042, 7
        %v1044 = vsub.s32 7, %v1043
        %v1045 = vrot.slane %v597, %v1044
        %v1046 = vlaneseq
        %v1047 = vshrl.u32 %v1046, 7
        %v1048 = vsub.s32 7, %v1047
        %v1049 = vrot.slane %v598, %v1048
        %v1050 = vlaneseq
        %v1051 = vshrl.u32 %v1050, 7
        %v1052 = vsub.s32 7, %v1051
        %v1053 = vrot.slane %v599, %v1052
        %v1054 = vlaneseq
        %v1055 = vshrl.u32 %v1054, 7
        %v1056 = vsub.s32 7, %v1055
        %v1057 = vrot.slane %v600, %v1056
        %v1058 = vmul.f32 %v1024, %v1029
        %v1059 = vmul.f32 %v1023, %v1033
        %v1060 = vmul.f32 %v1022, %v1037
        %v1061 = vmul.f32 %v1021, %v1041
        %v1062 = vmul.f32 %v1020, %v1045
        %v1063 = vmul.f32 %v1019, %v1049
        %v1064 = vmul.f32 %v1018, %v1053
        %v1065 = vmul.f32 %v1025, %v1057
        %1066 = vrot.lane.b32.xlu0 %v584, 97
        %v1067 = vpop.permute.xlu0 %1066
        %1068 = vrot.lane.b32.xlu0 %v585, 97
        %v1069 = vpop.permute.xlu0 %1068
        %1070 = vrot.lane.b32.xlu0 %v586, 97
        %v1071 = vpop.permute.xlu0 %1070
        %1072 = vrot.lane.b32.xlu0 %v587, 97
        %v1073 = vpop.permute.xlu0 %1072
        %1074 = vrot.lane.b32.xlu0 %v588, 97
        %v1075 = vpop.permute.xlu0 %1074
        %1076 = vrot.lane.b32.xlu0 %v589, 97
        %v1077 = vpop.permute.xlu0 %1076
        %1078 = vrot.lane.b32.xlu0 %v590, 97
        %v1079 = vpop.permute.xlu0 %1078
        %1080 = vrot.lane.b32.xlu0 %v591, 97
        %v1081 = vpop.permute.xlu0 %1080
        %vm1082 = vcmp.lt.s32.totalorder %v626, 97
        %v1083 = vsel %vm1082, %v1079, %v1081
        %v1084 = vsel %vm1082, %v1077, %v1079
        %v1085 = vsel %vm1082, %v1075, %v1077
        %v1086 = vsel %vm1082, %v1073, %v1075
        %v1087 = vsel %vm1082, %v1071, %v1073
        %v1088 = vsel %vm1082, %v1069, %v1071
        %v1089 = vsel %vm1082, %v1067, %v1069
        %v1090 = vsel %vm1082, %v1081, %v1067
        %v1091 = vlaneseq
        %v1092 = vshrl.u32 %v1091, 7
        %v1093 = vsub.s32 0, %v1092
        %v1094 = vrot.slane %v601, %v1093
        %v1095 = vlaneseq
        %v1096 = vshrl.u32 %v1095, 7
        %v1097 = vsub.s32 0, %v1096
        %v1098 = vrot.slane %v602, %v1097
        %v1099 = vlaneseq
        %v1100 = vshrl.u32 %v1099, 7
        %v1101 = vsub.s32 0, %v1100
        %v1102 = vrot.slane %v603, %v1101
        %v1103 = vlaneseq
        %v1104 = vshrl.u32 %v1103, 7
        %v1105 = vsub.s32 0, %v1104
        %v1106 = vrot.slane %v604, %v1105
        %v1107 = vlaneseq
        %v1108 = vshrl.u32 %v1107, 7
        %v1109 = vsub.s32 0, %v1108
        %v1110 = vrot.slane %v605, %v1109
        %v1111 = vlaneseq
        %v1112 = vshrl.u32 %v1111, 7
        %v1113 = vsub.s32 0, %v1112
        %v1114 = vrot.slane %v606, %v1113
        %v1115 = vlaneseq
        %v1116 = vshrl.u32 %v1115, 7
        %v1117 = vsub.s32 0, %v1116
        %v1118 = vrot.slane %v607, %v1117
        %v1119 = vlaneseq
        %v1120 = vshrl.u32 %v1119, 7
        %v1121 = vsub.s32 0, %v1120
        %v1122 = vrot.slane %v608, %v1121
        %v1123 = vmul.f32 %v1089, %v1094
        %v1124 = vmul.f32 %v1088, %v1098
        %v1125 = vmul.f32 %v1087, %v1102
        %v1126 = vmul.f32 %v1086, %v1106
        %v1127 = vmul.f32 %v1085, %v1110
        %v1128 = vmul.f32 %v1084, %v1114
        %v1129 = vmul.f32 %v1083, %v1118
        %v1130 = vmul.f32 %v1090, %v1122
        %1131 = vrot.lane.b32.xlu0 %v584, 96
        %v1132 = vpop.permute.xlu0 %1131
        %1133 = vrot.lane.b32.xlu0 %v585, 96
        %v1134 = vpop.permute.xlu0 %1133
        %1135 = vrot.lane.b32.xlu0 %v586, 96
        %v1136 = vpop.permute.xlu0 %1135
        %1137 = vrot.lane.b32.xlu0 %v587, 96
        %v1138 = vpop.permute.xlu0 %1137
        %1139 = vrot.lane.b32.xlu0 %v588, 96
        %v1140 = vpop.permute.xlu0 %1139
        %1141 = vrot.lane.b32.xlu0 %v589, 96
        %v1142 = vpop.permute.xlu0 %1141
        %1143 = vrot.lane.b32.xlu0 %v590, 96
        %v1144 = vpop.permute.xlu0 %1143
        %1145 = vrot.lane.b32.xlu0 %v591, 96
        %v1146 = vpop.permute.xlu0 %1145
        %vm1147 = vcmp.lt.s32.totalorder %v626, 96
        %v1148 = vsel %vm1147, %v1144, %v1146
        %v1149 = vsel %vm1147, %v1142, %v1144
        %v1150 = vsel %vm1147, %v1140, %v1142
        %v1151 = vsel %vm1147, %v1138, %v1140
        %v1152 = vsel %vm1147, %v1136, %v1138
        %v1153 = vsel %vm1147, %v1134, %v1136
        %v1154 = vsel %vm1147, %v1132, %v1134
        %v1155 = vsel %vm1147, %v1146, %v1132
        %v1156 = vlaneseq
        %v1157 = vshrl.u32 %v1156, 7
        %v1158 = vsub.s32 1, %v1157
        %v1159 = vrot.slane %v601, %v1158
        %v1160 = vlaneseq
        %v1161 = vshrl.u32 %v1160, 7
        %v1162 = vsub.s32 1, %v1161
        %v1163 = vrot.slane %v602, %v1162
        %v1164 = vlaneseq
        %v1165 = vshrl.u32 %v1164, 7
        %v1166 = vsub.s32 1, %v1165
        %v1167 = vrot.slane %v603, %v1166
        %v1168 = vlaneseq
        %v1169 = vshrl.u32 %v1168, 7
        %v1170 = vsub.s32 1, %v1169
        %v1171 = vrot.slane %v604, %v1170
        %v1172 = vlaneseq
        %v1173 = vshrl.u32 %v1172, 7
        %v1174 = vsub.s32 1, %v1173
        %v1175 = vrot.slane %v605, %v1174
        %v1176 = vlaneseq
        %v1177 = vshrl.u32 %v1176, 7
        %v1178 = vsub.s32 1, %v1177
        %v1179 = vrot.slane %v606, %v1178
        %v1180 = vlaneseq
        %v1181 = vshrl.u32 %v1180, 7
        %v1182 = vsub.s32 1, %v1181
        %v1183 = vrot.slane %v607, %v1182
        %v1184 = vlaneseq
        %v1185 = vshrl.u32 %v1184, 7
        %v1186 = vsub.s32 1, %v1185
        %v1187 = vrot.slane %v608, %v1186
        %v1188 = vmul.f32 %v1154, %v1159
        %v1189 = vmul.f32 %v1153, %v1163
        %v1190 = vmul.f32 %v1152, %v1167
        %v1191 = vmul.f32 %v1151, %v1171
        %v1192 = vmul.f32 %v1150, %v1175
        %v1193 = vmul.f32 %v1149, %v1179
        %v1194 = vmul.f32 %v1148, %v1183
        %v1195 = vmul.f32 %v1155, %v1187
        %1196 = vrot.lane.b32.xlu0 %v584, 95
        %v1197 = vpop.permute.xlu0 %1196
        %1198 = vrot.lane.b32.xlu0 %v585, 95
        %v1199 = vpop.permute.xlu0 %1198
        %1200 = vrot.lane.b32.xlu0 %v586, 95
        %v1201 = vpop.permute.xlu0 %1200
        %1202 = vrot.lane.b32.xlu0 %v587, 95
        %v1203 = vpop.permute.xlu0 %1202
        %1204 = vrot.lane.b32.xlu0 %v588, 95
        %v1205 = vpop.permute.xlu0 %1204
        %1206 = vrot.lane.b32.xlu0 %v589, 95
        %v1207 = vpop.permute.xlu0 %1206
        %1208 = vrot.lane.b32.xlu0 %v590, 95
        %v1209 = vpop.permute.xlu0 %1208
        %1210 = vrot.lane.b32.xlu0 %v591, 95
        %v1211 = vpop.permute.xlu0 %1210
        %vm1212 = vcmp.lt.s32.totalorder %v626, 95
        %v1213 = vsel %vm1212, %v1209, %v1211
        %v1214 = vsel %vm1212, %v1207, %v1209
        %v1215 = vsel %vm1212, %v1205, %v1207
        %v1216 = vsel %vm1212, %v1203, %v1205
        %v1217 = vsel %vm1212, %v1201, %v1203
        %v1218 = vsel %vm1212, %v1199, %v1201
        %v1219 = vsel %vm1212, %v1197, %v1199
        %v1220 = vsel %vm1212, %v1211, %v1197
        %v1221 = vlaneseq
        %v1222 = vshrl.u32 %v1221, 7
        %v1223 = vsub.s32 2, %v1222
        %v1224 = vrot.slane %v601, %v1223
        %v1225 = vlaneseq
        %v1226 = vshrl.u32 %v1225, 7
        %v1227 = vsub.s32 2, %v1226
        %v1228 = vrot.slane %v602, %v1227
        %v1229 = vlaneseq
        %v1230 = vshrl.u32 %v1229, 7
        %v1231 = vsub.s32 2, %v1230
        %v1232 = vrot.slane %v603, %v1231
        %v1233 = vlaneseq
        %v1234 = vshrl.u32 %v1233, 7
        %v1235 = vsub.s32 2, %v1234
        %v1236 = vrot.slane %v604, %v1235
        %v1237 = vlaneseq
        %v1238 = vshrl.u32 %v1237, 7
        %v1239 = vsub.s32 2, %v1238
        %v1240 = vrot.slane %v605, %v1239
        %v1241 = vlaneseq
        %v1242 = vshrl.u32 %v1241, 7
        %v1243 = vsub.s32 2, %v1242
        %v1244 = vrot.slane %v606, %v1243
        %v1245 = vlaneseq
        %v1246 = vshrl.u32 %v1245, 7
        %v1247 = vsub.s32 2, %v1246
        %v1248 = vrot.slane %v607, %v1247
        %v1249 = vlaneseq
        %v1250 = vshrl.u32 %v1249, 7
        %v1251 = vsub.s32 2, %v1250
        %v1252 = vrot.slane %v608, %v1251
        %v1253 = vmul.f32 %v1219, %v1224
        %v1254 = vmul.f32 %v1218, %v1228
        %v1255 = vmul.f32 %v1217, %v1232
        %v1256 = vmul.f32 %v1216, %v1236
        %v1257 = vmul.f32 %v1215, %v1240
        %v1258 = vmul.f32 %v1214, %v1244
        %v1259 = vmul.f32 %v1213, %v1248
        %v1260 = vmul.f32 %v1220, %v1252
        %1261 = vrot.lane.b32.xlu0 %v584, 94
        %v1262 = vpop.permute.xlu0 %1261
        %1263 = vrot.lane.b32.xlu0 %v585, 94
        %v1264 = vpop.permute.xlu0 %1263
        %1265 = vrot.lane.b32.xlu0 %v586, 94
        %v1266 = vpop.permute.xlu0 %1265
        %1267 = vrot.lane.b32.xlu0 %v587, 94
        %v1268 = vpop.permute.xlu0 %1267
        %1269 = vrot.lane.b32.xlu0 %v588, 94
        %v1270 = vpop.permute.xlu0 %1269
        %1271 = vrot.lane.b32.xlu0 %v589, 94
        %v1272 = vpop.permute.xlu0 %1271
        %1273 = vrot.lane.b32.xlu0 %v590, 94
        %v1274 = vpop.permute.xlu0 %1273
        %1275 = vrot.lane.b32.xlu0 %v591, 94
        %v1276 = vpop.permute.xlu0 %1275
        %vm1277 = vcmp.lt.s32.totalorder %v626, 94
        %v1278 = vsel %vm1277, %v1274, %v1276
        %v1279 = vsel %vm1277, %v1272, %v1274
        %v1280 = vsel %vm1277, %v1270, %v1272
        %v1281 = vsel %vm1277, %v1268, %v1270
        %v1282 = vsel %vm1277, %v1266, %v1268
        %v1283 = vsel %vm1277, %v1264, %v1266
        %v1284 = vsel %vm1277, %v1262, %v1264
        %v1285 = vsel %vm1277, %v1276, %v1262
        %v1286 = vlaneseq
        %v1287 = vshrl.u32 %v1286, 7
        %v1288 = vsub.s32 3, %v1287
        %v1289 = vrot.slane %v601, %v1288
        %v1290 = vlaneseq
        %v1291 = vshrl.u32 %v1290, 7
        %v1292 = vsub.s32 3, %v1291
        %v1293 = vrot.slane %v602, %v1292
        %v1294 = vlaneseq
        %v1295 = vshrl.u32 %v1294, 7
        %v1296 = vsub.s32 3, %v1295
        %v1297 = vrot.slane %v603, %v1296
        %v1298 = vlaneseq
        %v1299 = vshrl.u32 %v1298, 7
        %v1300 = vsub.s32 3, %v1299
        %v1301 = vrot.slane %v604, %v1300
        %v1302 = vlaneseq
        %v1303 = vshrl.u32 %v1302, 7
        %v1304 = vsub.s32 3, %v1303
        %v1305 = vrot.slane %v605, %v1304
        %v1306 = vlaneseq
        %v1307 = vshrl.u32 %v1306, 7
        %v1308 = vsub.s32 3, %v1307
        %v1309 = vrot.slane %v606, %v1308
        %v1310 = vlaneseq
        %v1311 = vshrl.u32 %v1310, 7
        %v1312 = vsub.s32 3, %v1311
        %v1313 = vrot.slane %v607, %v1312
        %v1314 = vlaneseq
        %v1315 = vshrl.u32 %v1314, 7
        %v1316 = vsub.s32 3, %v1315
        %v1317 = vrot.slane %v608, %v1316
        %v1318 = vmul.f32 %v1284, %v1289
        %v1319 = vmul.f32 %v1283, %v1293
        %v1320 = vmul.f32 %v1282, %v1297
        %v1321 = vmul.f32 %v1281, %v1301
        %v1322 = vmul.f32 %v1280, %v1305
        %v1323 = vmul.f32 %v1279, %v1309
        %v1324 = vmul.f32 %v1278, %v1313
        %v1325 = vmul.f32 %v1285, %v1317
        %1326 = vrot.lane.b32.xlu0 %v584, 65
        %v1327 = vpop.permute.xlu0 %1326
        %1328 = vrot.lane.b32.xlu0 %v585, 65
        %v1329 = vpop.permute.xlu0 %1328
        %1330 = vrot.lane.b32.xlu0 %v586, 65
        %v1331 = vpop.permute.xlu0 %1330
        %1332 = vrot.lane.b32.xlu0 %v587, 65
        %v1333 = vpop.permute.xlu0 %1332
        %1334 = vrot.lane.b32.xlu0 %v588, 65
        %v1335 = vpop.permute.xlu0 %1334
        %1336 = vrot.lane.b32.xlu0 %v589, 65
        %v1337 = vpop.permute.xlu0 %1336
        %1338 = vrot.lane.b32.xlu0 %v590, 65
        %v1339 = vpop.permute.xlu0 %1338
        %1340 = vrot.lane.b32.xlu0 %v591, 65
        %v1341 = vpop.permute.xlu0 %1340
        %vm1342 = vcmp.lt.s32.totalorder %v626, 65
        %v1343 = vsel %vm1342, %v1339, %v1341
        %v1344 = vsel %vm1342, %v1337, %v1339
        %v1345 = vsel %vm1342, %v1335, %v1337
        %v1346 = vsel %vm1342, %v1333, %v1335
        %v1347 = vsel %vm1342, %v1331, %v1333
        %v1348 = vsel %vm1342, %v1329, %v1331
        %v1349 = vsel %vm1342, %v1327, %v1329
        %v1350 = vsel %vm1342, %v1341, %v1327
        %v1351 = vlaneseq
        %v1352 = vshrl.u32 %v1351, 7
        %v1353 = vsub.s32 4, %v1352
        %v1354 = vrot.slane %v601, %v1353
        %v1355 = vlaneseq
        %v1356 = vshrl.u32 %v1355, 7
        %v1357 = vsub.s32 4, %v1356
        %v1358 = vrot.slane %v602, %v1357
        %v1359 = vlaneseq
        %v1360 = vshrl.u32 %v1359, 7
        %v1361 = vsub.s32 4, %v1360
        %v1362 = vrot.slane %v603, %v1361
        %v1363 = vlaneseq
        %v1364 = vshrl.u32 %v1363, 7
        %v1365 = vsub.s32 4, %v1364
        %v1366 = vrot.slane %v604, %v1365
        %v1367 = vlaneseq
        %v1368 = vshrl.u32 %v1367, 7
        %v1369 = vsub.s32 4, %v1368
        %v1370 = vrot.slane %v605, %v1369
        %v1371 = vlaneseq
        %v1372 = vshrl.u32 %v1371, 7
        %v1373 = vsub.s32 4, %v1372
        %v1374 = vrot.slane %v606, %v1373
        %v1375 = vlaneseq
        %v1376 = vshrl.u32 %v1375, 7
        %v1377 = vsub.s32 4, %v1376
        %v1378 = vrot.slane %v607, %v1377
        %v1379 = vlaneseq
        %v1380 = vshrl.u32 %v1379, 7
        %v1381 = vsub.s32 4, %v1380
        %v1382 = vrot.slane %v608, %v1381
        %v1383 = vmul.f32 %v1349, %v1354
        %v1384 = vmul.f32 %v1348, %v1358
        %v1385 = vmul.f32 %v1347, %v1362
        %v1386 = vmul.f32 %v1346, %v1366
        %v1387 = vmul.f32 %v1345, %v1370
        %v1388 = vmul.f32 %v1344, %v1374
        %v1389 = vmul.f32 %v1343, %v1378
        %v1390 = vmul.f32 %v1350, %v1382
        %1391 = vrot.lane.b32.xlu0 %v584, 64
        %v1392 = vpop.permute.xlu0 %1391
        %1393 = vrot.lane.b32.xlu0 %v585, 64
        %v1394 = vpop.permute.xlu0 %1393
        %1395 = vrot.lane.b32.xlu0 %v586, 64
        %v1396 = vpop.permute.xlu0 %1395
        %1397 = vrot.lane.b32.xlu0 %v587, 64
        %v1398 = vpop.permute.xlu0 %1397
        %1399 = vrot.lane.b32.xlu0 %v588, 64
        %v1400 = vpop.permute.xlu0 %1399
        %1401 = vrot.lane.b32.xlu0 %v589, 64
        %v1402 = vpop.permute.xlu0 %1401
        %1403 = vrot.lane.b32.xlu0 %v590, 64
        %v1404 = vpop.permute.xlu0 %1403
        %1405 = vrot.lane.b32.xlu0 %v591, 64
        %v1406 = vpop.permute.xlu0 %1405
        %vm1407 = vcmp.lt.s32.totalorder %v626, 64
        %v1408 = vsel %vm1407, %v1404, %v1406
        %v1409 = vsel %vm1407, %v1402, %v1404
        %v1410 = vsel %vm1407, %v1400, %v1402
        %v1411 = vsel %vm1407, %v1398, %v1400
        %v1412 = vsel %vm1407, %v1396, %v1398
        %v1413 = vsel %vm1407, %v1394, %v1396
        %v1414 = vsel %vm1407, %v1392, %v1394
        %v1415 = vsel %vm1407, %v1406, %v1392
        %v1416 = vlaneseq
        %v1417 = vshrl.u32 %v1416, 7
        %v1418 = vsub.s32 5, %v1417
        %v1419 = vrot.slane %v601, %v1418
        %v1420 = vlaneseq
        %v1421 = vshrl.u32 %v1420, 7
        %v1422 = vsub.s32 5, %v1421
        %v1423 = vrot.slane %v602, %v1422
        %v1424 = vlaneseq
        %v1425 = vshrl.u32 %v1424, 7
        %v1426 = vsub.s32 5, %v1425
        %v1427 = vrot.slane %v603, %v1426
        %v1428 = vlaneseq
        %v1429 = vshrl.u32 %v1428, 7
        %v1430 = vsub.s32 5, %v1429
        %v1431 = vrot.slane %v604, %v1430
        %v1432 = vlaneseq
        %v1433 = vshrl.u32 %v1432, 7
        %v1434 = vsub.s32 5, %v1433
        %v1435 = vrot.slane %v605, %v1434
        %v1436 = vlaneseq
        %v1437 = vshrl.u32 %v1436, 7
        %v1438 = vsub.s32 5, %v1437
        %v1439 = vrot.slane %v606, %v1438
        %v1440 = vlaneseq
        %v1441 = vshrl.u32 %v1440, 7
        %v1442 = vsub.s32 5, %v1441
        %v1443 = vrot.slane %v607, %v1442
        %v1444 = vlaneseq
        %v1445 = vshrl.u32 %v1444, 7
        %v1446 = vsub.s32 5, %v1445
        %v1447 = vrot.slane %v608, %v1446
        %v1448 = vmul.f32 %v1414, %v1419
        %v1449 = vmul.f32 %v1413, %v1423
        %v1450 = vmul.f32 %v1412, %v1427
        %v1451 = vmul.f32 %v1411, %v1431
        %v1452 = vmul.f32 %v1410, %v1435
        %v1453 = vmul.f32 %v1409, %v1439
        %v1454 = vmul.f32 %v1408, %v1443
        %v1455 = vmul.f32 %v1415, %v1447
        %1456 = vrot.lane.b32.xlu0 %v584, 63
        %v1457 = vpop.permute.xlu0 %1456
        %1458 = vrot.lane.b32.xlu0 %v585, 63
        %v1459 = vpop.permute.xlu0 %1458
        %1460 = vrot.lane.b32.xlu0 %v586, 63
        %v1461 = vpop.permute.xlu0 %1460
        %1462 = vrot.lane.b32.xlu0 %v587, 63
        %v1463 = vpop.permute.xlu0 %1462
        %1464 = vrot.lane.b32.xlu0 %v588, 63
        %v1465 = vpop.permute.xlu0 %1464
        %1466 = vrot.lane.b32.xlu0 %v589, 63
        %v1467 = vpop.permute.xlu0 %1466
        %1468 = vrot.lane.b32.xlu0 %v590, 63
        %v1469 = vpop.permute.xlu0 %1468
        %1470 = vrot.lane.b32.xlu0 %v591, 63
        %v1471 = vpop.permute.xlu0 %1470
        %vm1472 = vcmp.lt.s32.totalorder %v626, 63
        %v1473 = vsel %vm1472, %v1469, %v1471
        %v1474 = vsel %vm1472, %v1467, %v1469
        %v1475 = vsel %vm1472, %v1465, %v1467
        %v1476 = vsel %vm1472, %v1463, %v1465
        %v1477 = vsel %vm1472, %v1461, %v1463
        %v1478 = vsel %vm1472, %v1459, %v1461
        %v1479 = vsel %vm1472, %v1457, %v1459
        %v1480 = vsel %vm1472, %v1471, %v1457
        %v1481 = vlaneseq
        %v1482 = vshrl.u32 %v1481, 7
        %v1483 = vsub.s32 6, %v1482
        %v1484 = vrot.slane %v601, %v1483
        %v1485 = vlaneseq
        %v1486 = vshrl.u32 %v1485, 7
        %v1487 = vsub.s32 6, %v1486
        %v1488 = vrot.slane %v602, %v1487
        %v1489 = vlaneseq
        %v1490 = vshrl.u32 %v1489, 7
        %v1491 = vsub.s32 6, %v1490
        %v1492 = vrot.slane %v603, %v1491
        %v1493 = vlaneseq
        %v1494 = vshrl.u32 %v1493, 7
        %v1495 = vsub.s32 6, %v1494
        %v1496 = vrot.slane %v604, %v1495
        %v1497 = vlaneseq
        %v1498 = vshrl.u32 %v1497, 7
        %v1499 = vsub.s32 6, %v1498
        %v1500 = vrot.slane %v605, %v1499
        %v1501 = vlaneseq
        %v1502 = vshrl.u32 %v1501, 7
        %v1503 = vsub.s32 6, %v1502
        %v1504 = vrot.slane %v606, %v1503
        %v1505 = vlaneseq
        %v1506 = vshrl.u32 %v1505, 7
        %v1507 = vsub.s32 6, %v1506
        %v1508 = vrot.slane %v607, %v1507
        %v1509 = vlaneseq
        %v1510 = vshrl.u32 %v1509, 7
        %v1511 = vsub.s32 6, %v1510
        %v1512 = vrot.slane %v608, %v1511
        %v1513 = vmul.f32 %v1479, %v1484
        %v1514 = vmul.f32 %v1478, %v1488
        %v1515 = vmul.f32 %v1477, %v1492
        %v1516 = vmul.f32 %v1476, %v1496
        %v1517 = vmul.f32 %v1475, %v1500
        %v1518 = vmul.f32 %v1474, %v1504
        %v1519 = vmul.f32 %v1473, %v1508
        %v1520 = vmul.f32 %v1480, %v1512
        %1521 = vrot.lane.b32.xlu0 %v584, 62
        %v1522 = vpop.permute.xlu0 %1521
        %1523 = vrot.lane.b32.xlu0 %v585, 62
        %v1524 = vpop.permute.xlu0 %1523
        %1525 = vrot.lane.b32.xlu0 %v586, 62
        %v1526 = vpop.permute.xlu0 %1525
        %1527 = vrot.lane.b32.xlu0 %v587, 62
        %v1528 = vpop.permute.xlu0 %1527
        %1529 = vrot.lane.b32.xlu0 %v588, 62
        %v1530 = vpop.permute.xlu0 %1529
        %1531 = vrot.lane.b32.xlu0 %v589, 62
        %v1532 = vpop.permute.xlu0 %1531
        %1533 = vrot.lane.b32.xlu0 %v590, 62
        %v1534 = vpop.permute.xlu0 %1533
        %1535 = vrot.lane.b32.xlu0 %v591, 62
        %v1536 = vpop.permute.xlu0 %1535
        %vm1537 = vcmp.lt.s32.totalorder %v626, 62
        %v1538 = vsel %vm1537, %v1534, %v1536
        %v1539 = vsel %vm1537, %v1532, %v1534
        %v1540 = vsel %vm1537, %v1530, %v1532
        %v1541 = vsel %vm1537, %v1528, %v1530
        %v1542 = vsel %vm1537, %v1526, %v1528
        %v1543 = vsel %vm1537, %v1524, %v1526
        %v1544 = vsel %vm1537, %v1522, %v1524
        %v1545 = vsel %vm1537, %v1536, %v1522
        %v1546 = vlaneseq
        %v1547 = vshrl.u32 %v1546, 7
        %v1548 = vsub.s32 7, %v1547
        %v1549 = vrot.slane %v601, %v1548
        %v1550 = vlaneseq
        %v1551 = vshrl.u32 %v1550, 7
        %v1552 = vsub.s32 7, %v1551
        %v1553 = vrot.slane %v602, %v1552
        %v1554 = vlaneseq
        %v1555 = vshrl.u32 %v1554, 7
        %v1556 = vsub.s32 7, %v1555
        %v1557 = vrot.slane %v603, %v1556
        %v1558 = vlaneseq
        %v1559 = vshrl.u32 %v1558, 7
        %v1560 = vsub.s32 7, %v1559
        %v1561 = vrot.slane %v604, %v1560
        %v1562 = vlaneseq
        %v1563 = vshrl.u32 %v1562, 7
        %v1564 = vsub.s32 7, %v1563
        %v1565 = vrot.slane %v605, %v1564
        %v1566 = vlaneseq
        %v1567 = vshrl.u32 %v1566, 7
        %v1568 = vsub.s32 7, %v1567
        %v1569 = vrot.slane %v606, %v1568
        %v1570 = vlaneseq
        %v1571 = vshrl.u32 %v1570, 7
        %v1572 = vsub.s32 7, %v1571
        %v1573 = vrot.slane %v607, %v1572
        %v1574 = vlaneseq
        %v1575 = vshrl.u32 %v1574, 7
        %v1576 = vsub.s32 7, %v1575
        %v1577 = vrot.slane %v608, %v1576
        %v1578 = vmul.f32 %v1544, %v1549
        %v1579 = vmul.f32 %v1543, %v1553
        %v1580 = vmul.f32 %v1542, %v1557
        %v1581 = vmul.f32 %v1541, %v1561
        %v1582 = vmul.f32 %v1540, %v1565
        %v1583 = vmul.f32 %v1539, %v1569
        %v1584 = vmul.f32 %v1538, %v1573
        %v1585 = vmul.f32 %v1545, %v1577
        %v1586 = vpack.c.bf16 %v733, %v668
        %v1587 = vpack.c.bf16 %v734, %v669
        %v1588 = vpack.c.bf16 %v735, %v670
        %v1589 = vpack.c.bf16 %v736, %v671
        %v1590 = vpack.c.bf16 %v737, %v672
        %v1591 = vpack.c.bf16 %v738, %v673
        %v1592 = vpack.c.bf16 %v739, %v674
        %v1593 = vpack.c.bf16 %v740, %v675
        %v1594 = vpack.c.bf16 %v863, %v798
        %v1595 = vpack.c.bf16 %v864, %v799
        %v1596 = vpack.c.bf16 %v865, %v800
        %v1597 = vpack.c.bf16 %v866, %v801
        %v1598 = vpack.c.bf16 %v867, %v802
        %v1599 = vpack.c.bf16 %v868, %v803
        %v1600 = vpack.c.bf16 %v869, %v804
        %v1601 = vpack.c.bf16 %v870, %v805
        %v1602 = vpack.c.bf16 %v584, %v928
        %v1603 = vpack.c.bf16 %v585, %v929
        %v1604 = vpack.c.bf16 %v586, %v930
        %v1605 = vpack.c.bf16 %v587, %v931
        %v1606 = vpack.c.bf16 %v588, %v932
        %v1607 = vpack.c.bf16 %v589, %v933
        %v1608 = vpack.c.bf16 %v590, %v934
        %v1609 = vpack.c.bf16 %v591, %v935
        %v1610 = vpack.c.bf16 %v1058, %v993
        %v1611 = vpack.c.bf16 %v1059, %v994
        %v1612 = vpack.c.bf16 %v1060, %v995
        %v1613 = vpack.c.bf16 %v1061, %v996
        %v1614 = vpack.c.bf16 %v1062, %v997
        %v1615 = vpack.c.bf16 %v1063, %v998
        %v1616 = vpack.c.bf16 %v1064, %v999
        %v1617 = vpack.c.bf16 %v1065, %v1000
        %v1618 = vpack.c.bf16 %v1188, %v1123
        %v1619 = vpack.c.bf16 %v1189, %v1124
        %v1620 = vpack.c.bf16 %v1190, %v1125
        %v1621 = vpack.c.bf16 %v1191, %v1126
        %v1622 = vpack.c.bf16 %v1192, %v1127
        %v1623 = vpack.c.bf16 %v1193, %v1128
        %v1624 = vpack.c.bf16 %v1194, %v1129
        %v1625 = vpack.c.bf16 %v1195, %v1130
        %v1626 = vpack.c.bf16 %v1318, %v1253
        %v1627 = vpack.c.bf16 %v1319, %v1254
        %v1628 = vpack.c.bf16 %v1320, %v1255
        %v1629 = vpack.c.bf16 %v1321, %v1256
        %v1630 = vpack.c.bf16 %v1322, %v1257
        %v1631 = vpack.c.bf16 %v1323, %v1258
        %v1632 = vpack.c.bf16 %v1324, %v1259
        %v1633 = vpack.c.bf16 %v1325, %v1260
        %v1634 = vpack.c.bf16 %v1448, %v1383
        %v1635 = vpack.c.bf16 %v1449, %v1384
        %v1636 = vpack.c.bf16 %v1450, %v1385
        %v1637 = vpack.c.bf16 %v1451, %v1386
        %v1638 = vpack.c.bf16 %v1452, %v1387
        %v1639 = vpack.c.bf16 %v1453, %v1388
        %v1640 = vpack.c.bf16 %v1454, %v1389
        %v1641 = vpack.c.bf16 %v1455, %v1390
        %v1642 = vpack.c.bf16 %v1578, %v1513
        %v1643 = vpack.c.bf16 %v1579, %v1514
        %v1644 = vpack.c.bf16 %v1580, %v1515
        %v1645 = vpack.c.bf16 %v1581, %v1516
        %v1646 = vpack.c.bf16 %v1582, %v1517
        %v1647 = vpack.c.bf16 %v1583, %v1518
        %v1648 = vpack.c.bf16 %v1584, %v1519
        %v1649 = vpack.c.bf16 %v1585, %v1520
        %1650 = vmatprep.subr.bf16.mxu0 %v1587
        %1651 = vmatpush1.bf16.msra.mxu0 %v1586
        %1652 = vmatprep.subr.bf16.mxu0 %v1595
        %1653 = vmatpush1.bf16.msra.mxu0 %v1594
        %1654 = vmatprep.subr.bf16.mxu0 %v1603
        %1655 = vmatpush1.bf16.msra.mxu0 %v1602
        %1656 = vmatprep.subr.bf16.mxu0 %v1611
        %1657 = vmatpush1.bf16.msra.mxu0 %v1610
        %1658 = vmatprep.subr.bf16.mxu0 %v1619
        %1659 = vmatpush1.bf16.msra.mxu0 %v1618
        %1660 = vmatprep.subr.bf16.mxu0 %v1627
        %1661 = vmatpush1.bf16.msra.mxu0 %v1626
        %1662 = vmatprep.subr.bf16.mxu0 %v1635
        %1663 = vmatpush1.bf16.msra.mxu0 %v1634
        %1664 = vmatprep.subr.bf16.mxu0 %v1643
        %1665 = vmatpush1.bf16.msra.mxu0 %v1642
        %1666 = vmatprep.subr.bf16.mxu0 0
        %1667 = vmatpush1.bf16.msra.mxu0 0
        %1668 = vmatprep.subr.bf16.mxu0 0
        %1669 = vmatpush1.bf16.msra.mxu0 0
        %1670 = vmatprep.subr.bf16.mxu0 0
        %1671 = vmatpush1.bf16.msra.mxu0 0
        %1672 = vmatprep.subr.bf16.mxu0 0
        %1673 = vmatpush1.bf16.msra.mxu0 0
        %1674 = vmatprep.subr.bf16.mxu0 0
        %1675 = vmatpush1.bf16.msra.mxu0 0
        %1676 = vmatprep.subr.bf16.mxu0 0
        %1677 = vmatpush1.bf16.msra.mxu0 0
        %1678 = vmatprep.subr.bf16.mxu0 0
        %1679 = vmatpush1.bf16.msra.mxu0 0
        %1680 = vmatprep.subr.bf16.mxu0 0
        %1681 = vmatpush1.bf16.msra.mxu0 0
        %1682 = vmatprep.mubr.bf16.mxu0 0
        %1683 = vmatmul.mubr.bf16.gmra.mrb[0].mxu0 %v592
        %v1684 = vpop.f32.mrb[0].mxu0
        %v1685 = vadd.f32 0.0, %v1684
        %v1686 = vpop.f32.mrb[0].mxu0
        %v1687 = vadd.f32 0.0, %v1686
        %v1688 = vpop.f32.mrb[0].mxu0
        %v1689 = vpop.f32.mrb[0].mxu0
        %1690 = vdwg.mxu0
        %1691 = vmatprep.subr.bf16.mxu0 %v1589
        %1692 = vmatpush1.bf16.msra.mxu0 %v1588
        %1693 = vmatprep.subr.bf16.mxu0 %v1597
        %1694 = vmatpush1.bf16.msra.mxu0 %v1596
        %1695 = vmatprep.subr.bf16.mxu0 %v1605
        %1696 = vmatpush1.bf16.msra.mxu0 %v1604
        %1697 = vmatprep.subr.bf16.mxu0 %v1613
        %1698 = vmatpush1.bf16.msra.mxu0 %v1612
        %1699 = vmatprep.subr.bf16.mxu0 %v1621
        %1700 = vmatpush1.bf16.msra.mxu0 %v1620
        %1701 = vmatprep.subr.bf16.mxu0 %v1629
        %1702 = vmatpush1.bf16.msra.mxu0 %v1628
        %1703 = vmatprep.subr.bf16.mxu0 %v1637
        %1704 = vmatpush1.bf16.msra.mxu0 %v1636
        %1705 = vmatprep.subr.bf16.mxu0 %v1645
        %1706 = vmatpush1.bf16.msra.mxu0 %v1644
        %1707 = vmatprep.subr.bf16.mxu0 0
        %1708 = vmatpush1.bf16.msra.mxu0 0
        %1709 = vmatprep.subr.bf16.mxu0 0
        %1710 = vmatpush1.bf16.msra.mxu0 0
        %1711 = vmatprep.subr.bf16.mxu0 0
        %1712 = vmatpush1.bf16.msra.mxu0 0
        %1713 = vmatprep.subr.bf16.mxu0 0
        %1714 = vmatpush1.bf16.msra.mxu0 0
        %1715 = vmatprep.subr.bf16.mxu0 0
        %1716 = vmatpush1.bf16.msra.mxu0 0
        %1717 = vmatprep.subr.bf16.mxu0 0
        %1718 = vmatpush1.bf16.msra.mxu0 0
        %1719 = vmatprep.subr.bf16.mxu0 0
        %1720 = vmatpush1.bf16.msra.mxu0 0
        %1721 = vmatprep.subr.bf16.mxu0 0
        %1722 = vmatpush1.bf16.msra.mxu0 0
        %1723 = vmatprep.mubr.bf16.mxu0 0
        %1724 = vmatmul.mubr.bf16.gmra.mrb[0].mxu0 %v592
        %v1725 = vpop.f32.mrb[0].mxu0
        %v1726 = vadd.f32 0.0, %v1725
        %v1727 = vpop.f32.mrb[0].mxu0
        %v1728 = vadd.f32 0.0, %v1727
        %v1729 = vpop.f32.mrb[0].mxu0
        %v1730 = vpop.f32.mrb[0].mxu0
        %1731 = vdwg.mxu0
        %1732 = vmatprep.subr.bf16.mxu0 %v1591
        %1733 = vmatpush1.bf16.msra.mxu0 %v1590
        %1734 = vmatprep.subr.bf16.mxu0 %v1599
        %1735 = vmatpush1.bf16.msra.mxu0 %v1598
        %1736 = vmatprep.subr.bf16.mxu0 %v1607
        %1737 = vmatpush1.bf16.msra.mxu0 %v1606
        %1738 = vmatprep.subr.bf16.mxu0 %v1615
        %1739 = vmatpush1.bf16.msra.mxu0 %v1614
        %1740 = vmatprep.subr.bf16.mxu0 %v1623
        %1741 = vmatpush1.bf16.msra.mxu0 %v1622
        %1742 = vmatprep.subr.bf16.mxu0 %v1631
        %1743 = vmatpush1.bf16.msra.mxu0 %v1630
        %1744 = vmatprep.subr.bf16.mxu0 %v1639
        %1745 = vmatpush1.bf16.msra.mxu0 %v1638
        %1746 = vmatprep.subr.bf16.mxu0 %v1647
        %1747 = vmatpush1.bf16.msra.mxu0 %v1646
        %1748 = vmatprep.subr.bf16.mxu0 0
        %1749 = vmatpush1.bf16.msra.mxu0 0
        %1750 = vmatprep.subr.bf16.mxu0 0
        %1751 = vmatpush1.bf16.msra.mxu0 0
        %1752 = vmatprep.subr.bf16.mxu0 0
        %1753 = vmatpush1.bf16.msra.mxu0 0
        %1754 = vmatprep.subr.bf16.mxu0 0
        %1755 = vmatpush1.bf16.msra.mxu0 0
        %1756 = vmatprep.subr.bf16.mxu0 0
        %1757 = vmatpush1.bf16.msra.mxu0 0
        %1758 = vmatprep.subr.bf16.mxu0 0
        %1759 = vmatpush1.bf16.msra.mxu0 0
        %1760 = vmatprep.subr.bf16.mxu0 0
        %1761 = vmatpush1.bf16.msra.mxu0 0
        %1762 = vmatprep.subr.bf16.mxu0 0
        %1763 = vmatpush1.bf16.msra.mxu0 0
        %1764 = vmatprep.mubr.bf16.mxu0 0
        %1765 = vmatmul.mubr.bf16.gmra.mrb[0].mxu0 %v592
        %v1766 = vpop.f32.mrb[0].mxu0
        %v1767 = vadd.f32 0.0, %v1766
        %v1768 = vpop.f32.mrb[0].mxu0
        %v1769 = vadd.f32 0.0, %v1768
        %v1770 = vpop.f32.mrb[0].mxu0
        %v1771 = vpop.f32.mrb[0].mxu0
        %1772 = vdwg.mxu0
        %1773 = vmatprep.subr.bf16.mxu0 %v1593
        %1774 = vmatpush1.bf16.msra.mxu0 %v1592
        %1775 = vmatprep.subr.bf16.mxu0 %v1601
        %1776 = vmatpush1.bf16.msra.mxu0 %v1600
        %1777 = vmatprep.subr.bf16.mxu0 %v1609
        %1778 = vmatpush1.bf16.msra.mxu0 %v1608
        %1779 = vmatprep.subr.bf16.mxu0 %v1617
        %1780 = vmatpush1.bf16.msra.mxu0 %v1616
        %1781 = vmatprep.subr.bf16.mxu0 %v1625
        %1782 = vmatpush1.bf16.msra.mxu0 %v1624
        %1783 = vmatprep.subr.bf16.mxu0 %v1633
        %1784 = vmatpush1.bf16.msra.mxu0 %v1632
        %1785 = vmatprep.subr.bf16.mxu0 %v1641
        %1786 = vmatpush1.bf16.msra.mxu0 %v1640
        %1787 = vmatprep.subr.bf16.mxu0 %v1649
        %1788 = vmatpush1.bf16.msra.mxu0 %v1648
        %1789 = vmatprep.subr.bf16.mxu0 0
        %1790 = vmatpush1.bf16.msra.mxu0 0
        %1791 = vmatprep.subr.bf16.mxu0 0
        %1792 = vmatpush1.bf16.msra.mxu0 0
        %1793 = vmatprep.subr.bf16.mxu0 0
        %1794 = vmatpush1.bf16.msra.mxu0 0
        %1795 = vmatprep.subr.bf16.mxu0 0
        %1796 = vmatpush1.bf16.msra.mxu0 0
        %1797 = vmatprep.subr.bf16.mxu0 0
        %1798 = vmatpush1.bf16.msra.mxu0 0
        %1799 = vmatprep.subr.bf16.mxu0 0
        %1800 = vmatpush1.bf16.msra.mxu0 0
        %1801 = vmatprep.subr.bf16.mxu0 0
        %1802 = vmatpush1.bf16.msra.mxu0 0
        %1803 = vmatprep.subr.bf16.mxu0 0
        %1804 = vmatpush1.bf16.msra.mxu0 0
        %1805 = vmatprep.mubr.bf16.mxu0 0
        %1806 = vmatmul.mubr.bf16.gmra.mrb[0].mxu0 %v592
        %v1807 = vpop.f32.mrb[0].mxu0
        %v1808 = vadd.f32 0.0, %v1807
        %v1809 = vpop.f32.mrb[0].mxu0
        %v1810 = vadd.f32 0.0, %v1809
        %v1811 = vpop.f32.mrb[0].mxu0
        %v1812 = vpop.f32.mrb[0].mxu0
        %1813 = vdwg.mxu0
        %v1814 = vpack.c.bf16 %v1685, %v1685
        %v1815 = vpack.c.bf16 %v1687, %v1687
        %v1816 = vpack.c.bf16 %v1726, %v1726
        %v1817 = vpack.c.bf16 %v1728, %v1728
        %v1818 = vpack.c.bf16 %v1767, %v1767
        %v1819 = vpack.c.bf16 %v1769, %v1769
        %v1820 = vpack.c.bf16 %v1808, %v1808
        %v1821 = vpack.c.bf16 %v1810, %v1810
        %v1822 = vld [vmem:[%s11] sm:$0xff]
        %v1823 = vld [vmem:[%s11 + $0x8] sm:$0xff]
        %v1824 = vld [vmem:[%s11 + $0x10] sm:$0xff]
        %v1825 = vld [vmem:[%s11 + $0x18] sm:$0xff]
        %v1826 = vld [vmem:[%s11 + $0x20] sm:$0xff]
        %v1827 = vld [vmem:[%s11 + $0x28] sm:$0xff]
        %v1828 = vld [vmem:[%s11 + $0x30] sm:$0xff]
        %v1829 = vld [vmem:[%s11 + $0x38] sm:$0xff]
        %v1830 = vld [vmem:[%s11 + $0x40] sm:$0xff]
        %v1831 = vld [vmem:[%s11 + $0x48] sm:$0xff]
        %v1832 = vld [vmem:[%s11 + $0x50] sm:$0xff]
        %v1833 = vld [vmem:[%s11 + $0x58] sm:$0xff]
        %v1834 = vld [vmem:[%s11 + $0x60] sm:$0xff]
        %v1835 = vld [vmem:[%s11 + $0x68] sm:$0xff]
        %v1836 = vld [vmem:[%s11 + $0x70] sm:$0xff]
        %v1837 = vld [vmem:[%s11 + $0x78] sm:$0xff]
        %v1838 = vld [vmem:[%s11 + $0x80] sm:$0xff]
        %v1839 = vld [vmem:[%s11 + $0x88] sm:$0xff]
        %v1840 = vld [vmem:[%s11 + $0x90] sm:$0xff]
        %v1841 = vld [vmem:[%s11 + $0x98] sm:$0xff]
        %v1842 = vld [vmem:[%s11 + $0xa0] sm:$0xff]
        %v1843 = vld [vmem:[%s11 + $0xa8] sm:$0xff]
        %v1844 = vld [vmem:[%s11 + $0xb0] sm:$0xff]
        %v1845 = vld [vmem:[%s11 + $0xb8] sm:$0xff]
        %v1846 = vld [vmem:[%s11 + $0xc0] sm:$0xff]
        %v1847 = vld [vmem:[%s11 + $0xc8] sm:$0xff]
        %v1848 = vld [vmem:[%s11 + $0xd0] sm:$0xff]
        %v1849 = vld [vmem:[%s11 + $0xd8] sm:$0xff]
        %v1850 = vld [vmem:[%s11 + $0xe0] sm:$0xff]
        %v1851 = vld [vmem:[%s11 + $0xe8] sm:$0xff]
        %v1852 = vld [vmem:[%s11 + $0xf0] sm:$0xff]
        %v1853 = vld [vmem:[%s11 + $0xf8] sm:$0xff]
        %v1854 = vld [vmem:[%s11 + $0x100] sm:$0xff]
        %v1855 = vld [vmem:[%s11 + $0x108] sm:$0xff]
        %v1856 = vld [vmem:[%s11 + $0x110] sm:$0xff]
        %v1857 = vld [vmem:[%s11 + $0x118] sm:$0xff]
        %v1858 = vld [vmem:[%s11 + $0x120] sm:$0xff]
        %v1859 = vld [vmem:[%s11 + $0x128] sm:$0xff]
        %v1860 = vld [vmem:[%s11 + $0x130] sm:$0xff]
        %v1861 = vld [vmem:[%s11 + $0x138] sm:$0xff]
        %v1862 = vld [vmem:[%s11 + $0x140] sm:$0xff]
        %v1863 = vld [vmem:[%s11 + $0x148] sm:$0xff]
        %v1864 = vld [vmem:[%s11 + $0x150] sm:$0xff]
        %v1865 = vld [vmem:[%s11 + $0x158] sm:$0xff]
        %v1866 = vld [vmem:[%s11 + $0x160] sm:$0xff]
        %v1867 = vld [vmem:[%s11 + $0x168] sm:$0xff]
        %v1868 = vld [vmem:[%s11 + $0x170] sm:$0xff]
        %v1869 = vld [vmem:[%s11 + $0x178] sm:$0xff]
        %v1870 = vld [vmem:[%s11 + $0x180] sm:$0xff]
        %v1871 = vld [vmem:[%s11 + $0x188] sm:$0xff]
        %v1872 = vld [vmem:[%s11 + $0x190] sm:$0xff]
        %v1873 = vld [vmem:[%s11 + $0x198] sm:$0xff]
        %v1874 = vld [vmem:[%s11 + $0x1a0] sm:$0xff]
        %v1875 = vld [vmem:[%s11 + $0x1a8] sm:$0xff]
        %v1876 = vld [vmem:[%s11 + $0x1b0] sm:$0xff]
        %v1877 = vld [vmem:[%s11 + $0x1b8] sm:$0xff]
        %v1878 = vld [vmem:[%s11 + $0x1c0] sm:$0xff]
        %v1879 = vld [vmem:[%s11 + $0x1c8] sm:$0xff]
        %v1880 = vld [vmem:[%s11 + $0x1d0] sm:$0xff]
        %v1881 = vld [vmem:[%s11 + $0x1d8] sm:$0xff]
        %v1882 = vld [vmem:[%s11 + $0x1e0] sm:$0xff]
        %v1883 = vld [vmem:[%s11 + $0x1e8] sm:$0xff]
        %v1884 = vld [vmem:[%s11 + $0x1f0] sm:$0xff]
        %v1885 = vld [vmem:[%s11 + $0x1f8] sm:$0xff]
        %v1886 = vld [vmem:[%s11 + $0x200] sm:$0xff]
        %v1887 = vld [vmem:[%s11 + $0x208] sm:$0xff]
        %v1888 = vld [vmem:[%s11 + $0x210] sm:$0xff]
        %v1889 = vld [vmem:[%s11 + $0x218] sm:$0xff]
        %v1890 = vld [vmem:[%s11 + $0x220] sm:$0xff]
        %v1891 = vld [vmem:[%s11 + $0x228] sm:$0xff]
        %v1892 = vld [vmem:[%s11 + $0x230] sm:$0xff]
        %v1893 = vld [vmem:[%s11 + $0x238] sm:$0xff]
        %v1894 = vld [vmem:[%s11 + $0x240] sm:$0xff]
        %v1895 = vld [vmem:[%s11 + $0x248] sm:$0xff]
        %v1896 = vld [vmem:[%s11 + $0x250] sm:$0xff]
        %v1897 = vld [vmem:[%s11 + $0x258] sm:$0xff]
        %v1898 = vld [vmem:[%s11 + $0x260] sm:$0xff]
        %v1899 = vld [vmem:[%s11 + $0x268] sm:$0xff]
        %v1900 = vld [vmem:[%s11 + $0x270] sm:$0xff]
        %v1901 = vld [vmem:[%s11 + $0x278] sm:$0xff]
        %v1902 = vld [vmem:[%s11 + $0x280] sm:$0xff]
        %v1903 = vld [vmem:[%s11 + $0x288] sm:$0xff]
        %v1904 = vld [vmem:[%s11 + $0x290] sm:$0xff]
        %v1905 = vld [vmem:[%s11 + $0x298] sm:$0xff]
        %v1906 = vld [vmem:[%s11 + $0x2a0] sm:$0xff]
        %v1907 = vld [vmem:[%s11 + $0x2a8] sm:$0xff]
        %v1908 = vld [vmem:[%s11 + $0x2b0] sm:$0xff]
        %v1909 = vld [vmem:[%s11 + $0x2b8] sm:$0xff]
        %v1910 = vld [vmem:[%s11 + $0x2c0] sm:$0xff]
        %v1911 = vld [vmem:[%s11 + $0x2c8] sm:$0xff]
        %v1912 = vld [vmem:[%s11 + $0x2d0] sm:$0xff]
        %v1913 = vld [vmem:[%s11 + $0x2d8] sm:$0xff]
        %v1914 = vld [vmem:[%s11 + $0x2e0] sm:$0xff]
        %v1915 = vld [vmem:[%s11 + $0x2e8] sm:$0xff]
        %v1916 = vld [vmem:[%s11 + $0x2f0] sm:$0xff]
        %v1917 = vld [vmem:[%s11 + $0x2f8] sm:$0xff]
        %v1918 = vld [vmem:[%s11 + $0x300] sm:$0xff]
        %v1919 = vld [vmem:[%s11 + $0x308] sm:$0xff]
        %v1920 = vld [vmem:[%s11 + $0x310] sm:$0xff]
        %v1921 = vld [vmem:[%s11 + $0x318] sm:$0xff]
        %v1922 = vld [vmem:[%s11 + $0x320] sm:$0xff]
        %v1923 = vld [vmem:[%s11 + $0x328] sm:$0xff]
        %v1924 = vld [vmem:[%s11 + $0x330] sm:$0xff]
        %v1925 = vld [vmem:[%s11 + $0x338] sm:$0xff]
        %v1926 = vld [vmem:[%s11 + $0x340] sm:$0xff]
        %v1927 = vld [vmem:[%s11 + $0x348] sm:$0xff]
        %v1928 = vld [vmem:[%s11 + $0x350] sm:$0xff]
        %v1929 = vld [vmem:[%s11 + $0x358] sm:$0xff]
        %v1930 = vld [vmem:[%s11 + $0x360] sm:$0xff]
        %v1931 = vld [vmem:[%s11 + $0x368] sm:$0xff]
        %v1932 = vld [vmem:[%s11 + $0x370] sm:$0xff]
        %v1933 = vld [vmem:[%s11 + $0x378] sm:$0xff]
        %v1934 = vld [vmem:[%s11 + $0x380] sm:$0xff]
        %v1935 = vld [vmem:[%s11 + $0x388] sm:$0xff]
        %v1936 = vld [vmem:[%s11 + $0x390] sm:$0xff]
        %v1937 = vld [vmem:[%s11 + $0x398] sm:$0xff]
        %v1938 = vld [vmem:[%s11 + $0x3a0] sm:$0xff]
        %v1939 = vld [vmem:[%s11 + $0x3a8] sm:$0xff]
        %v1940 = vld [vmem:[%s11 + $0x3b0] sm:$0xff]
        %v1941 = vld [vmem:[%s11 + $0x3b8] sm:$0xff]
        %v1942 = vld [vmem:[%s11 + $0x3c0] sm:$0xff]
        %v1943 = vld [vmem:[%s11 + $0x3c8] sm:$0xff]
        %v1944 = vld [vmem:[%s11 + $0x3d0] sm:$0xff]
        %v1945 = vld [vmem:[%s11 + $0x3d8] sm:$0xff]
        %v1946 = vld [vmem:[%s11 + $0x3e0] sm:$0xff]
        %v1947 = vld [vmem:[%s11 + $0x3e8] sm:$0xff]
        %v1948 = vld [vmem:[%s11 + $0x3f0] sm:$0xff]
        %v1949 = vld [vmem:[%s11 + $0x3f8] sm:$0xff]
        %v2078 = vunpack.c.l.b16 %v1822
        %v2079 = vunpack.c.h.b16 %v1822
        %v2080 = vunpack.c.l.b16 %v1823
        %v2081 = vunpack.c.h.b16 %v1823
        %v2082 = vunpack.c.l.b16 %v1824
        %v2083 = vunpack.c.h.b16 %v1824
        %v2084 = vunpack.c.l.b16 %v1825
        %v2085 = vunpack.c.h.b16 %v1825
        %v2086 = vunpack.c.l.b16 %v1826
        %v2087 = vunpack.c.h.b16 %v1826
        %v2088 = vunpack.c.l.b16 %v1827
        %v2089 = vunpack.c.h.b16 %v1827
        %v2090 = vunpack.c.l.b16 %v1828
        %v2091 = vunpack.c.h.b16 %v1828
        %v2092 = vunpack.c.l.b16 %v1829
        %v2093 = vunpack.c.h.b16 %v1829
        %v2094 = vunpack.c.l.b16 %v1830
        %v2095 = vunpack.c.h.b16 %v1830
        %v2096 = vunpack.c.l.b16 %v1831
        %v2097 = vunpack.c.h.b16 %v1831
        %v2098 = vunpack.c.l.b16 %v1832
        %v2099 = vunpack.c.h.b16 %v1832
        %v2100 = vunpack.c.l.b16 %v1833
        %v2101 = vunpack.c.h.b16 %v1833
        %v2102 = vunpack.c.l.b16 %v1834
        %v2103 = vunpack.c.h.b16 %v1834
        %v2104 = vunpack.c.l.b16 %v1835
        %v2105 = vunpack.c.h.b16 %v1835
        %v2106 = vunpack.c.l.b16 %v1836
        %v2107 = vunpack.c.h.b16 %v1836
        %v2108 = vunpack.c.l.b16 %v1837
        %v2109 = vunpack.c.h.b16 %v1837
        %v2110 = vunpack.c.l.b16 %v1838
        %v2111 = vunpack.c.h.b16 %v1838
        %v2112 = vunpack.c.l.b16 %v1839
        %v2113 = vunpack.c.h.b16 %v1839
        %v2114 = vunpack.c.l.b16 %v1840
        %v2115 = vunpack.c.h.b16 %v1840
        %v2116 = vunpack.c.l.b16 %v1841
        %v2117 = vunpack.c.h.b16 %v1841
        %v2118 = vunpack.c.l.b16 %v1842
        %v2119 = vunpack.c.h.b16 %v1842
        %v2120 = vunpack.c.l.b16 %v1843
        %v2121 = vunpack.c.h.b16 %v1843
        %v2122 = vunpack.c.l.b16 %v1844
        %v2123 = vunpack.c.h.b16 %v1844
        %v2124 = vunpack.c.l.b16 %v1845
        %v2125 = vunpack.c.h.b16 %v1845
        %v2126 = vunpack.c.l.b16 %v1846
        %v2127 = vunpack.c.h.b16 %v1846
        %v2128 = vunpack.c.l.b16 %v1847
        %v2129 = vunpack.c.h.b16 %v1847
        %v2130 = vunpack.c.l.b16 %v1848
        %v2131 = vunpack.c.h.b16 %v1848
        %v2132 = vunpack.c.l.b16 %v1849
        %v2133 = vunpack.c.h.b16 %v1849
        %v2134 = vunpack.c.l.b16 %v1850
        %v2135 = vunpack.c.h.b16 %v1850
        %v2136 = vunpack.c.l.b16 %v1851
        %v2137 = vunpack.c.h.b16 %v1851
        %v2138 = vunpack.c.l.b16 %v1852
        %v2139 = vunpack.c.h.b16 %v1852
        %v2140 = vunpack.c.l.b16 %v1853
        %v2141 = vunpack.c.h.b16 %v1853
        %v2142 = vunpack.c.l.b16 %v1854
        %v2143 = vunpack.c.h.b16 %v1854
        %v2144 = vunpack.c.l.b16 %v1855
        %v2145 = vunpack.c.h.b16 %v1855
        %v2146 = vunpack.c.l.b16 %v1856
        %v2147 = vunpack.c.h.b16 %v1856
        %v2148 = vunpack.c.l.b16 %v1857
        %v2149 = vunpack.c.h.b16 %v1857
        %v2150 = vunpack.c.l.b16 %v1858
        %v2151 = vunpack.c.h.b16 %v1858
        %v2152 = vunpack.c.l.b16 %v1859
        %v2153 = vunpack.c.h.b16 %v1859
        %v2154 = vunpack.c.l.b16 %v1860
        %v2155 = vunpack.c.h.b16 %v1860
        %v2156 = vunpack.c.l.b16 %v1861
        %v2157 = vunpack.c.h.b16 %v1861
        %v2158 = vunpack.c.l.b16 %v1862
        %v2159 = vunpack.c.h.b16 %v1862
        %v2160 = vunpack.c.l.b16 %v1863
        %v2161 = vunpack.c.h.b16 %v1863
        %v2162 = vunpack.c.l.b16 %v1864
        %v2163 = vunpack.c.h.b16 %v1864
        %v2164 = vunpack.c.l.b16 %v1865
        %v2165 = vunpack.c.h.b16 %v1865
        %v2166 = vunpack.c.l.b16 %v1866
        %v2167 = vunpack.c.h.b16 %v1866
        %v2168 = vunpack.c.l.b16 %v1867
        %v2169 = vunpack.c.h.b16 %v1867
        %v2170 = vunpack.c.l.b16 %v1868
        %v2171 = vunpack.c.h.b16 %v1868
        %v2172 = vunpack.c.l.b16 %v1869
        %v2173 = vunpack.c.h.b16 %v1869
        %v2174 = vunpack.c.l.b16 %v1870
        %v2175 = vunpack.c.h.b16 %v1870
        %v2176 = vunpack.c.l.b16 %v1871
        %v2177 = vunpack.c.h.b16 %v1871
        %v2178 = vunpack.c.l.b16 %v1872
        %v2179 = vunpack.c.h.b16 %v1872
        %v2180 = vunpack.c.l.b16 %v1873
        %v2181 = vunpack.c.h.b16 %v1873
        %v2182 = vunpack.c.l.b16 %v1874
        %v2183 = vunpack.c.h.b16 %v1874
        %v2184 = vunpack.c.l.b16 %v1875
        %v2185 = vunpack.c.h.b16 %v1875
        %v2186 = vunpack.c.l.b16 %v1876
        %v2187 = vunpack.c.h.b16 %v1876
        %v2188 = vunpack.c.l.b16 %v1877
        %v2189 = vunpack.c.h.b16 %v1877
        %v2190 = vunpack.c.l.b16 %v1878
        %v2191 = vunpack.c.h.b16 %v1878
        %v2192 = vunpack.c.l.b16 %v1879
        %v2193 = vunpack.c.h.b16 %v1879
        %v2194 = vunpack.c.l.b16 %v1880
        %v2195 = vunpack.c.h.b16 %v1880
        %v2196 = vunpack.c.l.b16 %v1881
        %v2197 = vunpack.c.h.b16 %v1881
        %v2198 = vunpack.c.l.b16 %v1882
        %v2199 = vunpack.c.h.b16 %v1882
        %v2200 = vunpack.c.l.b16 %v1883
        %v2201 = vunpack.c.h.b16 %v1883
        %v2202 = vunpack.c.l.b16 %v1884
        %v2203 = vunpack.c.h.b16 %v1884
        %v2204 = vunpack.c.l.b16 %v1885
        %v2205 = vunpack.c.h.b16 %v1885
        %v2206 = vunpack.c.l.b16 %v1886
        %v2207 = vunpack.c.h.b16 %v1886
        %v2208 = vunpack.c.l.b16 %v1887
        %v2209 = vunpack.c.h.b16 %v1887
        %v2210 = vunpack.c.l.b16 %v1888
        %v2211 = vunpack.c.h.b16 %v1888
        %v2212 = vunpack.c.l.b16 %v1889
        %v2213 = vunpack.c.h.b16 %v1889
        %v2214 = vunpack.c.l.b16 %v1890
        %v2215 = vunpack.c.h.b16 %v1890
        %v2216 = vunpack.c.l.b16 %v1891
        %v2217 = vunpack.c.h.b16 %v1891
        %v2218 = vunpack.c.l.b16 %v1892
        %v2219 = vunpack.c.h.b16 %v1892
        %v2220 = vunpack.c.l.b16 %v1893
        %v2221 = vunpack.c.h.b16 %v1893
        %v2222 = vunpack.c.l.b16 %v1894
        %v2223 = vunpack.c.h.b16 %v1894
        %v2224 = vunpack.c.l.b16 %v1895
        %v2225 = vunpack.c.h.b16 %v1895
        %v2226 = vunpack.c.l.b16 %v1896
        %v2227 = vunpack.c.h.b16 %v1896
        %v2228 = vunpack.c.l.b16 %v1897
        %v2229 = vunpack.c.h.b16 %v1897
        %v2230 = vunpack.c.l.b16 %v1898
        %v2231 = vunpack.c.h.b16 %v1898
        %v2232 = vunpack.c.l.b16 %v1899
        %v2233 = vunpack.c.h.b16 %v1899
        %v2234 = vunpack.c.l.b16 %v1900
        %v2235 = vunpack.c.h.b16 %v1900
        %v2236 = vunpack.c.l.b16 %v1901
        %v2237 = vunpack.c.h.b16 %v1901
        %v2238 = vunpack.c.l.b16 %v1902
        %v2239 = vunpack.c.h.b16 %v1902
        %v2240 = vunpack.c.l.b16 %v1903
        %v2241 = vunpack.c.h.b16 %v1903
        %v2242 = vunpack.c.l.b16 %v1904
        %v2243 = vunpack.c.h.b16 %v1904
        %v2244 = vunpack.c.l.b16 %v1905
        %v2245 = vunpack.c.h.b16 %v1905
        %v2246 = vunpack.c.l.b16 %v1906
        %v2247 = vunpack.c.h.b16 %v1906
        %v2248 = vunpack.c.l.b16 %v1907
        %v2249 = vunpack.c.h.b16 %v1907
        %v2250 = vunpack.c.l.b16 %v1908
        %v2251 = vunpack.c.h.b16 %v1908
        %v2252 = vunpack.c.l.b16 %v1909
        %v2253 = vunpack.c.h.b16 %v1909
        %v2254 = vunpack.c.l.b16 %v1910
        %v2255 = vunpack.c.h.b16 %v1910
        %v2256 = vunpack.c.l.b16 %v1911
        %v2257 = vunpack.c.h.b16 %v1911
        %v2258 = vunpack.c.l.b16 %v1912
        %v2259 = vunpack.c.h.b16 %v1912
        %v2260 = vunpack.c.l.b16 %v1913
        %v2261 = vunpack.c.h.b16 %v1913
        %v2262 = vunpack.c.l.b16 %v1914
        %v2263 = vunpack.c.h.b16 %v1914
        %v2264 = vunpack.c.l.b16 %v1915
        %v2265 = vunpack.c.h.b16 %v1915
        %v2266 = vunpack.c.l.b16 %v1916
        %v2267 = vunpack.c.h.b16 %v1916
        %v2268 = vunpack.c.l.b16 %v1917
        %v2269 = vunpack.c.h.b16 %v1917
        %v2270 = vunpack.c.l.b16 %v1918
        %v2271 = vunpack.c.h.b16 %v1918
        %v2272 = vunpack.c.l.b16 %v1919
        %v2273 = vunpack.c.h.b16 %v1919
        %v2274 = vunpack.c.l.b16 %v1920
        %v2275 = vunpack.c.h.b16 %v1920
        %v2276 = vunpack.c.l.b16 %v1921
        %v2277 = vunpack.c.h.b16 %v1921
        %v2278 = vunpack.c.l.b16 %v1922
        %v2279 = vunpack.c.h.b16 %v1922
        %v2280 = vunpack.c.l.b16 %v1923
        %v2281 = vunpack.c.h.b16 %v1923
        %v2282 = vunpack.c.l.b16 %v1924
        %v2283 = vunpack.c.h.b16 %v1924
        %v2284 = vunpack.c.l.b16 %v1925
        %v2285 = vunpack.c.h.b16 %v1925
        %v2286 = vunpack.c.l.b16 %v1926
        %v2287 = vunpack.c.h.b16 %v1926
        %v2288 = vunpack.c.l.b16 %v1927
        %v2289 = vunpack.c.h.b16 %v1927
        %v2290 = vunpack.c.l.b16 %v1928
        %v2291 = vunpack.c.h.b16 %v1928
        %v2292 = vunpack.c.l.b16 %v1929
        %v2293 = vunpack.c.h.b16 %v1929
        %v2294 = vunpack.c.l.b16 %v1930
        %v2295 = vunpack.c.h.b16 %v1930
        %v2296 = vunpack.c.l.b16 %v1931
        %v2297 = vunpack.c.h.b16 %v1931
        %v2298 = vunpack.c.l.b16 %v1932
        %v2299 = vunpack.c.h.b16 %v1932
        %v2300 = vunpack.c.l.b16 %v1933
        %v2301 = vunpack.c.h.b16 %v1933
        %v2302 = vunpack.c.l.b16 %v1934
        %v2303 = vunpack.c.h.b16 %v1934
        %v2304 = vunpack.c.l.b16 %v1935
        %v2305 = vunpack.c.h.b16 %v1935
        %v2306 = vunpack.c.l.b16 %v1936
        %v2307 = vunpack.c.h.b16 %v1936
        %v2308 = vunpack.c.l.b16 %v1937
        %v2309 = vunpack.c.h.b16 %v1937
        %v2310 = vunpack.c.l.b16 %v1938
        %v2311 = vunpack.c.h.b16 %v1938
        %v2312 = vunpack.c.l.b16 %v1939
        %v2313 = vunpack.c.h.b16 %v1939
        %v2314 = vunpack.c.l.b16 %v1940
        %v2315 = vunpack.c.h.b16 %v1940
        %v2316 = vunpack.c.l.b16 %v1941
        %v2317 = vunpack.c.h.b16 %v1941
        %v2318 = vunpack.c.l.b16 %v1942
        %v2319 = vunpack.c.h.b16 %v1942
        %v2320 = vunpack.c.l.b16 %v1943
        %v2321 = vunpack.c.h.b16 %v1943
        %v2322 = vunpack.c.l.b16 %v1944
        %v2323 = vunpack.c.h.b16 %v1944
        %v2324 = vunpack.c.l.b16 %v1945
        %v2325 = vunpack.c.h.b16 %v1945
        %v2326 = vunpack.c.l.b16 %v1946
        %v2327 = vunpack.c.h.b16 %v1946
        %v2328 = vunpack.c.l.b16 %v1947
        %v2329 = vunpack.c.h.b16 %v1947
        %v2330 = vunpack.c.l.b16 %v1948
        %v2331 = vunpack.c.h.b16 %v1948
        %v2332 = vunpack.c.l.b16 %v1949
        %v2333 = vunpack.c.h.b16 %v1949
        %v2334 = vpack.c.b16 %v2080, %v2078
        %v2335 = vpack.c.b16 %v2081, %v2079
        %v2336 = vpack.c.b16 %v2084, %v2082
        %v2337 = vpack.c.b16 %v2085, %v2083
        %v2338 = vpack.c.b16 %v2088, %v2086
        %v2339 = vpack.c.b16 %v2089, %v2087
        %v2340 = vpack.c.b16 %v2092, %v2090
        %v2341 = vpack.c.b16 %v2093, %v2091
        %v2342 = vpack.c.b16 %v2096, %v2094
        %v2343 = vpack.c.b16 %v2097, %v2095
        %v2344 = vpack.c.b16 %v2100, %v2098
        %v2345 = vpack.c.b16 %v2101, %v2099
        %v2346 = vpack.c.b16 %v2104, %v2102
        %v2347 = vpack.c.b16 %v2105, %v2103
        %v2348 = vpack.c.b16 %v2108, %v2106
        %v2349 = vpack.c.b16 %v2109, %v2107
        %v2350 = vpack.c.b16 %v2112, %v2110
        %v2351 = vpack.c.b16 %v2113, %v2111
        %v2352 = vpack.c.b16 %v2116, %v2114
        %v2353 = vpack.c.b16 %v2117, %v2115
        %v2354 = vpack.c.b16 %v2120, %v2118
        %v2355 = vpack.c.b16 %v2121, %v2119
        %v2356 = vpack.c.b16 %v2124, %v2122
        %v2357 = vpack.c.b16 %v2125, %v2123
        %v2358 = vpack.c.b16 %v2128, %v2126
        %v2359 = vpack.c.b16 %v2129, %v2127
        %v2360 = vpack.c.b16 %v2132, %v2130
        %v2361 = vpack.c.b16 %v2133, %v2131
        %v2362 = vpack.c.b16 %v2136, %v2134
        %v2363 = vpack.c.b16 %v2137, %v2135
        %v2364 = vpack.c.b16 %v2140, %v2138
        %v2365 = vpack.c.b16 %v2141, %v2139
        %v2366 = vpack.c.b16 %v2144, %v2142
        %v2367 = vpack.c.b16 %v2145, %v2143
        %v2368 = vpack.c.b16 %v2148, %v2146
        %v2369 = vpack.c.b16 %v2149, %v2147
        %v2370 = vpack.c.b16 %v2152, %v2150
        %v2371 = vpack.c.b16 %v2153, %v2151
        %v2372 = vpack.c.b16 %v2156, %v2154
        %v2373 = vpack.c.b16 %v2157, %v2155
        %v2374 = vpack.c.b16 %v2160, %v2158
        %v2375 = vpack.c.b16 %v2161, %v2159
        %v2376 = vpack.c.b16 %v2164, %v2162
        %v2377 = vpack.c.b16 %v2165, %v2163
        %v2378 = vpack.c.b16 %v2168, %v2166
        %v2379 = vpack.c.b16 %v2169, %v2167
        %v2380 = vpack.c.b16 %v2172, %v2170
        %v2381 = vpack.c.b16 %v2173, %v2171
        %v2382 = vpack.c.b16 %v2176, %v2174
        %v2383 = vpack.c.b16 %v2177, %v2175
        %v2384 = vpack.c.b16 %v2180, %v2178
        %v2385 = vpack.c.b16 %v2181, %v2179
        %v2386 = vpack.c.b16 %v2184, %v2182
        %v2387 = vpack.c.b16 %v2185, %v2183
        %v2388 = vpack.c.b16 %v2188, %v2186
        %v2389 = vpack.c.b16 %v2189, %v2187
        %v2390 = vpack.c.b16 %v2192, %v2190
        %v2391 = vpack.c.b16 %v2193, %v2191
        %v2392 = vpack.c.b16 %v2196, %v2194
        %v2393 = vpack.c.b16 %v2197, %v2195
        %v2394 = vpack.c.b16 %v2200, %v2198
        %v2395 = vpack.c.b16 %v2201, %v2199
        %v2396 = vpack.c.b16 %v2204, %v2202
        %v2397 = vpack.c.b16 %v2205, %v2203
        %v2398 = vpack.c.b16 %v2208, %v2206
        %v2399 = vpack.c.b16 %v2209, %v2207
        %v2400 = vpack.c.b16 %v2212, %v2210
        %v2401 = vpack.c.b16 %v2213, %v2211
        %v2402 = vpack.c.b16 %v2216, %v2214
        %v2403 = vpack.c.b16 %v2217, %v2215
        %v2404 = vpack.c.b16 %v2220, %v2218
        %v2405 = vpack.c.b16 %v2221, %v2219
        %v2406 = vpack.c.b16 %v2224, %v2222
        %v2407 = vpack.c.b16 %v2225, %v2223
        %v2408 = vpack.c.b16 %v2228, %v2226
        %v2409 = vpack.c.b16 %v2229, %v2227
        %v2410 = vpack.c.b16 %v2232, %v2230
        %v2411 = vpack.c.b16 %v2233, %v2231
        %v2412 = vpack.c.b16 %v2236, %v2234
        %v2413 = vpack.c.b16 %v2237, %v2235
        %v2414 = vpack.c.b16 %v2240, %v2238
        %v2415 = vpack.c.b16 %v2241, %v2239
        %v2416 = vpack.c.b16 %v2244, %v2242
        %v2417 = vpack.c.b16 %v2245, %v2243
        %v2418 = vpack.c.b16 %v2248, %v2246
        %v2419 = vpack.c.b16 %v2249, %v2247
        %v2420 = vpack.c.b16 %v2252, %v2250
        %v2421 = vpack.c.b16 %v2253, %v2251
        %v2422 = vpack.c.b16 %v2256, %v2254
        %v2423 = vpack.c.b16 %v2257, %v2255
        %v2424 = vpack.c.b16 %v2260, %v2258
        %v2425 = vpack.c.b16 %v2261, %v2259
        %v2426 = vpack.c.b16 %v2264, %v2262
        %v2427 = vpack.c.b16 %v2265, %v2263
        %v2428 = vpack.c.b16 %v2268, %v2266
        %v2429 = vpack.c.b16 %v2269, %v2267
        %v2430 = vpack.c.b16 %v2272, %v2270
        %v2431 = vpack.c.b16 %v2273, %v2271
        %v2432 = vpack.c.b16 %v2276, %v2274
        %v2433 = vpack.c.b16 %v2277, %v2275
        %v2434 = vpack.c.b16 %v2280, %v2278
        %v2435 = vpack.c.b16 %v2281, %v2279
        %v2436 = vpack.c.b16 %v2284, %v2282
        %v2437 = vpack.c.b16 %v2285, %v2283
        %v2438 = vpack.c.b16 %v2288, %v2286
        %v2439 = vpack.c.b16 %v2289, %v2287
        %v2440 = vpack.c.b16 %v2292, %v2290
        %v2441 = vpack.c.b16 %v2293, %v2291
        %v2442 = vpack.c.b16 %v2296, %v2294
        %v2443 = vpack.c.b16 %v2297, %v2295
        %v2444 = vpack.c.b16 %v2300, %v2298
        %v2445 = vpack.c.b16 %v2301, %v2299
        %v2446 = vpack.c.b16 %v2304, %v2302
        %v2447 = vpack.c.b16 %v2305, %v2303
        %v2448 = vpack.c.b16 %v2308, %v2306
        %v2449 = vpack.c.b16 %v2309, %v2307
        %v2450 = vpack.c.b16 %v2312, %v2310
        %v2451 = vpack.c.b16 %v2313, %v2311
        %v2452 = vpack.c.b16 %v2316, %v2314
        %v2453 = vpack.c.b16 %v2317, %v2315
        %v2454 = vpack.c.b16 %v2320, %v2318
        %v2455 = vpack.c.b16 %v2321, %v2319
        %v2456 = vpack.c.b16 %v2324, %v2322
        %v2457 = vpack.c.b16 %v2325, %v2323
        %v2458 = vpack.c.b16 %v2328, %v2326
        %v2459 = vpack.c.b16 %v2329, %v2327
        %v2460 = vpack.c.b16 %v2332, %v2330
        %v2461 = vpack.c.b16 %v2333, %v2331
        %2590 = vmatprep.subr.bf16.mxu0 %v2335
        %2591 = vmatpush1.bf16.msra.mxu0 %v2334
        %2592 = vmatprep.subr.bf16.mxu0 %v2337
        %2593 = vmatpush1.bf16.msra.mxu0 %v2336
        %2594 = vmatprep.subr.bf16.mxu0 %v2339
        %2595 = vmatpush1.bf16.msra.mxu0 %v2338
        %2596 = vmatprep.subr.bf16.mxu0 %v2341
        %2597 = vmatpush1.bf16.msra.mxu0 %v2340
        %2598 = vmatprep.subr.bf16.mxu0 %v2343
        %2599 = vmatpush1.bf16.msra.mxu0 %v2342
        %2600 = vmatprep.subr.bf16.mxu0 %v2345
        %2601 = vmatpush1.bf16.msra.mxu0 %v2344
        %2602 = vmatprep.subr.bf16.mxu0 %v2347
        %2603 = vmatpush1.bf16.msra.mxu0 %v2346
        %2604 = vmatprep.subr.bf16.mxu0 %v2349
        %2605 = vmatpush1.bf16.msra.mxu0 %v2348
        %2606 = vmatprep.subr.bf16.mxu0 %v2351
        %2607 = vmatpush1.bf16.msra.mxu0 %v2350
        %2608 = vmatprep.subr.bf16.mxu0 %v2353
        %2609 = vmatpush1.bf16.msra.mxu0 %v2352
        %2610 = vmatprep.subr.bf16.mxu0 %v2355
        %2611 = vmatpush1.bf16.msra.mxu0 %v2354
        %2612 = vmatprep.subr.bf16.mxu0 %v2357
        %2613 = vmatpush1.bf16.msra.mxu0 %v2356
        %2614 = vmatprep.subr.bf16.mxu0 %v2359
        %2615 = vmatpush1.bf16.msra.mxu0 %v2358
        %2616 = vmatprep.subr.bf16.mxu0 %v2361
        %2617 = vmatpush1.bf16.msra.mxu0 %v2360
        %2618 = vmatprep.subr.bf16.mxu0 %v2363
        %2619 = vmatpush1.bf16.msra.mxu0 %v2362
        %2620 = vmatprep.subr.bf16.mxu0 %v2365
        %2621 = vmatpush1.bf16.msra.mxu0 %v2364
        %2622 = vmatprep.mubr.bf16.mxu0 %v1815
        %2623 = vmatmul.mubr.bf16.gmra.mrb[0].mxu0 %v1814
        %v2624 = vpop.f32.mrb[0].mxu0
        %v2625 = vadd.f32 0.0, %v2624
        %v2626 = vpop.f32.mrb[0].mxu0
        %v2627 = vadd.f32 0.0, %v2626
        %v2628 = vpop.f32.mrb[0].mxu0
        %v2629 = vpop.f32.mrb[0].mxu0
        %2630 = vdwg.mxu0
        %2631 = vmatprep.subr.bf16.mxu0 %v2367
        %2632 = vmatpush1.bf16.msra.mxu0 %v2366
        %2633 = vmatprep.subr.bf16.mxu0 %v2369
        %2634 = vmatpush1.bf16.msra.mxu0 %v2368
        %2635 = vmatprep.subr.bf16.mxu0 %v2371
        %2636 = vmatpush1.bf16.msra.mxu0 %v2370
        %2637 = vmatprep.subr.bf16.mxu0 %v2373
        %2638 = vmatpush1.bf16.msra.mxu0 %v2372
        %2639 = vmatprep.subr.bf16.mxu0 %v2375
        %2640 = vmatpush1.bf16.msra.mxu0 %v2374
        %2641 = vmatprep.subr.bf16.mxu0 %v2377
        %2642 = vmatpush1.bf16.msra.mxu0 %v2376
        %2643 = vmatprep.subr.bf16.mxu0 %v2379
        %2644 = vmatpush1.bf16.msra.mxu0 %v2378
        %2645 = vmatprep.subr.bf16.mxu0 %v2381
        %2646 = vmatpush1.bf16.msra.mxu0 %v2380
        %2647 = vmatprep.subr.bf16.mxu0 %v2383
        %2648 = vmatpush1.bf16.msra.mxu0 %v2382
        %2649 = vmatprep.subr.bf16.mxu0 %v2385
        %2650 = vmatpush1.bf16.msra.mxu0 %v2384
        %2651 = vmatprep.subr.bf16.mxu0 %v2387
        %2652 = vmatpush1.bf16.msra.mxu0 %v2386
        %2653 = vmatprep.subr.bf16.mxu0 %v2389
        %2654 = vmatpush1.bf16.msra.mxu0 %v2388
        %2655 = vmatprep.subr.bf16.mxu0 %v2391
        %2656 = vmatpush1.bf16.msra.mxu0 %v2390
        %2657 = vmatprep.subr.bf16.mxu0 %v2393
        %2658 = vmatpush1.bf16.msra.mxu0 %v2392
        %2659 = vmatprep.subr.bf16.mxu0 %v2395
        %2660 = vmatpush1.bf16.msra.mxu0 %v2394
        %2661 = vmatprep.subr.bf16.mxu0 %v2397
        %2662 = vmatpush1.bf16.msra.mxu0 %v2396
        %2663 = vmatprep.mubr.bf16.mxu0 %v1817
        %2664 = vmatmul.mubr.bf16.gmra.mrb[0].mxu0 %v1816
        %v2665 = vpop.f32.mrb[0].mxu0
        %v2666 = vadd.f32 %v2625, %v2665
        %v2667 = vpop.f32.mrb[0].mxu0
        %v2668 = vadd.f32 %v2627, %v2667
        %v2669 = vpop.f32.mrb[0].mxu0
        %v2670 = vpop.f32.mrb[0].mxu0
        %2671 = vdwg.mxu0
        %2672 = vmatprep.subr.bf16.mxu0 %v2399
        %2673 = vmatpush1.bf16.msra.mxu0 %v2398
        %2674 = vmatprep.subr.bf16.mxu0 %v2401
        %2675 = vmatpush1.bf16.msra.mxu0 %v2400
        %2676 = vmatprep.subr.bf16.mxu0 %v2403
        %2677 = vmatpush1.bf16.msra.mxu0 %v2402
        %2678 = vmatprep.subr.bf16.mxu0 %v2405
        %2679 = vmatpush1.bf16.msra.mxu0 %v2404
        %2680 = vmatprep.subr.bf16.mxu0 %v2407
        %2681 = vmatpush1.bf16.msra.mxu0 %v2406
        %2682 = vmatprep.subr.bf16.mxu0 %v2409
        %2683 = vmatpush1.bf16.msra.mxu0 %v2408
        %2684 = vmatprep.subr.bf16.mxu0 %v2411
        %2685 = vmatpush1.bf16.msra.mxu0 %v2410
        %2686 = vmatprep.subr.bf16.mxu0 %v2413
        %2687 = vmatpush1.bf16.msra.mxu0 %v2412
        %2688 = vmatprep.subr.bf16.mxu0 %v2415
        %2689 = vmatpush1.bf16.msra.mxu0 %v2414
        %2690 = vmatprep.subr.bf16.mxu0 %v2417
        %2691 = vmatpush1.bf16.msra.mxu0 %v2416
        %2692 = vmatprep.subr.bf16.mxu0 %v2419
        %2693 = vmatpush1.bf16.msra.mxu0 %v2418
        %2694 = vmatprep.subr.bf16.mxu0 %v2421
        %2695 = vmatpush1.bf16.msra.mxu0 %v2420
        %2696 = vmatprep.subr.bf16.mxu0 %v2423
        %2697 = vmatpush1.bf16.msra.mxu0 %v2422
        %2698 = vmatprep.subr.bf16.mxu0 %v2425
        %2699 = vmatpush1.bf16.msra.mxu0 %v2424
        %2700 = vmatprep.subr.bf16.mxu0 %v2427
        %2701 = vmatpush1.bf16.msra.mxu0 %v2426
        %2702 = vmatprep.subr.bf16.mxu0 %v2429
        %2703 = vmatpush1.bf16.msra.mxu0 %v2428
        %2704 = vmatprep.mubr.bf16.mxu0 %v1819
        %2705 = vmatmul.mubr.bf16.gmra.mrb[0].mxu0 %v1818
        %v2706 = vpop.f32.mrb[0].mxu0
        %v2707 = vadd.f32 %v2666, %v2706
        %v2708 = vpop.f32.mrb[0].mxu0
        %v2709 = vadd.f32 %v2668, %v2708
        %v2710 = vpop.f32.mrb[0].mxu0
        %v2711 = vpop.f32.mrb[0].mxu0
        %2712 = vdwg.mxu0
        %2713 = vmatprep.subr.bf16.mxu0 %v2431
        %2714 = vmatpush1.bf16.msra.mxu0 %v2430
        %2715 = vmatprep.subr.bf16.mxu0 %v2433
        %2716 = vmatpush1.bf16.msra.mxu0 %v2432
        %2717 = vmatprep.subr.bf16.mxu0 %v2435
        %2718 = vmatpush1.bf16.msra.mxu0 %v2434
        %2719 = vmatprep.subr.bf16.mxu0 %v2437
        %2720 = vmatpush1.bf16.msra.mxu0 %v2436
        %2721 = vmatprep.subr.bf16.mxu0 %v2439
        %2722 = vmatpush1.bf16.msra.mxu0 %v2438
        %2723 = vmatprep.subr.bf16.mxu0 %v2441
        %2724 = vmatpush1.bf16.msra.mxu0 %v2440
        %2725 = vmatprep.subr.bf16.mxu0 %v2443
        %2726 = vmatpush1.bf16.msra.mxu0 %v2442
        %2727 = vmatprep.subr.bf16.mxu0 %v2445
        %2728 = vmatpush1.bf16.msra.mxu0 %v2444
        %2729 = vmatprep.subr.bf16.mxu0 %v2447
        %2730 = vmatpush1.bf16.msra.mxu0 %v2446
        %2731 = vmatprep.subr.bf16.mxu0 %v2449
        %2732 = vmatpush1.bf16.msra.mxu0 %v2448
        %2733 = vmatprep.subr.bf16.mxu0 %v2451
        %2734 = vmatpush1.bf16.msra.mxu0 %v2450
        %2735 = vmatprep.subr.bf16.mxu0 %v2453
        %2736 = vmatpush1.bf16.msra.mxu0 %v2452
        %2737 = vmatprep.subr.bf16.mxu0 %v2455
        %2738 = vmatpush1.bf16.msra.mxu0 %v2454
        %2739 = vmatprep.subr.bf16.mxu0 %v2457
        %2740 = vmatpush1.bf16.msra.mxu0 %v2456
        %2741 = vmatprep.subr.bf16.mxu0 %v2459
        %2742 = vmatpush1.bf16.msra.mxu0 %v2458
        %2743 = vmatprep.subr.bf16.mxu0 %v2461
        %2744 = vmatpush1.bf16.msra.mxu0 %v2460
        %2745 = vmatprep.mubr.bf16.mxu0 %v1821
        %2746 = vmatmul.mubr.bf16.gmra.mrb[0].mxu0 %v1820
        %v2747 = vpop.f32.mrb[0].mxu0
        %v2748 = vadd.f32 %v2707, %v2747
        %v2749 = vpop.f32.mrb[0].mxu0
        %v2750 = vadd.f32 %v2709, %v2749
        %v2751 = vpop.f32.mrb[0].mxu0
        %v2752 = vpop.f32.mrb[0].mxu0
        %2753 = vdwg.mxu0
        %v2754 = vadd.f32 %v2748, %v2750
        %2755 = vadd.xlane.f32.xlu0 %v2754
        %v2756 = vpop.xlane.xlu0 %2755
        %v2757 = vmul.f32 %v2756, 0.00390625
        %v2758 = vmul.f32 %v2748, %v2748
        %v2759 = vmul.f32 %v2750, %v2750
        %v2760 = vadd.f32 %v2758, %v2759
        %2761 = vadd.xlane.f32.xlu0 %v2760
        %v2762 = vpop.xlane.xlu0 %2761
        %v2763 = vmul.f32 %v2762, 0.00390625
        %v2764 = vmul.f32 %v2757, %v2757
        %v2765 = vsub.f32 %v2763, %v2764
        %v2766 = vmax.f32 %v2765, 0.0
        %v2767 = vsub.f32 %v2748, %v2757
        %v2768 = vsub.f32 %v2750, %v2757
        %v2769 = vadd.f32 %v2766, 1e-05
        %v2770 = vrsqrt.pop %v2769
        %v2771 = vmul.f32 %v2767, %v2770
        %v2772 = vmul.f32 %v2768, %v2770
        %v2773 = vmax.f32 %v2771, 0.0
        %v2774 = vmax.f32 %v2772, 0.0
        %v2775 = vld [vmem:[%s2] sm:$0xf]
        %v2776 = vld [vmem:[%s2 + $0x4] sm:$0xf]
        %v2777 = vld [vmem:[#allocation4] sm:$0xff]
        %v2778 = vld [vmem:[#allocation4 + $0x8] sm:$0xff]
        %v2779 = vld [vmem:[#allocation4 + $0x10] sm:$0xff]
        %v2780 = vld [vmem:[#allocation4 + $0x18] sm:$0xff]
        %2781 = vrot.lane.b32.xlu0 %v2773, 17
        %v2782 = vpop.permute.xlu0 %2781
        %2783 = vrot.lane.b32.xlu0 %v2774, 17
        %v2784 = vpop.permute.xlu0 %2783
        %vm2785 = vcmp.lt.s32.totalorder %v626, 17
        %v2786 = vsel %vm2785, %v2782, %v2784
        %v2787 = vsel %vm2785, %v2784, %v2782
        %v2788 = vlaneseq
        %v2789 = vshrl.u32 %v2788, 7
        %v2790 = vsub.s32 0, %v2789
        %v2791 = vrot.slane %v2777, %v2790
        %v2792 = vlaneseq
        %v2793 = vshrl.u32 %v2792, 7
        %v2794 = vsub.s32 0, %v2793
        %v2795 = vrot.slane %v2778, %v2794
        %v2796 = vmul.f32 %v2787, %v2791
        %v2797 = vmul.f32 %v2786, %v2795
        %2798 = vrot.lane.b32.xlu0 %v2773, 16
        %v2799 = vpop.permute.xlu0 %2798
        %2800 = vrot.lane.b32.xlu0 %v2774, 16
        %v2801 = vpop.permute.xlu0 %2800
        %vm2802 = vcmp.lt.s32.totalorder %v626, 16
        %v2803 = vsel %vm2802, %v2799, %v2801
        %v2804 = vsel %vm2802, %v2801, %v2799
        %v2805 = vlaneseq
        %v2806 = vshrl.u32 %v2805, 7
        %v2807 = vsub.s32 1, %v2806
        %v2808 = vrot.slane %v2777, %v2807
        %v2809 = vlaneseq
        %v2810 = vshrl.u32 %v2809, 7
        %v2811 = vsub.s32 1, %v2810
        %v2812 = vrot.slane %v2778, %v2811
        %v2813 = vmul.f32 %v2804, %v2808
        %v2814 = vmul.f32 %v2803, %v2812
        %2815 = vrot.lane.b32.xlu0 %v2773, 15
        %v2816 = vpop.permute.xlu0 %2815
        %2817 = vrot.lane.b32.xlu0 %v2774, 15
        %v2818 = vpop.permute.xlu0 %2817
        %vm2819 = vcmp.lt.s32.totalorder %v626, 15
        %v2820 = vsel %vm2819, %v2816, %v2818
        %v2821 = vsel %vm2819, %v2818, %v2816
        %v2822 = vlaneseq
        %v2823 = vshrl.u32 %v2822, 7
        %v2824 = vsub.s32 2, %v2823
        %v2825 = vrot.slane %v2777, %v2824
        %v2826 = vlaneseq
        %v2827 = vshrl.u32 %v2826, 7
        %v2828 = vsub.s32 2, %v2827
        %v2829 = vrot.slane %v2778, %v2828
        %v2830 = vmul.f32 %v2821, %v2825
        %v2831 = vmul.f32 %v2820, %v2829
        %2832 = vrot.lane.b32.xlu0 %v2773, 14
        %v2833 = vpop.permute.xlu0 %2832
        %2834 = vrot.lane.b32.xlu0 %v2774, 14
        %v2835 = vpop.permute.xlu0 %2834
        %vm2836 = vcmp.lt.s32.totalorder %v626, 14
        %v2837 = vsel %vm2836, %v2833, %v2835
        %v2838 = vsel %vm2836, %v2835, %v2833
        %v2839 = vlaneseq
        %v2840 = vshrl.u32 %v2839, 7
        %v2841 = vsub.s32 3, %v2840
        %v2842 = vrot.slane %v2777, %v2841
        %v2843 = vlaneseq
        %v2844 = vshrl.u32 %v2843, 7
        %v2845 = vsub.s32 3, %v2844
        %v2846 = vrot.slane %v2778, %v2845
        %v2847 = vmul.f32 %v2838, %v2842
        %v2848 = vmul.f32 %v2837, %v2846
        %2849 = vrot.lane.b32.xlu0 %v2773, 1
        %v2850 = vpop.permute.xlu0 %2849
        %2851 = vrot.lane.b32.xlu0 %v2774, 1
        %v2852 = vpop.permute.xlu0 %2851
        %v2853 = vsel %vm887, %v2850, %v2852
        %v2854 = vsel %vm887, %v2852, %v2850
        %v2855 = vlaneseq
        %v2856 = vshrl.u32 %v2855, 7
        %v2857 = vsub.s32 4, %v2856
        %v2858 = vrot.slane %v2777, %v2857
        %v2859 = vlaneseq
        %v2860 = vshrl.u32 %v2859, 7
        %v2861 = vsub.s32 4, %v2860
        %v2862 = vrot.slane %v2778, %v2861
        %v2863 = vmul.f32 %v2854, %v2858
        %v2864 = vmul.f32 %v2853, %v2862
        %2865 = vrot.lane.b32.xlu0 %v2773, 127
        %v2866 = vpop.permute.xlu0 %2865
        %2867 = vrot.lane.b32.xlu0 %v2774, 127
        %v2868 = vpop.permute.xlu0 %2867
        %v2869 = vsel %vm952, %v2866, %v2868
        %v2870 = vsel %vm952, %v2868, %v2866
        %v2871 = vlaneseq
        %v2872 = vshrl.u32 %v2871, 7
        %v2873 = vsub.s32 6, %v2872
        %v2874 = vrot.slane %v2777, %v2873
        %v2875 = vlaneseq
        %v2876 = vshrl.u32 %v2875, 7
        %v2877 = vsub.s32 6, %v2876
        %v2878 = vrot.slane %v2778, %v2877
        %v2879 = vmul.f32 %v2869, %v2874
        %v2880 = vmul.f32 %v2870, %v2878
        %2881 = vrot.lane.b32.xlu0 %v2773, 126
        %v2882 = vpop.permute.xlu0 %2881
        %2883 = vrot.lane.b32.xlu0 %v2774, 126
        %v2884 = vpop.permute.xlu0 %2883
        %v2885 = vsel %vm1017, %v2882, %v2884
        %v2886 = vsel %vm1017, %v2884, %v2882
        %v2887 = vlaneseq
        %v2888 = vshrl.u32 %v2887, 7
        %v2889 = vsub.s32 7, %v2888
        %v2890 = vrot.slane %v2777, %v2889
        %v2891 = vlaneseq
        %v2892 = vshrl.u32 %v2891, 7
        %v2893 = vsub.s32 7, %v2892
        %v2894 = vrot.slane %v2778, %v2893
        %v2895 = vmul.f32 %v2885, %v2890
        %v2896 = vmul.f32 %v2886, %v2894
        %2897 = vrot.lane.b32.xlu0 %v2773, 113
        %v2898 = vpop.permute.xlu0 %2897
        %2899 = vrot.lane.b32.xlu0 %v2774, 113
        %v2900 = vpop.permute.xlu0 %2899
        %vm2901 = vcmp.lt.s32.totalorder %v626, 113
        %v2902 = vsel %vm2901, %v2898, %v2900
        %v2903 = vsel %vm2901, %v2900, %v2898
        %v2904 = vlaneseq
        %v2905 = vshrl.u32 %v2904, 7
        %v2906 = vsub.s32 0, %v2905
        %v2907 = vrot.slane %v2779, %v2906
        %v2908 = vlaneseq
        %v2909 = vshrl.u32 %v2908, 7
        %v2910 = vsub.s32 0, %v2909
        %v2911 = vrot.slane %v2780, %v2910
        %v2912 = vmul.f32 %v2902, %v2907
        %v2913 = vmul.f32 %v2903, %v2911
        %2914 = vrot.lane.b32.xlu0 %v2773, 112
        %v2915 = vpop.permute.xlu0 %2914
        %2916 = vrot.lane.b32.xlu0 %v2774, 112
        %v2917 = vpop.permute.xlu0 %2916
        %vm2918 = vcmp.lt.s32.totalorder %v626, 112
        %v2919 = vsel %vm2918, %v2915, %v2917
        %v2920 = vsel %vm2918, %v2917, %v2915
        %v2921 = vlaneseq
        %v2922 = vshrl.u32 %v2921, 7
        %v2923 = vsub.s32 1, %v2922
        %v2924 = vrot.slane %v2779, %v2923
        %v2925 = vlaneseq
        %v2926 = vshrl.u32 %v2925, 7
        %v2927 = vsub.s32 1, %v2926
        %v2928 = vrot.slane %v2780, %v2927
        %v2929 = vmul.f32 %v2919, %v2924
        %v2930 = vmul.f32 %v2920, %v2928
        %2931 = vrot.lane.b32.xlu0 %v2773, 111
        %v2932 = vpop.permute.xlu0 %2931
        %2933 = vrot.lane.b32.xlu0 %v2774, 111
        %v2934 = vpop.permute.xlu0 %2933
        %vm2935 = vcmp.lt.s32.totalorder %v626, 111
        %v2936 = vsel %vm2935, %v2932, %v2934
        %v2937 = vsel %vm2935, %v2934, %v2932
        %v2938 = vlaneseq
        %v2939 = vshrl.u32 %v2938, 7
        %v2940 = vsub.s32 2, %v2939
        %v2941 = vrot.slane %v2779, %v2940
        %v2942 = vlaneseq
        %v2943 = vshrl.u32 %v2942, 7
        %v2944 = vsub.s32 2, %v2943
        %v2945 = vrot.slane %v2780, %v2944
        %v2946 = vmul.f32 %v2936, %v2941
        %v2947 = vmul.f32 %v2937, %v2945
        %2948 = vrot.lane.b32.xlu0 %v2773, 110
        %v2949 = vpop.permute.xlu0 %2948
        %2950 = vrot.lane.b32.xlu0 %v2774, 110
        %v2951 = vpop.permute.xlu0 %2950
        %vm2952 = vcmp.lt.s32.totalorder %v626, 110
        %v2953 = vsel %vm2952, %v2949, %v2951
        %v2954 = vsel %vm2952, %v2951, %v2949
        %v2955 = vlaneseq
        %v2956 = vshrl.u32 %v2955, 7
        %v2957 = vsub.s32 3, %v2956
        %v2958 = vrot.slane %v2779, %v2957
        %v2959 = vlaneseq
        %v2960 = vshrl.u32 %v2959, 7
        %v2961 = vsub.s32 3, %v2960
        %v2962 = vrot.slane %v2780, %v2961
        %v2963 = vmul.f32 %v2953, %v2958
        %v2964 = vmul.f32 %v2954, %v2962
        %2965 = vrot.lane.b32.xlu0 %v2773, 97
        %v2966 = vpop.permute.xlu0 %2965
        %2967 = vrot.lane.b32.xlu0 %v2774, 97
        %v2968 = vpop.permute.xlu0 %2967
        %v2969 = vsel %vm1082, %v2966, %v2968
        %v2970 = vsel %vm1082, %v2968, %v2966
        %v2971 = vlaneseq
        %v2972 = vshrl.u32 %v2971, 7
        %v2973 = vsub.s32 4, %v2972
        %v2974 = vrot.slane %v2779, %v2973
        %v2975 = vlaneseq
        %v2976 = vshrl.u32 %v2975, 7
        %v2977 = vsub.s32 4, %v2976
        %v2978 = vrot.slane %v2780, %v2977
        %v2979 = vmul.f32 %v2969, %v2974
        %v2980 = vmul.f32 %v2970, %v2978
        %2981 = vrot.lane.b32.xlu0 %v2773, 96
        %v2982 = vpop.permute.xlu0 %2981
        %2983 = vrot.lane.b32.xlu0 %v2774, 96
        %v2984 = vpop.permute.xlu0 %2983
        %v2985 = vsel %vm1147, %v2982, %v2984
        %v2986 = vsel %vm1147, %v2984, %v2982
        %v2987 = vlaneseq
        %v2988 = vshrl.u32 %v2987, 7
        %v2989 = vsub.s32 5, %v2988
        %v2990 = vrot.slane %v2779, %v2989
        %v2991 = vlaneseq
        %v2992 = vshrl.u32 %v2991, 7
        %v2993 = vsub.s32 5, %v2992
        %v2994 = vrot.slane %v2780, %v2993
        %v2995 = vmul.f32 %v2985, %v2990
        %v2996 = vmul.f32 %v2986, %v2994
        %2997 = vrot.lane.b32.xlu0 %v2773, 95
        %v2998 = vpop.permute.xlu0 %2997
        %2999 = vrot.lane.b32.xlu0 %v2774, 95
        %v3000 = vpop.permute.xlu0 %2999
        %v3001 = vsel %vm1212, %v2998, %v3000
        %v3002 = vsel %vm1212, %v3000, %v2998
        %v3003 = vlaneseq
        %v3004 = vshrl.u32 %v3003, 7
        %v3005 = vsub.s32 6, %v3004
        %v3006 = vrot.slane %v2779, %v3005
        %v3007 = vlaneseq
        %v3008 = vshrl.u32 %v3007, 7
        %v3009 = vsub.s32 6, %v3008
        %v3010 = vrot.slane %v2780, %v3009
        %v3011 = vmul.f32 %v3001, %v3006
        %v3012 = vmul.f32 %v3002, %v3010
        %3013 = vrot.lane.b32.xlu0 %v2773, 94
        %v3014 = vpop.permute.xlu0 %3013
        %3015 = vrot.lane.b32.xlu0 %v2774, 94
        %v3016 = vpop.permute.xlu0 %3015
        %v3017 = vsel %vm1277, %v3014, %v3016
        %v3018 = vsel %vm1277, %v3016, %v3014
        %v3019 = vlaneseq
        %v3020 = vshrl.u32 %v3019, 7
        %v3021 = vsub.s32 7, %v3020
        %v3022 = vrot.slane %v2779, %v3021
        %v3023 = vlaneseq
        %v3024 = vshrl.u32 %v3023, 7
        %v3025 = vsub.s32 7, %v3024
        %v3026 = vrot.slane %v2780, %v3025
        %v3027 = vmul.f32 %v3017, %v3022
        %v3028 = vmul.f32 %v3018, %v3026
        %v3029 = vpack.c.bf16 %v2813, %v2796
        %v3030 = vpack.c.bf16 %v2814, %v2797
        %v3031 = vpack.c.bf16 %v2847, %v2830
        %v3032 = vpack.c.bf16 %v2848, %v2831
        %v3033 = vpack.c.bf16 %v2773, %v2863
        %v3034 = vpack.c.bf16 %v2774, %v2864
        %v3035 = vpack.c.bf16 %v2895, %v2879
        %v3036 = vpack.c.bf16 %v2896, %v2880
        %v3037 = vpack.c.bf16 %v2929, %v2912
        %v3038 = vpack.c.bf16 %v2930, %v2913
        %v3039 = vpack.c.bf16 %v2963, %v2946
        %v3040 = vpack.c.bf16 %v2964, %v2947
        %v3041 = vpack.c.bf16 %v2995, %v2979
        %v3042 = vpack.c.bf16 %v2996, %v2980
        %v3043 = vpack.c.bf16 %v3027, %v3011
        %v3044 = vpack.c.bf16 %v3028, %v3012
        %v3047 = vunpack.c.l.b16 %v2775
        %v3048 = vunpack.c.l.b16 %v2776
        %v3049 = vpack.c.b16 %v3048, %v3047
        %3051 = vmatprep.subr.bf16.mxu0 %v3030
        %3052 = vmatpush1.bf16.msra.mxu0 %v3029
        %3053 = vmatprep.subr.bf16.mxu0 %v3032
        %3054 = vmatpush1.bf16.msra.mxu0 %v3031
        %3055 = vmatprep.subr.bf16.mxu0 %v3034
        %3056 = vmatpush1.bf16.msra.mxu0 %v3033
        %3057 = vmatprep.subr.bf16.mxu0 %v3036
        %3058 = vmatpush1.bf16.msra.mxu0 %v3035
        %3059 = vmatprep.subr.bf16.mxu0 %v3038
        %3060 = vmatpush1.bf16.msra.mxu0 %v3037
        %3061 = vmatprep.subr.bf16.mxu0 %v3040
        %3062 = vmatpush1.bf16.msra.mxu0 %v3039
        %3063 = vmatprep.subr.bf16.mxu0 %v3042
        %3064 = vmatpush1.bf16.msra.mxu0 %v3041
        %3065 = vmatprep.subr.bf16.mxu0 %v3044
        %3066 = vmatpush1.bf16.msra.mxu0 %v3043
        %3067 = vmatprep.subr.bf16.mxu0 0
        %3068 = vmatpush1.bf16.msra.mxu0 0
        %3069 = vmatprep.subr.bf16.mxu0 0
        %3070 = vmatpush1.bf16.msra.mxu0 0
        %3071 = vmatprep.subr.bf16.mxu0 0
        %3072 = vmatpush1.bf16.msra.mxu0 0
        %3073 = vmatprep.subr.bf16.mxu0 0
        %3074 = vmatpush1.bf16.msra.mxu0 0
        %3075 = vmatprep.subr.bf16.mxu0 0
        %3076 = vmatpush1.bf16.msra.mxu0 0
        %3077 = vmatprep.subr.bf16.mxu0 0
        %3078 = vmatpush1.bf16.msra.mxu0 0
        %3079 = vmatprep.subr.bf16.mxu0 0
        %3080 = vmatpush1.bf16.msra.mxu0 0
        %3081 = vmatprep.subr.bf16.mxu0 0
        %3082 = vmatpush1.bf16.msra.mxu0 0
        %3083 = vmatprep.mubr.bf16.mxu0 0
        %3084 = vmatmul.mubr.bf16.gmra.mrb[0].mxu0 %v3049
        %v3085 = vpop.f32.mrb[0].mxu0
        %v3086 = vadd.f32 0.0, %v3085
        %v3087 = vpop.f32.mrb[0].mxu0
        %v3088 = vadd.f32 0.0, %v3087
        %v3089 = vpop.f32.mrb[0].mxu0
        %v3090 = vadd.f32 0.0, %v3089
        %v3091 = vpop.f32.mrb[0].mxu0
        %v3092 = vadd.f32 0.0, %v3091
        %3093 = vdwg.mxu0
        %v3094 = vpack.c.bf16 %v3090, %v3086
        %v3095 = vpack.c.bf16 %v3092, %v3088
        %v3096 = vld [vmem:[%s12] sm:$0xf]
        %v3097 = vld [vmem:[%s12 + $0x4] sm:$0xf]
        %v3098 = vld [vmem:[%s12 + $0x8] sm:$0xf]
        %v3099 = vld [vmem:[%s12 + $0xc] sm:$0xf]
        %v3100 = vld [vmem:[%s12 + $0x10] sm:$0xf]
        %v3101 = vld [vmem:[%s12 + $0x14] sm:$0xf]
        %v3102 = vld [vmem:[%s12 + $0x18] sm:$0xf]
        %v3103 = vld [vmem:[%s12 + $0x1c] sm:$0xf]
        %v3104 = vld [vmem:[%s12 + $0x20] sm:$0xf]
        %v3105 = vld [vmem:[%s12 + $0x24] sm:$0xf]
        %v3106 = vld [vmem:[%s12 + $0x28] sm:$0xf]
        %v3107 = vld [vmem:[%s12 + $0x2c] sm:$0xf]
        %v3108 = vld [vmem:[%s12 + $0x30] sm:$0xf]
        %v3109 = vld [vmem:[%s12 + $0x34] sm:$0xf]
        %v3110 = vld [vmem:[%s12 + $0x38] sm:$0xf]
        %v3111 = vld [vmem:[%s12 + $0x3c] sm:$0xf]
        %v3112 = vld [vmem:[%s12 + $0x40] sm:$0xf]
        %v3113 = vld [vmem:[%s12 + $0x44] sm:$0xf]
        %v3114 = vld [vmem:[%s12 + $0x48] sm:$0xf]
        %v3115 = vld [vmem:[%s12 + $0x4c] sm:$0xf]
        %v3116 = vld [vmem:[%s12 + $0x50] sm:$0xf]
        %v3117 = vld [vmem:[%s12 + $0x54] sm:$0xf]
        %v3118 = vld [vmem:[%s12 + $0x58] sm:$0xf]
        %v3119 = vld [vmem:[%s12 + $0x5c] sm:$0xf]
        %v3120 = vld [vmem:[%s12 + $0x60] sm:$0xf]
        %v3121 = vld [vmem:[%s12 + $0x64] sm:$0xf]
        %v3122 = vld [vmem:[%s12 + $0x68] sm:$0xf]
        %v3123 = vld [vmem:[%s12 + $0x6c] sm:$0xf]
        %v3124 = vld [vmem:[%s12 + $0x70] sm:$0xf]
        %v3125 = vld [vmem:[%s12 + $0x74] sm:$0xf]
        %v3126 = vld [vmem:[%s12 + $0x78] sm:$0xf]
        %v3127 = vld [vmem:[%s12 + $0x7c] sm:$0xf]
        %v3160 = vunpack.c.l.b16 %v3096
        %v3161 = vunpack.c.l.b16 %v3097
        %v3162 = vunpack.c.l.b16 %v3098
        %v3163 = vunpack.c.l.b16 %v3099
        %v3164 = vunpack.c.l.b16 %v3100
        %v3165 = vunpack.c.l.b16 %v3101
        %v3166 = vunpack.c.l.b16 %v3102
        %v3167 = vunpack.c.l.b16 %v3103
        %v3168 = vunpack.c.l.b16 %v3104
        %v3169 = vunpack.c.l.b16 %v3105
        %v3170 = vunpack.c.l.b16 %v3106
        %v3171 = vunpack.c.l.b16 %v3107
        %v3172 = vunpack.c.l.b16 %v3108
        %v3173 = vunpack.c.l.b16 %v3109
        %v3174 = vunpack.c.l.b16 %v3110
        %v3175 = vunpack.c.l.b16 %v3111
        %v3176 = vunpack.c.l.b16 %v3112
        %v3177 = vunpack.c.l.b16 %v3113
        %v3178 = vunpack.c.l.b16 %v3114
        %v3179 = vunpack.c.l.b16 %v3115
        %v3180 = vunpack.c.l.b16 %v3116
        %v3181 = vunpack.c.l.b16 %v3117
        %v3182 = vunpack.c.l.b16 %v3118
        %v3183 = vunpack.c.l.b16 %v3119
        %v3184 = vunpack.c.l.b16 %v3120
        %v3185 = vunpack.c.l.b16 %v3121
        %v3186 = vunpack.c.l.b16 %v3122
        %v3187 = vunpack.c.l.b16 %v3123
        %v3188 = vunpack.c.l.b16 %v3124
        %v3189 = vunpack.c.l.b16 %v3125
        %v3190 = vunpack.c.l.b16 %v3126
        %v3191 = vunpack.c.l.b16 %v3127
        %v3192 = vpack.c.b16 %v3161, %v3160
        %v3193 = vpack.c.b16 %v3163, %v3162
        %v3194 = vpack.c.b16 %v3165, %v3164
        %v3195 = vpack.c.b16 %v3167, %v3166
        %v3196 = vpack.c.b16 %v3169, %v3168
        %v3197 = vpack.c.b16 %v3171, %v3170
        %v3198 = vpack.c.b16 %v3173, %v3172
        %v3199 = vpack.c.b16 %v3175, %v3174
        %v3200 = vpack.c.b16 %v3177, %v3176
        %v3201 = vpack.c.b16 %v3179, %v3178
        %v3202 = vpack.c.b16 %v3181, %v3180
        %v3203 = vpack.c.b16 %v3183, %v3182
        %v3204 = vpack.c.b16 %v3185, %v3184
        %v3205 = vpack.c.b16 %v3187, %v3186
        %v3206 = vpack.c.b16 %v3189, %v3188
        %v3207 = vpack.c.b16 %v3191, %v3190
        %3224 = vmatprep.subr.bf16.mxu0 0
        %3225 = vmatpush1.bf16.msra.mxu0 %v3192
        %3226 = vmatprep.subr.bf16.mxu0 0
        %3227 = vmatpush1.bf16.msra.mxu0 %v3193
        %3228 = vmatprep.subr.bf16.mxu0 0
        %3229 = vmatpush1.bf16.msra.mxu0 %v3194
        %3230 = vmatprep.subr.bf16.mxu0 0
        %3231 = vmatpush1.bf16.msra.mxu0 %v3195
        %3232 = vmatprep.subr.bf16.mxu0 0
        %3233 = vmatpush1.bf16.msra.mxu0 %v3196
        %3234 = vmatprep.subr.bf16.mxu0 0
        %3235 = vmatpush1.bf16.msra.mxu0 %v3197
        %3236 = vmatprep.subr.bf16.mxu0 0
        %3237 = vmatpush1.bf16.msra.mxu0 %v3198
        %3238 = vmatprep.subr.bf16.mxu0 0
        %3239 = vmatpush1.bf16.msra.mxu0 %v3199
        %3240 = vmatprep.subr.bf16.mxu0 0
        %3241 = vmatpush1.bf16.msra.mxu0 %v3200
        %3242 = vmatprep.subr.bf16.mxu0 0
        %3243 = vmatpush1.bf16.msra.mxu0 %v3201
        %3244 = vmatprep.subr.bf16.mxu0 0
        %3245 = vmatpush1.bf16.msra.mxu0 %v3202
        %3246 = vmatprep.subr.bf16.mxu0 0
        %3247 = vmatpush1.bf16.msra.mxu0 %v3203
        %3248 = vmatprep.subr.bf16.mxu0 0
        %3249 = vmatpush1.bf16.msra.mxu0 %v3204
        %3250 = vmatprep.subr.bf16.mxu0 0
        %3251 = vmatpush1.bf16.msra.mxu0 %v3205
        %3252 = vmatprep.subr.bf16.mxu0 0
        %3253 = vmatpush1.bf16.msra.mxu0 %v3206
        %3254 = vmatprep.subr.bf16.mxu0 0
        %3255 = vmatpush1.bf16.msra.mxu0 %v3207
        %3256 = vmatprep.mubr.bf16.mxu0 %v3095
        %3257 = vmatmul.mubr.bf16.gmra.mrb[0].mxu0 %v3094
        %v3258 = vpop.f32.mrb[0].mxu0
        %v3259 = vadd.f32 0.0, %v3258
        %v3260 = vpop.f32.mrb[0].mxu0
        %v3261 = vpop.f32.mrb[0].mxu0
        %v3262 = vadd.f32 0.0, %v3261
        %v3263 = vpop.f32.mrb[0].mxu0
        %3264 = vdwg.mxu0
        %vm3265 = vcmask 523264
        %v3266 = vsel %vm3265, %v3259, 0.0
        %3267 = vadd.xlane.f32.xlu0 %v3266
        %v3268 = vpop.xlane.xlu0 %3267
        %v3269 = vsel %vm3265, %v3262, 0.0
        %3270 = vadd.xlane.f32.xlu0 %v3269
        %v3271 = vpop.xlane.xlu0 %3270
        %v3272 = vmul.f32 %v3268, 0.015625
        %v3273 = vmul.f32 %v3271, 0.015625
        %v3274 = vmul.f32 %v3259, %v3259
        %v3275 = vmul.f32 %v3262, %v3262
        %v3276 = vsel %vm3265, %v3274, 0.0
        %3277 = vadd.xlane.f32.xlu0 %v3276
        %v3278 = vpop.xlane.xlu0 %3277
        %v3279 = vsel %vm3265, %v3275, 0.0
        %3280 = vadd.xlane.f32.xlu0 %v3279
        %v3281 = vpop.xlane.xlu0 %3280
        %v3282 = vmul.f32 %v3278, 0.015625
        %v3283 = vmul.f32 %v3281, 0.015625
        %v3284 = vmul.f32 %v3272, %v3272
        %v3285 = vmul.f32 %v3273, %v3273
        %v3286 = vsub.f32 %v3282, %v3284
        %v3287 = vsub.f32 %v3283, %v3285
        %v3288 = vmax.f32 %v3286, 0.0
        %v3289 = vmax.f32 %v3287, 0.0
        %v3290 = vsub.f32 %v3259, %v3272
        %v3291 = vsub.f32 %v3262, %v3273
        %v3292 = vadd.f32 %v3288, 1e-05
        %v3293 = vadd.f32 %v3289, 1e-05
        %v3294 = vrsqrt.pop %v3292
        %v3295 = vrsqrt.pop %v3293
        %v3296 = vmul.f32 %v3290, %v3294
        %v3297 = vmul.f32 %v3291, %v3295
        %v3298 = vmax.f32 %v3296, 0.0
        %v3299 = vmax.f32 %v3297, 0.0
        %v3300 = vld [vmem:[%s3] sm:$0xff]
        %v3301 = vld [vmem:[%s3 + $0x8] sm:$0xff]
        %v3302 = vld [vmem:[#allocation6] sm:$0xff]
        %v3303 = vld [vmem:[#allocation6 + $0x8] sm:$0x1]
        %3306 = vrot.lane.b32.xlu0 %v3298, 73
        %v3307 = vpop.permute.xlu0 %3306
        %3308 = vrot.lane.b32.xlu0 %v3299, 73
        %v3309 = vpop.permute.xlu0 %3308
        %3312 = vrot.lane.b32.xlu0 %v3298, 9
        %v3313 = vpop.permute.xlu0 %3312
        %3314 = vrot.lane.b32.xlu0 %v3299, 9
        %v3315 = vpop.permute.xlu0 %3314
        %vm3318 = vcmask 72704
        %v3319 = vsel %vm3318, %v3307, %v3313
        %v3320 = vsel %vm3318, %v3309, %v3315
        %v3321 = vlaneseq
        %v3322 = vshrl.u32 %v3321, 7
        %v3323 = vsub.s32 0, %v3322
        %v3324 = vrot.slane %v3302, %v3323
        %v3325 = vmul.f32 %v3319, %v3324
        %v3326 = vmul.f32 %v3320, %v3324
        %3327 = vrot.lane.b32.xlu0 %v3298, 72
        %v3328 = vpop.permute.xlu0 %3327
        %3329 = vrot.lane.b32.xlu0 %v3299, 72
        %v3330 = vpop.permute.xlu0 %3329
        %3333 = vrot.lane.b32.xlu0 %v3298, 8
        %v3334 = vpop.permute.xlu0 %3333
        %3335 = vrot.lane.b32.xlu0 %v3299, 8
        %v3336 = vpop.permute.xlu0 %3335
        %vm3339 = vcmask 64512
        %v3340 = vsel %vm3339, %v3328, %v3334
        %v3341 = vsel %vm3339, %v3330, %v3336
        %v3342 = vlaneseq
        %v3343 = vshrl.u32 %v3342, 7
        %v3344 = vsub.s32 1, %v3343
        %v3345 = vrot.slane %v3302, %v3344
        %v3346 = vmul.f32 %v3340, %v3345
        %v3347 = vmul.f32 %v3341, %v3345
        %3348 = vrot.lane.b32.xlu0 %v3298, 71
        %v3349 = vpop.permute.xlu0 %3348
        %3350 = vrot.lane.b32.xlu0 %v3299, 71
        %v3351 = vpop.permute.xlu0 %3350
        %3354 = vrot.lane.b32.xlu0 %v3298, 7
        %v3355 = vpop.permute.xlu0 %3354
        %3356 = vrot.lane.b32.xlu0 %v3299, 7
        %v3357 = vpop.permute.xlu0 %3356
        %vm3360 = vcmask 56320
        %v3361 = vsel %vm3360, %v3349, %v3355
        %v3362 = vsel %vm3360, %v3351, %v3357
        %v3363 = vlaneseq
        %v3364 = vshrl.u32 %v3363, 7
        %v3365 = vsub.s32 2, %v3364
        %v3366 = vrot.slane %v3302, %v3365
        %v3367 = vmul.f32 %v3361, %v3366
        %v3368 = vmul.f32 %v3362, %v3366
        %3369 = vrot.lane.b32.xlu0 %v3298, 65
        %v3370 = vpop.permute.xlu0 %3369
        %3371 = vrot.lane.b32.xlu0 %v3299, 65
        %v3372 = vpop.permute.xlu0 %3371
        %3375 = vrot.lane.b32.xlu0 %v3298, 1
        %v3376 = vpop.permute.xlu0 %3375
        %3377 = vrot.lane.b32.xlu0 %v3299, 1
        %v3378 = vpop.permute.xlu0 %3377
        %vm3381 = vcmask 7168
        %v3382 = vsel %vm3381, %v3370, %v3376
        %v3383 = vsel %vm3381, %v3372, %v3378
        %v3384 = vlaneseq
        %v3385 = vshrl.u32 %v3384, 7
        %v3386 = vsub.s32 3, %v3385
        %v3387 = vrot.slane %v3302, %v3386
        %v3388 = vmul.f32 %v3382, %v3387
        %v3389 = vmul.f32 %v3383, %v3387
        %3390 = vrot.lane.b32.xlu0 %v3298, 127
        %v3391 = vpop.permute.xlu0 %3390
        %3392 = vrot.lane.b32.xlu0 %v3299, 127
        %v3393 = vpop.permute.xlu0 %3392
        %3396 = vrot.lane.b32.xlu0 %v3298, 63
        %v3397 = vpop.permute.xlu0 %3396
        %3398 = vrot.lane.b32.xlu0 %v3299, 63
        %v3399 = vpop.permute.xlu0 %3398
        %vm3402 = vcmask 515072
        %v3403 = vsel %vm3402, %v3391, %v3397
        %v3404 = vsel %vm3402, %v3393, %v3399
        %v3405 = vlaneseq
        %v3406 = vshrl.u32 %v3405, 7
        %v3407 = vsub.s32 5, %v3406
        %v3408 = vrot.slane %v3302, %v3407
        %v3409 = vmul.f32 %v3403, %v3408
        %v3410 = vmul.f32 %v3404, %v3408
        %3411 = vrot.lane.b32.xlu0 %v3298, 121
        %v3412 = vpop.permute.xlu0 %3411
        %3413 = vrot.lane.b32.xlu0 %v3299, 121
        %v3414 = vpop.permute.xlu0 %3413
        %3417 = vrot.lane.b32.xlu0 %v3298, 57
        %v3418 = vpop.permute.xlu0 %3417
        %3419 = vrot.lane.b32.xlu0 %v3299, 57
        %v3420 = vpop.permute.xlu0 %3419
        %vm3423 = vcmask 465920
        %v3424 = vsel %vm3423, %v3412, %v3418
        %v3425 = vsel %vm3423, %v3414, %v3420
        %v3426 = vlaneseq
        %v3427 = vshrl.u32 %v3426, 7
        %v3428 = vsub.s32 6, %v3427
        %v3429 = vrot.slane %v3302, %v3428
        %v3430 = vmul.f32 %v3424, %v3429
        %v3431 = vmul.f32 %v3425, %v3429
        %3432 = vrot.lane.b32.xlu0 %v3298, 120
        %v3433 = vpop.permute.xlu0 %3432
        %3434 = vrot.lane.b32.xlu0 %v3299, 120
        %v3435 = vpop.permute.xlu0 %3434
        %3438 = vrot.lane.b32.xlu0 %v3298, 56
        %v3439 = vpop.permute.xlu0 %3438
        %3440 = vrot.lane.b32.xlu0 %v3299, 56
        %v3441 = vpop.permute.xlu0 %3440
        %vm3444 = vcmask 457728
        %v3445 = vsel %vm3444, %v3433, %v3439
        %v3446 = vsel %vm3444, %v3435, %v3441
        %v3447 = vlaneseq
        %v3448 = vshrl.u32 %v3447, 7
        %v3449 = vsub.s32 7, %v3448
        %v3450 = vrot.slane %v3302, %v3449
        %v3451 = vmul.f32 %v3445, %v3450
        %v3452 = vmul.f32 %v3446, %v3450
        %3453 = vrot.lane.b32.xlu0 %v3298, 119
        %v3454 = vpop.permute.xlu0 %3453
        %3455 = vrot.lane.b32.xlu0 %v3299, 119
        %v3456 = vpop.permute.xlu0 %3455
        %3459 = vrot.lane.b32.xlu0 %v3298, 55
        %v3460 = vpop.permute.xlu0 %3459
        %3461 = vrot.lane.b32.xlu0 %v3299, 55
        %v3462 = vpop.permute.xlu0 %3461
        %vm3465 = vcmask 449536
        %v3466 = vsel %vm3465, %v3454, %v3460
        %v3467 = vsel %vm3465, %v3456, %v3462
        %v3468 = vlaneseq
        %v3469 = vshrl.u32 %v3468, 7
        %v3470 = vsub.s32 0, %v3469
        %v3471 = vrot.slane %v3303, %v3470
        %v3472 = vmul.f32 %v3466, %v3471
        %v3473 = vmul.f32 %v3467, %v3471
        %v3474 = vpack.c.bf16 %v3326, %v3325
        %v3475 = vpack.c.bf16 %v3347, %v3346
        %v3476 = vpack.c.bf16 %v3368, %v3367
        %v3477 = vpack.c.bf16 %v3389, %v3388
        %v3478 = vpack.c.bf16 %v3299, %v3298
        %v3479 = vpack.c.bf16 %v3410, %v3409
        %v3480 = vpack.c.bf16 %v3431, %v3430
        %v3481 = vpack.c.bf16 %v3452, %v3451
        %v3482 = vpack.c.bf16 %v3473, %v3472
        %v3485 = vunpack.c.l.b16 %v3300
        %v3486 = vunpack.c.h.b16 %v3300
        %v3487 = vunpack.c.l.b16 %v3301
        %v3488 = vunpack.c.h.b16 %v3301
        %v3489 = vpack.c.b16 %v3487, %v3485
        %v3490 = vpack.c.b16 %v3488, %v3486
        %vm3492 = vcmask 130048
        %v3494 = vsel %vm3492, %v3490, 0
        %3496 = vmatprep.subr.bf16.mxu0 0
        %3497 = vmatpush1.bf16.msra.mxu0 %v3474
        %3498 = vmatprep.subr.bf16.mxu0 0
        %3499 = vmatpush1.bf16.msra.mxu0 %v3475
        %3500 = vmatprep.subr.bf16.mxu0 0
        %3501 = vmatpush1.bf16.msra.mxu0 %v3476
        %3502 = vmatprep.subr.bf16.mxu0 0
        %3503 = vmatpush1.bf16.msra.mxu0 %v3477
        %3504 = vmatprep.subr.bf16.mxu0 0
        %3505 = vmatpush1.bf16.msra.mxu0 %v3478
        %3506 = vmatprep.subr.bf16.mxu0 0
        %3507 = vmatpush1.bf16.msra.mxu0 %v3479
        %3508 = vmatprep.subr.bf16.mxu0 0
        %3509 = vmatpush1.bf16.msra.mxu0 %v3480
        %3510 = vmatprep.subr.bf16.mxu0 0
        %3511 = vmatpush1.bf16.msra.mxu0 %v3481
        %3512 = vmatprep.subr.bf16.mxu0 0
        %3513 = vmatpush1.bf16.msra.mxu0 %v3482
        %3514 = vmatprep.subr.bf16.mxu0 0
        %3515 = vmatpush1.bf16.msra.mxu0 0
        %3516 = vmatprep.subr.bf16.mxu0 0
        %3517 = vmatpush1.bf16.msra.mxu0 0
        %3518 = vmatprep.subr.bf16.mxu0 0
        %3519 = vmatpush1.bf16.msra.mxu0 0
        %3520 = vmatprep.subr.bf16.mxu0 0
        %3521 = vmatpush1.bf16.msra.mxu0 0
        %3522 = vmatprep.subr.bf16.mxu0 0
        %3523 = vmatpush1.bf16.msra.mxu0 0
        %3524 = vmatprep.subr.bf16.mxu0 0
        %3525 = vmatpush1.bf16.msra.mxu0 0
        %3526 = vmatprep.subr.bf16.mxu0 0
        %3527 = vmatpush1.bf16.msra.mxu0 0
        %3528 = vmatprep.mubr.bf16.mxu0 %v3494
        %3529 = vmatmul.mubr.bf16.gmra.mrb[0].mxu0 %v3489
        %v3530 = vpop.f32.mrb[0].mxu0
        %v3531 = vadd.f32 0.0, %v3530
        %v3532 = vpop.f32.mrb[0].mxu0
        %v3533 = vpop.f32.mrb[0].mxu0
        %v3534 = vadd.f32 0.0, %v3533
        %v3535 = vpop.f32.mrb[0].mxu0
        %3536 = vdwg.mxu0
        %v3537 = vsel %vm3265, %v3531, 0.0
        %3538 = vadd.xlane.f32.xlu0 %v3537
        %v3539 = vpop.xlane.xlu0 %3538
        %v3540 = vsel %vm3265, %v3534, 0.0
        %3541 = vadd.xlane.f32.xlu0 %v3540
        %v3542 = vpop.xlane.xlu0 %3541
        %v3543 = vmul.f32 %v3539, 0.015625
        %v3544 = vmul.f32 %v3542, 0.015625
        %v3545 = vmul.f32 %v3531, %v3531
        %v3546 = vmul.f32 %v3534, %v3534
        %v3547 = vsel %vm3265, %v3545, 0.0
        %3548 = vadd.xlane.f32.xlu0 %v3547
        %v3549 = vpop.xlane.xlu0 %3548
        %v3550 = vsel %vm3265, %v3546, 0.0
        %3551 = vadd.xlane.f32.xlu0 %v3550
        %v3552 = vpop.xlane.xlu0 %3551
        %v3553 = vmul.f32 %v3549, 0.015625
        %v3554 = vmul.f32 %v3552, 0.015625
        %v3555 = vmul.f32 %v3543, %v3543
        %v3556 = vmul.f32 %v3544, %v3544
        %v3557 = vsub.f32 %v3553, %v3555
        %v3558 = vsub.f32 %v3554, %v3556
        %v3559 = vmax.f32 %v3557, 0.0
        %v3560 = vmax.f32 %v3558, 0.0
        %v3561 = vsub.f32 %v3531, %v3543
        %v3562 = vsub.f32 %v3534, %v3544
        %v3563 = vadd.f32 %v3559, 1e-05
        %v3564 = vadd.f32 %v3560, 1e-05
        %v3565 = vrsqrt.pop %v3563
        %v3566 = vrsqrt.pop %v3564
        %v3567 = vmul.f32 %v3561, %v3565
        %v3568 = vmul.f32 %v3562, %v3566
        %v3569 = vmax.f32 %v3567, 0.0
        %v3570 = vmax.f32 %v3568, 0.0
        %v3571 = vadd.f32 %v3298, %v3569
        %v3572 = vadd.f32 %v3299, %v3570
        %v3573 = vpack.c.bf16 %v3572, %v3571
        %v3574 = vld [vmem:[#allocation10] sm:$0xff]
        %v3575 = vld [vmem:[#allocation10 + $0x8] sm:$0xff]
        %v3576 = vld [vmem:[#allocation10 + $0x10] sm:$0xff]
        %v3577 = vld [vmem:[#allocation10 + $0x18] sm:$0xff]
        %v3578 = vld [vmem:[#allocation10 + $0x20] sm:$0xff]
        %v3579 = vld [vmem:[#allocation10 + $0x28] sm:$0xff]
        %v3580 = vld [vmem:[#allocation10 + $0x30] sm:$0xff]
        %v3581 = vld [vmem:[#allocation10 + $0x38] sm:$0xff]
        %v3590 = vunpack.c.l.b16 %v3574
        %v3591 = vunpack.c.h.b16 %v3574
        %v3592 = vunpack.c.l.b16 %v3575
        %v3593 = vunpack.c.h.b16 %v3575
        %v3594 = vunpack.c.l.b16 %v3576
        %v3595 = vunpack.c.h.b16 %v3576
        %v3596 = vunpack.c.l.b16 %v3577
        %v3597 = vunpack.c.h.b16 %v3577
        %v3598 = vunpack.c.l.b16 %v3578
        %v3599 = vunpack.c.h.b16 %v3578
        %v3600 = vunpack.c.l.b16 %v3579
        %v3601 = vunpack.c.h.b16 %v3579
        %v3602 = vunpack.c.l.b16 %v3580
        %v3603 = vunpack.c.h.b16 %v3580
        %v3604 = vunpack.c.l.b16 %v3581
        %v3605 = vunpack.c.h.b16 %v3581
        %v3606 = vpack.c.b16 %v3592, %v3590
        %v3607 = vpack.c.b16 %v3593, %v3591
        %v3608 = vpack.c.b16 %v3596, %v3594
        %v3609 = vpack.c.b16 %v3597, %v3595
        %v3610 = vpack.c.b16 %v3600, %v3598
        %v3611 = vpack.c.b16 %v3601, %v3599
        %v3612 = vpack.c.b16 %v3604, %v3602
        %v3613 = vpack.c.b16 %v3605, %v3603
        %v3623 = vsel %vm3265, %v3573, 0
        %3625 = vmatprep.subr.bf16.mxu0 %v3607
        %3626 = vmatpush1.bf16.msra.mxu0 %v3606
        %3627 = vmatprep.subr.bf16.mxu0 %v3609
        %3628 = vmatpush1.bf16.msra.mxu0 %v3608
        %3629 = vmatprep.subr.bf16.mxu0 %v3611
        %3630 = vmatpush1.bf16.msra.mxu0 %v3610
        %3631 = vmatprep.subr.bf16.mxu0 %v3613
        %3632 = vmatpush1.bf16.msra.mxu0 %v3612
        %3633 = vmatprep.subr.bf16.mxu0 0
        %3634 = vmatpush1.bf16.msra.mxu0 0
        %3635 = vmatprep.subr.bf16.mxu0 0
        %3636 = vmatpush1.bf16.msra.mxu0 0
        %3637 = vmatprep.subr.bf16.mxu0 0
        %3638 = vmatpush1.bf16.msra.mxu0 0
        %3639 = vmatprep.subr.bf16.mxu0 0
        %3640 = vmatpush1.bf16.msra.mxu0 0
        %3641 = vmatprep.subr.bf16.mxu0 0
        %3642 = vmatpush1.bf16.msra.mxu0 0
        %3643 = vmatprep.subr.bf16.mxu0 0
        %3644 = vmatpush1.bf16.msra.mxu0 0
        %3645 = vmatprep.subr.bf16.mxu0 0
        %3646 = vmatpush1.bf16.msra.mxu0 0
        %3647 = vmatprep.subr.bf16.mxu0 0
        %3648 = vmatpush1.bf16.msra.mxu0 0
        %3649 = vmatprep.subr.bf16.mxu0 0
        %3650 = vmatpush1.bf16.msra.mxu0 0
        %3651 = vmatprep.subr.bf16.mxu0 0
        %3652 = vmatpush1.bf16.msra.mxu0 0
        %3653 = vmatprep.subr.bf16.mxu0 0
        %3654 = vmatpush1.bf16.msra.mxu0 0
        %3655 = vmatprep.subr.bf16.mxu0 0
        %3656 = vmatpush1.bf16.msra.mxu0 0
        %3657 = vmatprep.mubr.bf16.mxu0 0
        %3658 = vmatmul.mubr.bf16.gmra.mrb[0].mxu0 %v3623
        %v3659 = vpop.f32.mrb[0].mxu0
        %v3660 = vadd.f32 0.0, %v3659
        %v3661 = vpop.f32.mrb[0].mxu0
        %v3662 = vadd.f32 0.0, %v3661
        %v3663 = vpop.f32.mrb[0].mxu0
        %v3664 = vadd.f32 0.0, %v3663
        %v3665 = vpop.f32.mrb[0].mxu0
        %v3666 = vadd.f32 0.0, %v3665
        %3667 = vdwg.mxu0
        %v3668 = vld [vmem:[%s4] sm:$0xff]
        %v3669 = vld [vmem:[#allocation7] sm:$0xff]
        %v3670 = vld [vmem:[#allocation7 + $0x8] sm:$0xff]
        %v3671 = vld [vmem:[#allocation7 + $0x10] sm:$0x1]
        %v3672 = vld [vmem:[#allocation7 + $0x18] sm:$0x1]
        %3673 = vrot.lane.b32.xlu0 %v3660, 17
        %v3674 = vpop.permute.xlu0 %3673
        %3675 = vrot.lane.b32.xlu0 %v3664, 17
        %v3676 = vpop.permute.xlu0 %3675
        %3677 = vrot.lane.b32.xlu0 %v3662, 17
        %v3678 = vpop.permute.xlu0 %3677
        %3679 = vrot.lane.b32.xlu0 %v3666, 17
        %v3680 = vpop.permute.xlu0 %3679
        %v3681 = vsel %vm2785, %v3674, %v3678
        %v3682 = vsel %vm2785, %v3676, %v3680
        %v3683 = vsel %vm2785, %v3678, %v3674
        %v3684 = vsel %vm2785, %v3680, %v3676
        %v3685 = vlaneseq
        %v3686 = vshrl.u32 %v3685, 7
        %v3687 = vsub.s32 0, %v3686
        %v3688 = vrot.slane %v3669, %v3687
        %v3689 = vlaneseq
        %v3690 = vshrl.u32 %v3689, 7
        %v3691 = vsub.s32 0, %v3690
        %v3692 = vrot.slane %v3670, %v3691
        %v3693 = vmul.f32 %v3683, %v3688
        %v3694 = vmul.f32 %v3681, %v3692
        %v3695 = vmul.f32 %v3684, %v3688
        %v3696 = vmul.f32 %v3682, %v3692
        %3697 = vrot.lane.b32.xlu0 %v3660, 16
        %v3698 = vpop.permute.xlu0 %3697
        %3699 = vrot.lane.b32.xlu0 %v3664, 16
        %v3700 = vpop.permute.xlu0 %3699
        %3701 = vrot.lane.b32.xlu0 %v3662, 16
        %v3702 = vpop.permute.xlu0 %3701
        %3703 = vrot.lane.b32.xlu0 %v3666, 16
        %v3704 = vpop.permute.xlu0 %3703
        %v3705 = vsel %vm2802, %v3698, %v3702
        %v3706 = vsel %vm2802, %v3700, %v3704
        %v3707 = vsel %vm2802, %v3702, %v3698
        %v3708 = vsel %vm2802, %v3704, %v3700
        %v3709 = vlaneseq
        %v3710 = vshrl.u32 %v3709, 7
        %v3711 = vsub.s32 1, %v3710
        %v3712 = vrot.slane %v3669, %v3711
        %v3713 = vlaneseq
        %v3714 = vshrl.u32 %v3713, 7
        %v3715 = vsub.s32 1, %v3714
        %v3716 = vrot.slane %v3670, %v3715
        %v3717 = vmul.f32 %v3707, %v3712
        %v3718 = vmul.f32 %v3705, %v3716
        %v3719 = vmul.f32 %v3708, %v3712
        %v3720 = vmul.f32 %v3706, %v3716
        %3721 = vrot.lane.b32.xlu0 %v3660, 15
        %v3722 = vpop.permute.xlu0 %3721
        %3723 = vrot.lane.b32.xlu0 %v3664, 15
        %v3724 = vpop.permute.xlu0 %3723
        %3725 = vrot.lane.b32.xlu0 %v3662, 15
        %v3726 = vpop.permute.xlu0 %3725
        %3727 = vrot.lane.b32.xlu0 %v3666, 15
        %v3728 = vpop.permute.xlu0 %3727
        %v3729 = vsel %vm2819, %v3722, %v3726
        %v3730 = vsel %vm2819, %v3724, %v3728
        %v3731 = vsel %vm2819, %v3726, %v3722
        %v3732 = vsel %vm2819, %v3728, %v3724
        %v3733 = vlaneseq
        %v3734 = vshrl.u32 %v3733, 7
        %v3735 = vsub.s32 2, %v3734
        %v3736 = vrot.slane %v3669, %v3735
        %v3737 = vlaneseq
        %v3738 = vshrl.u32 %v3737, 7
        %v3739 = vsub.s32 2, %v3738
        %v3740 = vrot.slane %v3670, %v3739
        %v3741 = vmul.f32 %v3731, %v3736
        %v3742 = vmul.f32 %v3729, %v3740
        %v3743 = vmul.f32 %v3732, %v3736
        %v3744 = vmul.f32 %v3730, %v3740
        %3745 = vrot.lane.b32.xlu0 %v3660, 1
        %v3746 = vpop.permute.xlu0 %3745
        %3747 = vrot.lane.b32.xlu0 %v3664, 1
        %v3748 = vpop.permute.xlu0 %3747
        %3749 = vrot.lane.b32.xlu0 %v3662, 1
        %v3750 = vpop.permute.xlu0 %3749
        %3751 = vrot.lane.b32.xlu0 %v3666, 1
        %v3752 = vpop.permute.xlu0 %3751
        %v3753 = vsel %vm887, %v3746, %v3750
        %v3754 = vsel %vm887, %v3748, %v3752
        %v3755 = vsel %vm887, %v3750, %v3746
        %v3756 = vsel %vm887, %v3752, %v3748
        %v3757 = vlaneseq
        %v3758 = vshrl.u32 %v3757, 7
        %v3759 = vsub.s32 3, %v3758
        %v3760 = vrot.slane %v3669, %v3759
        %v3761 = vlaneseq
        %v3762 = vshrl.u32 %v3761, 7
        %v3763 = vsub.s32 3, %v3762
        %v3764 = vrot.slane %v3670, %v3763
        %v3765 = vmul.f32 %v3755, %v3760
        %v3766 = vmul.f32 %v3753, %v3764
        %v3767 = vmul.f32 %v3756, %v3760
        %v3768 = vmul.f32 %v3754, %v3764
        %3769 = vrot.lane.b32.xlu0 %v3660, 127
        %v3770 = vpop.permute.xlu0 %3769
        %3771 = vrot.lane.b32.xlu0 %v3664, 127
        %v3772 = vpop.permute.xlu0 %3771
        %3773 = vrot.lane.b32.xlu0 %v3662, 127
        %v3774 = vpop.permute.xlu0 %3773
        %3775 = vrot.lane.b32.xlu0 %v3666, 127
        %v3776 = vpop.permute.xlu0 %3775
        %v3777 = vsel %vm952, %v3770, %v3774
        %v3778 = vsel %vm952, %v3772, %v3776
        %v3779 = vsel %vm952, %v3774, %v3770
        %v3780 = vsel %vm952, %v3776, %v3772
        %v3781 = vlaneseq
        %v3782 = vshrl.u32 %v3781, 7
        %v3783 = vsub.s32 5, %v3782
        %v3784 = vrot.slane %v3669, %v3783
        %v3785 = vlaneseq
        %v3786 = vshrl.u32 %v3785, 7
        %v3787 = vsub.s32 5, %v3786
        %v3788 = vrot.slane %v3670, %v3787
        %v3789 = vmul.f32 %v3777, %v3784
        %v3790 = vmul.f32 %v3779, %v3788
        %v3791 = vmul.f32 %v3778, %v3784
        %v3792 = vmul.f32 %v3780, %v3788
        %3793 = vrot.lane.b32.xlu0 %v3660, 113
        %v3794 = vpop.permute.xlu0 %3793
        %3795 = vrot.lane.b32.xlu0 %v3664, 113
        %v3796 = vpop.permute.xlu0 %3795
        %3797 = vrot.lane.b32.xlu0 %v3662, 113
        %v3798 = vpop.permute.xlu0 %3797
        %3799 = vrot.lane.b32.xlu0 %v3666, 113
        %v3800 = vpop.permute.xlu0 %3799
        %v3801 = vsel %vm2901, %v3794, %v3798
        %v3802 = vsel %vm2901, %v3796, %v3800
        %v3803 = vsel %vm2901, %v3798, %v3794
        %v3804 = vsel %vm2901, %v3800, %v3796
        %v3805 = vlaneseq
        %v3806 = vshrl.u32 %v3805, 7
        %v3807 = vsub.s32 6, %v3806
        %v3808 = vrot.slane %v3669, %v3807
        %v3809 = vlaneseq
        %v3810 = vshrl.u32 %v3809, 7
        %v3811 = vsub.s32 6, %v3810
        %v3812 = vrot.slane %v3670, %v3811
        %v3813 = vmul.f32 %v3801, %v3808
        %v3814 = vmul.f32 %v3803, %v3812
        %v3815 = vmul.f32 %v3802, %v3808
        %v3816 = vmul.f32 %v3804, %v3812
        %3817 = vrot.lane.b32.xlu0 %v3660, 112
        %v3818 = vpop.permute.xlu0 %3817
        %3819 = vrot.lane.b32.xlu0 %v3664, 112
        %v3820 = vpop.permute.xlu0 %3819
        %3821 = vrot.lane.b32.xlu0 %v3662, 112
        %v3822 = vpop.permute.xlu0 %3821
        %3823 = vrot.lane.b32.xlu0 %v3666, 112
        %v3824 = vpop.permute.xlu0 %3823
        %v3825 = vsel %vm2918, %v3818, %v3822
        %v3826 = vsel %vm2918, %v3820, %v3824
        %v3827 = vsel %vm2918, %v3822, %v3818
        %v3828 = vsel %vm2918, %v3824, %v3820
        %v3829 = vlaneseq
        %v3830 = vshrl.u32 %v3829, 7
        %v3831 = vsub.s32 7, %v3830
        %v3832 = vrot.slane %v3669, %v3831
        %v3833 = vlaneseq
        %v3834 = vshrl.u32 %v3833, 7
        %v3835 = vsub.s32 7, %v3834
        %v3836 = vrot.slane %v3670, %v3835
        %v3837 = vmul.f32 %v3825, %v3832
        %v3838 = vmul.f32 %v3827, %v3836
        %v3839 = vmul.f32 %v3826, %v3832
        %v3840 = vmul.f32 %v3828, %v3836
        %3841 = vrot.lane.b32.xlu0 %v3660, 111
        %v3842 = vpop.permute.xlu0 %3841
        %3843 = vrot.lane.b32.xlu0 %v3664, 111
        %v3844 = vpop.permute.xlu0 %3843
        %3845 = vrot.lane.b32.xlu0 %v3662, 111
        %v3846 = vpop.permute.xlu0 %3845
        %3847 = vrot.lane.b32.xlu0 %v3666, 111
        %v3848 = vpop.permute.xlu0 %3847
        %v3849 = vsel %vm2935, %v3842, %v3846
        %v3850 = vsel %vm2935, %v3844, %v3848
        %v3851 = vsel %vm2935, %v3846, %v3842
        %v3852 = vsel %vm2935, %v3848, %v3844
        %v3853 = vlaneseq
        %v3854 = vshrl.u32 %v3853, 7
        %v3855 = vsub.s32 0, %v3854
        %v3856 = vrot.slane %v3671, %v3855
        %v3857 = vlaneseq
        %v3858 = vshrl.u32 %v3857, 7
        %v3859 = vsub.s32 0, %v3858
        %v3860 = vrot.slane %v3672, %v3859
        %v3861 = vmul.f32 %v3849, %v3856
        %v3862 = vmul.f32 %v3851, %v3860
        %v3863 = vmul.f32 %v3850, %v3856
        %v3864 = vmul.f32 %v3852, %v3860
        %v3865 = vpack.c.bf16 %v3695, %v3693
        %v3866 = vpack.c.bf16 %v3696, %v3694
        %v3867 = vpack.c.bf16 %v3719, %v3717
        %v3868 = vpack.c.bf16 %v3720, %v3718
        %v3869 = vpack.c.bf16 %v3743, %v3741
        %v3870 = vpack.c.bf16 %v3744, %v3742
        %v3871 = vpack.c.bf16 %v3767, %v3765
        %v3872 = vpack.c.bf16 %v3768, %v3766
        %v3873 = vpack.c.bf16 %v3664, %v3660
        %v3874 = vpack.c.bf16 %v3666, %v3662
        %v3875 = vpack.c.bf16 %v3791, %v3789
        %v3876 = vpack.c.bf16 %v3792, %v3790
        %v3877 = vpack.c.bf16 %v3815, %v3813
        %v3878 = vpack.c.bf16 %v3816, %v3814
        %v3879 = vpack.c.bf16 %v3839, %v3837
        %v3880 = vpack.c.bf16 %v3840, %v3838
        %v3881 = vpack.c.bf16 %v3863, %v3861
        %v3882 = vpack.c.bf16 %v3864, %v3862
        %v3884 = vunpack.c.l.b16 %v3668
        %v3885 = vunpack.c.h.b16 %v3668
        %v3886 = vpack.c.b16 %v3884, %v3884
        %v3887 = vpack.c.b16 %v3885, %v3885
        %v3890 = vsel %vm3492, %v3887, 0
        %3892 = vmatprep.subr.bf16.mxu0 %v3866
        %3893 = vmatpush1.bf16.msra.mxu0 %v3865
        %3894 = vmatprep.subr.bf16.mxu0 %v3868
        %3895 = vmatpush1.bf16.msra.mxu0 %v3867
        %3896 = vmatprep.subr.bf16.mxu0 %v3870
        %3897 = vmatpush1.bf16.msra.mxu0 %v3869
        %3898 = vmatprep.subr.bf16.mxu0 %v3872
        %3899 = vmatpush1.bf16.msra.mxu0 %v3871
        %3900 = vmatprep.subr.bf16.mxu0 %v3874
        %3901 = vmatpush1.bf16.msra.mxu0 %v3873
        %3902 = vmatprep.subr.bf16.mxu0 %v3876
        %3903 = vmatpush1.bf16.msra.mxu0 %v3875
        %3904 = vmatprep.subr.bf16.mxu0 %v3878
        %3905 = vmatpush1.bf16.msra.mxu0 %v3877
        %3906 = vmatprep.subr.bf16.mxu0 %v3880
        %3907 = vmatpush1.bf16.msra.mxu0 %v3879
        %3908 = vmatprep.subr.bf16.mxu0 %v3882
        %3909 = vmatpush1.bf16.msra.mxu0 %v3881
        %3910 = vmatprep.subr.bf16.mxu0 0
        %3911 = vmatpush1.bf16.msra.mxu0 0
        %3912 = vmatprep.subr.bf16.mxu0 0
        %3913 = vmatpush1.bf16.msra.mxu0 0
        %3914 = vmatprep.subr.bf16.mxu0 0
        %3915 = vmatpush1.bf16.msra.mxu0 0
        %3916 = vmatprep.subr.bf16.mxu0 0
        %3917 = vmatpush1.bf16.msra.mxu0 0
        %3918 = vmatprep.subr.bf16.mxu0 0
        %3919 = vmatpush1.bf16.msra.mxu0 0
        %3920 = vmatprep.subr.bf16.mxu0 0
        %3921 = vmatpush1.bf16.msra.mxu0 0
        %3922 = vmatprep.subr.bf16.mxu0 0
        %3923 = vmatpush1.bf16.msra.mxu0 0
        %3924 = vmatprep.mubr.bf16.mxu0 %v3890
        %3925 = vmatmul.mubr.bf16.gmra.mrb[0].mxu0 %v3886
        %v3926 = vpop.f32.mrb[0].mxu0
        %v3927 = vadd.f32 0.0, %v3926
        %v3928 = vpop.f32.mrb[0].mxu0
        %v3929 = vadd.f32 0.0, %v3928
        %v3930 = vpop.f32.mrb[0].mxu0
        %v3931 = vpop.f32.mrb[0].mxu0
        %3932 = vdwg.mxu0
        %v3933 = vadd.f32 %v3927, %v3929
        %3934 = vadd.xlane.f32.xlu0 %v3933
        %v3935 = vpop.xlane.xlu0 %3934
        %v3936 = vmul.f32 %v3935, 0.00390625
        %v3937 = vmul.f32 %v3927, %v3927
        %v3938 = vmul.f32 %v3929, %v3929
        %v3939 = vadd.f32 %v3937, %v3938
        %3940 = vadd.xlane.f32.xlu0 %v3939
        %v3941 = vpop.xlane.xlu0 %3940
        %v3942 = vmul.f32 %v3941, 0.00390625
        %v3943 = vmul.f32 %v3936, %v3936
        %v3944 = vsub.f32 %v3942, %v3943
        %v3945 = vmax.f32 %v3944, 0.0
        %v3946 = vsub.f32 %v3927, %v3936
        %v3947 = vsub.f32 %v3929, %v3936
        %v3948 = vadd.f32 %v3945, 1e-05
        %v3949 = vrsqrt.pop %v3948
        %v3950 = vmul.f32 %v3946, %v3949
        %v3951 = vmul.f32 %v3947, %v3949
        %v3952 = vmax.f32 %v3950, 0.0
        %v3953 = vmax.f32 %v3951, 0.0
        %v3954 = vpack.c.bf16 %v3952, %v3952
        %v3955 = vpack.c.bf16 %v3953, %v3953
        %v3956 = vld [vmem:[%s14] sm:$0xff]
        %v3957 = vld [vmem:[%s14 + $0x8] sm:$0xff]
        %v3958 = vld [vmem:[%s14 + $0x10] sm:$0xff]
        %v3959 = vld [vmem:[%s14 + $0x18] sm:$0xff]
        %v3960 = vld [vmem:[%s14 + $0x20] sm:$0xff]
        %v3961 = vld [vmem:[%s14 + $0x28] sm:$0xff]
        %v3962 = vld [vmem:[%s14 + $0x30] sm:$0xff]
        %v3963 = vld [vmem:[%s14 + $0x38] sm:$0xff]
        %v3964 = vld [vmem:[%s14 + $0x40] sm:$0xff]
        %v3965 = vld [vmem:[%s14 + $0x48] sm:$0xff]
        %v3966 = vld [vmem:[%s14 + $0x50] sm:$0xff]
        %v3967 = vld [vmem:[%s14 + $0x58] sm:$0xff]
        %v3968 = vld [vmem:[%s14 + $0x60] sm:$0xff]
        %v3969 = vld [vmem:[%s14 + $0x68] sm:$0xff]
        %v3970 = vld [vmem:[%s14 + $0x70] sm:$0xff]
        %v3971 = vld [vmem:[%s14 + $0x78] sm:$0xff]
        %v3972 = vld [vmem:[%s14 + $0x80] sm:$0xff]
        %v3973 = vld [vmem:[%s14 + $0x88] sm:$0xff]
        %v3974 = vld [vmem:[%s14 + $0x90] sm:$0xff]
        %v3975 = vld [vmem:[%s14 + $0x98] sm:$0xff]
        %v3976 = vld [vmem:[%s14 + $0xa0] sm:$0xff]
        %v3977 = vld [vmem:[%s14 + $0xa8] sm:$0xff]
        %v3978 = vld [vmem:[%s14 + $0xb0] sm:$0xff]
        %v3979 = vld [vmem:[%s14 + $0xb8] sm:$0xff]
        %v3980 = vld [vmem:[%s14 + $0xc0] sm:$0xff]
        %v3981 = vld [vmem:[%s14 + $0xc8] sm:$0xff]
        %v3982 = vld [vmem:[%s14 + $0xd0] sm:$0xff]
        %v3983 = vld [vmem:[%s14 + $0xd8] sm:$0xff]
        %v3984 = vld [vmem:[%s14 + $0xe0] sm:$0xff]
        %v3985 = vld [vmem:[%s14 + $0xe8] sm:$0xff]
        %v3986 = vld [vmem:[%s14 + $0xf0] sm:$0xff]
        %v3987 = vld [vmem:[%s14 + $0xf8] sm:$0xff]
        %v3988 = vld [vmem:[%s14 + $0x100] sm:$0xff]
        %v3989 = vld [vmem:[%s14 + $0x108] sm:$0xff]
        %v3990 = vld [vmem:[%s14 + $0x110] sm:$0xff]
        %v3991 = vld [vmem:[%s14 + $0x118] sm:$0xff]
        %v3992 = vld [vmem:[%s14 + $0x120] sm:$0xff]
        %v3993 = vld [vmem:[%s14 + $0x128] sm:$0xff]
        %v3994 = vld [vmem:[%s14 + $0x130] sm:$0xff]
        %v3995 = vld [vmem:[%s14 + $0x138] sm:$0xff]
        %v3996 = vld [vmem:[%s14 + $0x140] sm:$0xff]
        %v3997 = vld [vmem:[%s14 + $0x148] sm:$0xff]
        %v3998 = vld [vmem:[%s14 + $0x150] sm:$0xff]
        %v3999 = vld [vmem:[%s14 + $0x158] sm:$0xff]
        %v4000 = vld [vmem:[%s14 + $0x160] sm:$0xff]
        %v4001 = vld [vmem:[%s14 + $0x168] sm:$0xff]
        %v4002 = vld [vmem:[%s14 + $0x170] sm:$0xff]
        %v4003 = vld [vmem:[%s14 + $0x178] sm:$0xff]
        %v4004 = vld [vmem:[%s14 + $0x180] sm:$0xff]
        %v4005 = vld [vmem:[%s14 + $0x188] sm:$0xff]
        %v4006 = vld [vmem:[%s14 + $0x190] sm:$0xff]
        %v4007 = vld [vmem:[%s14 + $0x198] sm:$0xff]
        %v4008 = vld [vmem:[%s14 + $0x1a0] sm:$0xff]
        %v4009 = vld [vmem:[%s14 + $0x1a8] sm:$0xff]
        %v4010 = vld [vmem:[%s14 + $0x1b0] sm:$0xff]
        %v4011 = vld [vmem:[%s14 + $0x1b8] sm:$0xff]
        %v4012 = vld [vmem:[%s14 + $0x1c0] sm:$0xff]
        %v4013 = vld [vmem:[%s14 + $0x1c8] sm:$0xff]
        %v4014 = vld [vmem:[%s14 + $0x1d0] sm:$0xff]
        %v4015 = vld [vmem:[%s14 + $0x1d8] sm:$0xff]
        %v4016 = vld [vmem:[%s14 + $0x1e0] sm:$0xff]
        %v4017 = vld [vmem:[%s14 + $0x1e8] sm:$0xff]
        %v4018 = vld [vmem:[%s14 + $0x1f0] sm:$0xff]
        %v4019 = vld [vmem:[%s14 + $0x1f8] sm:$0xff]
        %v4020 = vld [vmem:[%s14 + $0x200] sm:$0xff]
        %v4021 = vld [vmem:[%s14 + $0x208] sm:$0xff]
        %v4022 = vld [vmem:[%s14 + $0x210] sm:$0xff]
        %v4023 = vld [vmem:[%s14 + $0x218] sm:$0xff]
        %v4024 = vld [vmem:[%s14 + $0x220] sm:$0xff]
        %v4025 = vld [vmem:[%s14 + $0x228] sm:$0xff]
        %v4026 = vld [vmem:[%s14 + $0x230] sm:$0xff]
        %v4027 = vld [vmem:[%s14 + $0x238] sm:$0xff]
        %v4028 = vld [vmem:[%s14 + $0x240] sm:$0xff]
        %v4029 = vld [vmem:[%s14 + $0x248] sm:$0xff]
        %v4030 = vld [vmem:[%s14 + $0x250] sm:$0xff]
        %v4031 = vld [vmem:[%s14 + $0x258] sm:$0xff]
        %v4032 = vld [vmem:[%s14 + $0x260] sm:$0xff]
        %v4033 = vld [vmem:[%s14 + $0x268] sm:$0xff]
        %v4034 = vld [vmem:[%s14 + $0x270] sm:$0xff]
        %v4035 = vld [vmem:[%s14 + $0x278] sm:$0xff]
        %v4036 = vld [vmem:[%s14 + $0x280] sm:$0xff]
        %v4037 = vld [vmem:[%s14 + $0x288] sm:$0xff]
        %v4038 = vld [vmem:[%s14 + $0x290] sm:$0xff]
        %v4039 = vld [vmem:[%s14 + $0x298] sm:$0xff]
        %v4040 = vld [vmem:[%s14 + $0x2a0] sm:$0xff]
        %v4041 = vld [vmem:[%s14 + $0x2a8] sm:$0xff]
        %v4042 = vld [vmem:[%s14 + $0x2b0] sm:$0xff]
        %v4043 = vld [vmem:[%s14 + $0x2b8] sm:$0xff]
        %v4044 = vld [vmem:[%s14 + $0x2c0] sm:$0xff]
        %v4045 = vld [vmem:[%s14 + $0x2c8] sm:$0xff]
        %v4046 = vld [vmem:[%s14 + $0x2d0] sm:$0xff]
        %v4047 = vld [vmem:[%s14 + $0x2d8] sm:$0xff]
        %v4048 = vld [vmem:[%s14 + $0x2e0] sm:$0xff]
        %v4049 = vld [vmem:[%s14 + $0x2e8] sm:$0xff]
        %v4050 = vld [vmem:[%s14 + $0x2f0] sm:$0xff]
        %v4051 = vld [vmem:[%s14 + $0x2f8] sm:$0xff]
        %v4052 = vld [vmem:[%s14 + $0x300] sm:$0xff]
        %v4053 = vld [vmem:[%s14 + $0x308] sm:$0xff]
        %v4054 = vld [vmem:[%s14 + $0x310] sm:$0xff]
        %v4055 = vld [vmem:[%s14 + $0x318] sm:$0xff]
        %v4056 = vld [vmem:[%s14 + $0x320] sm:$0xff]
        %v4057 = vld [vmem:[%s14 + $0x328] sm:$0xff]
        %v4058 = vld [vmem:[%s14 + $0x330] sm:$0xff]
        %v4059 = vld [vmem:[%s14 + $0x338] sm:$0xff]
        %v4060 = vld [vmem:[%s14 + $0x340] sm:$0xff]
        %v4061 = vld [vmem:[%s14 + $0x348] sm:$0xff]
        %v4062 = vld [vmem:[%s14 + $0x350] sm:$0xff]
        %v4063 = vld [vmem:[%s14 + $0x358] sm:$0xff]
        %v4064 = vld [vmem:[%s14 + $0x360] sm:$0xff]
        %v4065 = vld [vmem:[%s14 + $0x368] sm:$0xff]
        %v4066 = vld [vmem:[%s14 + $0x370] sm:$0xff]
        %v4067 = vld [vmem:[%s14 + $0x378] sm:$0xff]
        %v4068 = vld [vmem:[%s14 + $0x380] sm:$0xff]
        %v4069 = vld [vmem:[%s14 + $0x388] sm:$0xff]
        %v4070 = vld [vmem:[%s14 + $0x390] sm:$0xff]
        %v4071 = vld [vmem:[%s14 + $0x398] sm:$0xff]
        %v4072 = vld [vmem:[%s14 + $0x3a0] sm:$0xff]
        %v4073 = vld [vmem:[%s14 + $0x3a8] sm:$0xff]
        %v4074 = vld [vmem:[%s14 + $0x3b0] sm:$0xff]
        %v4075 = vld [vmem:[%s14 + $0x3b8] sm:$0xff]
        %v4076 = vld [vmem:[%s14 + $0x3c0] sm:$0xff]
        %v4077 = vld [vmem:[%s14 + $0x3c8] sm:$0xff]
        %v4078 = vld [vmem:[%s14 + $0x3d0] sm:$0xff]
        %v4079 = vld [vmem:[%s14 + $0x3d8] sm:$0xff]
        %v4080 = vld [vmem:[%s14 + $0x3e0] sm:$0xff]
        %v4081 = vld [vmem:[%s14 + $0x3e8] sm:$0xff]
        %v4082 = vld [vmem:[%s14 + $0x3f0] sm:$0xff]
        %v4083 = vld [vmem:[%s14 + $0x3f8] sm:$0xff]
        %v4212 = vunpack.c.l.b16 %v3956
        %v4213 = vunpack.c.h.b16 %v3956
        %v4214 = vunpack.c.l.b16 %v3957
        %v4215 = vunpack.c.h.b16 %v3957
        %v4216 = vunpack.c.l.b16 %v3958
        %v4217 = vunpack.c.h.b16 %v3958
        %v4218 = vunpack.c.l.b16 %v3959
        %v4219 = vunpack.c.h.b16 %v3959
        %v4220 = vunpack.c.l.b16 %v3960
        %v4221 = vunpack.c.h.b16 %v3960
        %v4222 = vunpack.c.l.b16 %v3961
        %v4223 = vunpack.c.h.b16 %v3961
        %v4224 = vunpack.c.l.b16 %v3962
        %v4225 = vunpack.c.h.b16 %v3962
        %v4226 = vunpack.c.l.b16 %v3963
        %v4227 = vunpack.c.h.b16 %v3963
        %v4228 = vunpack.c.l.b16 %v3964
        %v4229 = vunpack.c.h.b16 %v3964
        %v4230 = vunpack.c.l.b16 %v3965
        %v4231 = vunpack.c.h.b16 %v3965
        %v4232 = vunpack.c.l.b16 %v3966
        %v4233 = vunpack.c.h.b16 %v3966
        %v4234 = vunpack.c.l.b16 %v3967
        %v4235 = vunpack.c.h.b16 %v3967
        %v4236 = vunpack.c.l.b16 %v3968
        %v4237 = vunpack.c.h.b16 %v3968
        %v4238 = vunpack.c.l.b16 %v3969
        %v4239 = vunpack.c.h.b16 %v3969
        %v4240 = vunpack.c.l.b16 %v3970
        %v4241 = vunpack.c.h.b16 %v3970
        %v4242 = vunpack.c.l.b16 %v3971
        %v4243 = vunpack.c.h.b16 %v3971
        %v4244 = vunpack.c.l.b16 %v3972
        %v4245 = vunpack.c.h.b16 %v3972
        %v4246 = vunpack.c.l.b16 %v3973
        %v4247 = vunpack.c.h.b16 %v3973
        %v4248 = vunpack.c.l.b16 %v3974
        %v4249 = vunpack.c.h.b16 %v3974
        %v4250 = vunpack.c.l.b16 %v3975
        %v4251 = vunpack.c.h.b16 %v3975
        %v4252 = vunpack.c.l.b16 %v3976
        %v4253 = vunpack.c.h.b16 %v3976
        %v4254 = vunpack.c.l.b16 %v3977
        %v4255 = vunpack.c.h.b16 %v3977
        %v4256 = vunpack.c.l.b16 %v3978
        %v4257 = vunpack.c.h.b16 %v3978
        %v4258 = vunpack.c.l.b16 %v3979
        %v4259 = vunpack.c.h.b16 %v3979
        %v4260 = vunpack.c.l.b16 %v3980
        %v4261 = vunpack.c.h.b16 %v3980
        %v4262 = vunpack.c.l.b16 %v3981
        %v4263 = vunpack.c.h.b16 %v3981
        %v4264 = vunpack.c.l.b16 %v3982
        %v4265 = vunpack.c.h.b16 %v3982
        %v4266 = vunpack.c.l.b16 %v3983
        %v4267 = vunpack.c.h.b16 %v3983
        %v4268 = vunpack.c.l.b16 %v3984
        %v4269 = vunpack.c.h.b16 %v3984
        %v4270 = vunpack.c.l.b16 %v3985
        %v4271 = vunpack.c.h.b16 %v3985
        %v4272 = vunpack.c.l.b16 %v3986
        %v4273 = vunpack.c.h.b16 %v3986
        %v4274 = vunpack.c.l.b16 %v3987
        %v4275 = vunpack.c.h.b16 %v3987
        %v4276 = vunpack.c.l.b16 %v3988
        %v4277 = vunpack.c.h.b16 %v3988
        %v4278 = vunpack.c.l.b16 %v3989
        %v4279 = vunpack.c.h.b16 %v3989
        %v4280 = vunpack.c.l.b16 %v3990
        %v4281 = vunpack.c.h.b16 %v3990
        %v4282 = vunpack.c.l.b16 %v3991
        %v4283 = vunpack.c.h.b16 %v3991
        %v4284 = vunpack.c.l.b16 %v3992
        %v4285 = vunpack.c.h.b16 %v3992
        %v4286 = vunpack.c.l.b16 %v3993
        %v4287 = vunpack.c.h.b16 %v3993
        %v4288 = vunpack.c.l.b16 %v3994
        %v4289 = vunpack.c.h.b16 %v3994
        %v4290 = vunpack.c.l.b16 %v3995
        %v4291 = vunpack.c.h.b16 %v3995
        %v4292 = vunpack.c.l.b16 %v3996
        %v4293 = vunpack.c.h.b16 %v3996
        %v4294 = vunpack.c.l.b16 %v3997
        %v4295 = vunpack.c.h.b16 %v3997
        %v4296 = vunpack.c.l.b16 %v3998
        %v4297 = vunpack.c.h.b16 %v3998
        %v4298 = vunpack.c.l.b16 %v3999
        %v4299 = vunpack.c.h.b16 %v3999
        %v4300 = vunpack.c.l.b16 %v4000
        %v4301 = vunpack.c.h.b16 %v4000
        %v4302 = vunpack.c.l.b16 %v4001
        %v4303 = vunpack.c.h.b16 %v4001
        %v4304 = vunpack.c.l.b16 %v4002
        %v4305 = vunpack.c.h.b16 %v4002
        %v4306 = vunpack.c.l.b16 %v4003
        %v4307 = vunpack.c.h.b16 %v4003
        %v4308 = vunpack.c.l.b16 %v4004
        %v4309 = vunpack.c.h.b16 %v4004
        %v4310 = vunpack.c.l.b16 %v4005
        %v4311 = vunpack.c.h.b16 %v4005
        %v4312 = vunpack.c.l.b16 %v4006
        %v4313 = vunpack.c.h.b16 %v4006
        %v4314 = vunpack.c.l.b16 %v4007
        %v4315 = vunpack.c.h.b16 %v4007
        %v4316 = vunpack.c.l.b16 %v4008
        %v4317 = vunpack.c.h.b16 %v4008
        %v4318 = vunpack.c.l.b16 %v4009
        %v4319 = vunpack.c.h.b16 %v4009
        %v4320 = vunpack.c.l.b16 %v4010
        %v4321 = vunpack.c.h.b16 %v4010
        %v4322 = vunpack.c.l.b16 %v4011
        %v4323 = vunpack.c.h.b16 %v4011
        %v4324 = vunpack.c.l.b16 %v4012
        %v4325 = vunpack.c.h.b16 %v4012
        %v4326 = vunpack.c.l.b16 %v4013
        %v4327 = vunpack.c.h.b16 %v4013
        %v4328 = vunpack.c.l.b16 %v4014
        %v4329 = vunpack.c.h.b16 %v4014
        %v4330 = vunpack.c.l.b16 %v4015
        %v4331 = vunpack.c.h.b16 %v4015
        %v4332 = vunpack.c.l.b16 %v4016
        %v4333 = vunpack.c.h.b16 %v4016
        %v4334 = vunpack.c.l.b16 %v4017
        %v4335 = vunpack.c.h.b16 %v4017
        %v4336 = vunpack.c.l.b16 %v4018
        %v4337 = vunpack.c.h.b16 %v4018
        %v4338 = vunpack.c.l.b16 %v4019
        %v4339 = vunpack.c.h.b16 %v4019
        %v4340 = vunpack.c.l.b16 %v4020
        %v4341 = vunpack.c.h.b16 %v4020
        %v4342 = vunpack.c.l.b16 %v4021
        %v4343 = vunpack.c.h.b16 %v4021
        %v4344 = vunpack.c.l.b16 %v4022
        %v4345 = vunpack.c.h.b16 %v4022
        %v4346 = vunpack.c.l.b16 %v4023
        %v4347 = vunpack.c.h.b16 %v4023
        %v4348 = vunpack.c.l.b16 %v4024
        %v4349 = vunpack.c.h.b16 %v4024
        %v4350 = vunpack.c.l.b16 %v4025
        %v4351 = vunpack.c.h.b16 %v4025
        %v4352 = vunpack.c.l.b16 %v4026
        %v4353 = vunpack.c.h.b16 %v4026
        %v4354 = vunpack.c.l.b16 %v4027
        %v4355 = vunpack.c.h.b16 %v4027
        %v4356 = vunpack.c.l.b16 %v4028
        %v4357 = vunpack.c.h.b16 %v4028
        %v4358 = vunpack.c.l.b16 %v4029
        %v4359 = vunpack.c.h.b16 %v4029
        %v4360 = vunpack.c.l.b16 %v4030
        %v4361 = vunpack.c.h.b16 %v4030
        %v4362 = vunpack.c.l.b16 %v4031
        %v4363 = vunpack.c.h.b16 %v4031
        %v4364 = vunpack.c.l.b16 %v4032
        %v4365 = vunpack.c.h.b16 %v4032
        %v4366 = vunpack.c.l.b16 %v4033
        %v4367 = vunpack.c.h.b16 %v4033
        %v4368 = vunpack.c.l.b16 %v4034
        %v4369 = vunpack.c.h.b16 %v4034
        %v4370 = vunpack.c.l.b16 %v4035
        %v4371 = vunpack.c.h.b16 %v4035
        %v4372 = vunpack.c.l.b16 %v4036
        %v4373 = vunpack.c.h.b16 %v4036
        %v4374 = vunpack.c.l.b16 %v4037
        %v4375 = vunpack.c.h.b16 %v4037
        %v4376 = vunpack.c.l.b16 %v4038
        %v4377 = vunpack.c.h.b16 %v4038
        %v4378 = vunpack.c.l.b16 %v4039
        %v4379 = vunpack.c.h.b16 %v4039
        %v4380 = vunpack.c.l.b16 %v4040
        %v4381 = vunpack.c.h.b16 %v4040
        %v4382 = vunpack.c.l.b16 %v4041
        %v4383 = vunpack.c.h.b16 %v4041
        %v4384 = vunpack.c.l.b16 %v4042
        %v4385 = vunpack.c.h.b16 %v4042
        %v4386 = vunpack.c.l.b16 %v4043
        %v4387 = vunpack.c.h.b16 %v4043
        %v4388 = vunpack.c.l.b16 %v4044
        %v4389 = vunpack.c.h.b16 %v4044
        %v4390 = vunpack.c.l.b16 %v4045
        %v4391 = vunpack.c.h.b16 %v4045
        %v4392 = vunpack.c.l.b16 %v4046
        %v4393 = vunpack.c.h.b16 %v4046
        %v4394 = vunpack.c.l.b16 %v4047
        %v4395 = vunpack.c.h.b16 %v4047
        %v4396 = vunpack.c.l.b16 %v4048
        %v4397 = vunpack.c.h.b16 %v4048
        %v4398 = vunpack.c.l.b16 %v4049
        %v4399 = vunpack.c.h.b16 %v4049
        %v4400 = vunpack.c.l.b16 %v4050
        %v4401 = vunpack.c.h.b16 %v4050
        %v4402 = vunpack.c.l.b16 %v4051
        %v4403 = vunpack.c.h.b16 %v4051
        %v4404 = vunpack.c.l.b16 %v4052
        %v4405 = vunpack.c.h.b16 %v4052
        %v4406 = vunpack.c.l.b16 %v4053
        %v4407 = vunpack.c.h.b16 %v4053
        %v4408 = vunpack.c.l.b16 %v4054
        %v4409 = vunpack.c.h.b16 %v4054
        %v4410 = vunpack.c.l.b16 %v4055
        %v4411 = vunpack.c.h.b16 %v4055
        %v4412 = vunpack.c.l.b16 %v4056
        %v4413 = vunpack.c.h.b16 %v4056
        %v4414 = vunpack.c.l.b16 %v4057
        %v4415 = vunpack.c.h.b16 %v4057
        %v4416 = vunpack.c.l.b16 %v4058
        %v4417 = vunpack.c.h.b16 %v4058
        %v4418 = vunpack.c.l.b16 %v4059
        %v4419 = vunpack.c.h.b16 %v4059
        %v4420 = vunpack.c.l.b16 %v4060
        %v4421 = vunpack.c.h.b16 %v4060
        %v4422 = vunpack.c.l.b16 %v4061
        %v4423 = vunpack.c.h.b16 %v4061
        %v4424 = vunpack.c.l.b16 %v4062
        %v4425 = vunpack.c.h.b16 %v4062
        %v4426 = vunpack.c.l.b16 %v4063
        %v4427 = vunpack.c.h.b16 %v4063
        %v4428 = vunpack.c.l.b16 %v4064
        %v4429 = vunpack.c.h.b16 %v4064
        %v4430 = vunpack.c.l.b16 %v4065
        %v4431 = vunpack.c.h.b16 %v4065
        %v4432 = vunpack.c.l.b16 %v4066
        %v4433 = vunpack.c.h.b16 %v4066
        %v4434 = vunpack.c.l.b16 %v4067
        %v4435 = vunpack.c.h.b16 %v4067
        %v4436 = vunpack.c.l.b16 %v4068
        %v4437 = vunpack.c.h.b16 %v4068
        %v4438 = vunpack.c.l.b16 %v4069
        %v4439 = vunpack.c.h.b16 %v4069
        %v4440 = vunpack.c.l.b16 %v4070
        %v4441 = vunpack.c.h.b16 %v4070
        %v4442 = vunpack.c.l.b16 %v4071
        %v4443 = vunpack.c.h.b16 %v4071
        %v4444 = vunpack.c.l.b16 %v4072
        %v4445 = vunpack.c.h.b16 %v4072
        %v4446 = vunpack.c.l.b16 %v4073
        %v4447 = vunpack.c.h.b16 %v4073
        %v4448 = vunpack.c.l.b16 %v4074
        %v4449 = vunpack.c.h.b16 %v4074
        %v4450 = vunpack.c.l.b16 %v4075
        %v4451 = vunpack.c.h.b16 %v4075
        %v4452 = vunpack.c.l.b16 %v4076
        %v4453 = vunpack.c.h.b16 %v4076
        %v4454 = vunpack.c.l.b16 %v4077
        %v4455 = vunpack.c.h.b16 %v4077
        %v4456 = vunpack.c.l.b16 %v4078
        %v4457 = vunpack.c.h.b16 %v4078
        %v4458 = vunpack.c.l.b16 %v4079
        %v4459 = vunpack.c.h.b16 %v4079
        %v4460 = vunpack.c.l.b16 %v4080
        %v4461 = vunpack.c.h.b16 %v4080
        %v4462 = vunpack.c.l.b16 %v4081
        %v4463 = vunpack.c.h.b16 %v4081
        %v4464 = vunpack.c.l.b16 %v4082
        %v4465 = vunpack.c.h.b16 %v4082
        %v4466 = vunpack.c.l.b16 %v4083
        %v4467 = vunpack.c.h.b16 %v4083
        %v4468 = vpack.c.b16 %v4220, %v4212
        %v4469 = vpack.c.b16 %v4221, %v4213
        %v4470 = vpack.c.b16 %v4222, %v4214
        %v4471 = vpack.c.b16 %v4223, %v4215
        %v4472 = vpack.c.b16 %v4224, %v4216
        %v4473 = vpack.c.b16 %v4225, %v4217
        %v4474 = vpack.c.b16 %v4226, %v4218
        %v4475 = vpack.c.b16 %v4227, %v4219
        %v4476 = vpack.c.b16 %v4236, %v4228
        %v4477 = vpack.c.b16 %v4237, %v4229
        %v4478 = vpack.c.b16 %v4238, %v4230
        %v4479 = vpack.c.b16 %v4239, %v4231
        %v4480 = vpack.c.b16 %v4240, %v4232
        %v4481 = vpack.c.b16 %v4241, %v4233
        %v4482 = vpack.c.b16 %v4242, %v4234
        %v4483 = vpack.c.b16 %v4243, %v4235
        %v4484 = vpack.c.b16 %v4252, %v4244
        %v4485 = vpack.c.b16 %v4253, %v4245
        %v4486 = vpack.c.b16 %v4254, %v4246
        %v4487 = vpack.c.b16 %v4255, %v4247
        %v4488 = vpack.c.b16 %v4256, %v4248
        %v4489 = vpack.c.b16 %v4257, %v4249
        %v4490 = vpack.c.b16 %v4258, %v4250
        %v4491 = vpack.c.b16 %v4259, %v4251
        %v4492 = vpack.c.b16 %v4268, %v4260
        %v4493 = vpack.c.b16 %v4269, %v4261
        %v4494 = vpack.c.b16 %v4270, %v4262
        %v4495 = vpack.c.b16 %v4271, %v4263
        %v4496 = vpack.c.b16 %v4272, %v4264
        %v4497 = vpack.c.b16 %v4273, %v4265
        %v4498 = vpack.c.b16 %v4274, %v4266
        %v4499 = vpack.c.b16 %v4275, %v4267
        %v4500 = vpack.c.b16 %v4284, %v4276
        %v4501 = vpack.c.b16 %v4285, %v4277
        %v4502 = vpack.c.b16 %v4286, %v4278
        %v4503 = vpack.c.b16 %v4287, %v4279
        %v4504 = vpack.c.b16 %v4288, %v4280
        %v4505 = vpack.c.b16 %v4289, %v4281
        %v4506 = vpack.c.b16 %v4290, %v4282
        %v4507 = vpack.c.b16 %v4291, %v4283
        %v4508 = vpack.c.b16 %v4300, %v4292
        %v4509 = vpack.c.b16 %v4301, %v4293
        %v4510 = vpack.c.b16 %v4302, %v4294
        %v4511 = vpack.c.b16 %v4303, %v4295
        %v4512 = vpack.c.b16 %v4304, %v4296
        %v4513 = vpack.c.b16 %v4305, %v4297
        %v4514 = vpack.c.b16 %v4306, %v4298
        %v4515 = vpack.c.b16 %v4307, %v4299
        %v4516 = vpack.c.b16 %v4316, %v4308
        %v4517 = vpack.c.b16 %v4317, %v4309
        %v4518 = vpack.c.b16 %v4318, %v4310
        %v4519 = vpack.c.b16 %v4319, %v4311
        %v4520 = vpack.c.b16 %v4320, %v4312
        %v4521 = vpack.c.b16 %v4321, %v4313
        %v4522 = vpack.c.b16 %v4322, %v4314
        %v4523 = vpack.c.b16 %v4323, %v4315
        %v4524 = vpack.c.b16 %v4332, %v4324
        %v4525 = vpack.c.b16 %v4333, %v4325
        %v4526 = vpack.c.b16 %v4334, %v4326
        %v4527 = vpack.c.b16 %v4335, %v4327
        %v4528 = vpack.c.b16 %v4336, %v4328
        %v4529 = vpack.c.b16 %v4337, %v4329
        %v4530 = vpack.c.b16 %v4338, %v4330
        %v4531 = vpack.c.b16 %v4339, %v4331
        %v4532 = vpack.c.b16 %v4348, %v4340
        %v4533 = vpack.c.b16 %v4349, %v4341
        %v4534 = vpack.c.b16 %v4350, %v4342
        %v4535 = vpack.c.b16 %v4351, %v4343
        %v4536 = vpack.c.b16 %v4352, %v4344
        %v4537 = vpack.c.b16 %v4353, %v4345
        %v4538 = vpack.c.b16 %v4354, %v4346
        %v4539 = vpack.c.b16 %v4355, %v4347
        %v4540 = vpack.c.b16 %v4364, %v4356
        %v4541 = vpack.c.b16 %v4365, %v4357
        %v4542 = vpack.c.b16 %v4366, %v4358
        %v4543 = vpack.c.b16 %v4367, %v4359
        %v4544 = vpack.c.b16 %v4368, %v4360
        %v4545 = vpack.c.b16 %v4369, %v4361
        %v4546 = vpack.c.b16 %v4370, %v4362
        %v4547 = vpack.c.b16 %v4371, %v4363
        %v4548 = vpack.c.b16 %v4380, %v4372
        %v4549 = vpack.c.b16 %v4381, %v4373
        %v4550 = vpack.c.b16 %v4382, %v4374
        %v4551 = vpack.c.b16 %v4383, %v4375
        %v4552 = vpack.c.b16 %v4384, %v4376
        %v4553 = vpack.c.b16 %v4385, %v4377
        %v4554 = vpack.c.b16 %v4386, %v4378
        %v4555 = vpack.c.b16 %v4387, %v4379
        %v4556 = vpack.c.b16 %v4396, %v4388
        %v4557 = vpack.c.b16 %v4397, %v4389
        %v4558 = vpack.c.b16 %v4398, %v4390
        %v4559 = vpack.c.b16 %v4399, %v4391
        %v4560 = vpack.c.b16 %v4400, %v4392
        %v4561 = vpack.c.b16 %v4401, %v4393
        %v4562 = vpack.c.b16 %v4402, %v4394
        %v4563 = vpack.c.b16 %v4403, %v4395
        %v4564 = vpack.c.b16 %v4412, %v4404
        %v4565 = vpack.c.b16 %v4413, %v4405
        %v4566 = vpack.c.b16 %v4414, %v4406
        %v4567 = vpack.c.b16 %v4415, %v4407
        %v4568 = vpack.c.b16 %v4416, %v4408
        %v4569 = vpack.c.b16 %v4417, %v4409
        %v4570 = vpack.c.b16 %v4418, %v4410
        %v4571 = vpack.c.b16 %v4419, %v4411
        %v4572 = vpack.c.b16 %v4428, %v4420
        %v4573 = vpack.c.b16 %v4429, %v4421
        %v4574 = vpack.c.b16 %v4430, %v4422
        %v4575 = vpack.c.b16 %v4431, %v4423
        %v4576 = vpack.c.b16 %v4432, %v4424
        %v4577 = vpack.c.b16 %v4433, %v4425
        %v4578 = vpack.c.b16 %v4434, %v4426
        %v4579 = vpack.c.b16 %v4435, %v4427
        %v4580 = vpack.c.b16 %v4444, %v4436
        %v4581 = vpack.c.b16 %v4445, %v4437
        %v4582 = vpack.c.b16 %v4446, %v4438
        %v4583 = vpack.c.b16 %v4447, %v4439
        %v4584 = vpack.c.b16 %v4448, %v4440
        %v4585 = vpack.c.b16 %v4449, %v4441
        %v4586 = vpack.c.b16 %v4450, %v4442
        %v4587 = vpack.c.b16 %v4451, %v4443
        %v4588 = vpack.c.b16 %v4460, %v4452
        %v4589 = vpack.c.b16 %v4461, %v4453
        %v4590 = vpack.c.b16 %v4462, %v4454
        %v4591 = vpack.c.b16 %v4463, %v4455
        %v4592 = vpack.c.b16 %v4464, %v4456
        %v4593 = vpack.c.b16 %v4465, %v4457
        %v4594 = vpack.c.b16 %v4466, %v4458
        %v4595 = vpack.c.b16 %v4467, %v4459
        %4724 = vmatprep.subr.bf16.mxu0 %v4469
        %4725 = vmatpush1.bf16.msra.mxu0 %v4468
        %4726 = vmatprep.subr.bf16.mxu0 %v4477
        %4727 = vmatpush1.bf16.msra.mxu0 %v4476
        %4728 = vmatprep.subr.bf16.mxu0 %v4485
        %4729 = vmatpush1.bf16.msra.mxu0 %v4484
        %4730 = vmatprep.subr.bf16.mxu0 %v4493
        %4731 = vmatpush1.bf16.msra.mxu0 %v4492
        %4732 = vmatprep.subr.bf16.mxu0 %v4501
        %4733 = vmatpush1.bf16.msra.mxu0 %v4500
        %4734 = vmatprep.subr.bf16.mxu0 %v4509
        %4735 = vmatpush1.bf16.msra.mxu0 %v4508
        %4736 = vmatprep.subr.bf16.mxu0 %v4517
        %4737 = vmatpush1.bf16.msra.mxu0 %v4516
        %4738 = vmatprep.subr.bf16.mxu0 %v4525
        %4739 = vmatpush1.bf16.msra.mxu0 %v4524
        %4740 = vmatprep.subr.bf16.mxu0 %v4533
        %4741 = vmatpush1.bf16.msra.mxu0 %v4532
        %4742 = vmatprep.subr.bf16.mxu0 %v4541
        %4743 = vmatpush1.bf16.msra.mxu0 %v4540
        %4744 = vmatprep.subr.bf16.mxu0 %v4549
        %4745 = vmatpush1.bf16.msra.mxu0 %v4548
        %4746 = vmatprep.subr.bf16.mxu0 %v4557
        %4747 = vmatpush1.bf16.msra.mxu0 %v4556
        %4748 = vmatprep.subr.bf16.mxu0 %v4565
        %4749 = vmatpush1.bf16.msra.mxu0 %v4564
        %4750 = vmatprep.subr.bf16.mxu0 %v4573
        %4751 = vmatpush1.bf16.msra.mxu0 %v4572
        %4752 = vmatprep.subr.bf16.mxu0 %v4581
        %4753 = vmatpush1.bf16.msra.mxu0 %v4580
        %4754 = vmatprep.subr.bf16.mxu0 %v4589
        %4755 = vmatpush1.bf16.msra.mxu0 %v4588
        %4756 = vmatprep.mubr.bf16.mxu0 %v3955
        %4757 = vmatmul.mubr.bf16.gmra.mrb[0].mxu0 %v3954
        %v4758 = vpop.f32.mrb[0].mxu0
        %v4759 = vadd.f32 0.0, %v4758
        %v4760 = vpop.f32.mrb[0].mxu0
        %v4761 = vadd.f32 0.0, %v4760
        %v4762 = vpop.f32.mrb[0].mxu0
        %v4763 = vpop.f32.mrb[0].mxu0
        %4764 = vdwg.mxu0
        %4765 = vmatprep.subr.bf16.mxu0 %v4471
        %4766 = vmatpush1.bf16.msra.mxu0 %v4470
        %4767 = vmatprep.subr.bf16.mxu0 %v4479
        %4768 = vmatpush1.bf16.msra.mxu0 %v4478
        %4769 = vmatprep.subr.bf16.mxu0 %v4487
        %4770 = vmatpush1.bf16.msra.mxu0 %v4486
        %4771 = vmatprep.subr.bf16.mxu0 %v4495
        %4772 = vmatpush1.bf16.msra.mxu0 %v4494
        %4773 = vmatprep.subr.bf16.mxu0 %v4503
        %4774 = vmatpush1.bf16.msra.mxu0 %v4502
        %4775 = vmatprep.subr.bf16.mxu0 %v4511
        %4776 = vmatpush1.bf16.msra.mxu0 %v4510
        %4777 = vmatprep.subr.bf16.mxu0 %v4519
        %4778 = vmatpush1.bf16.msra.mxu0 %v4518
        %4779 = vmatprep.subr.bf16.mxu0 %v4527
        %4780 = vmatpush1.bf16.msra.mxu0 %v4526
        %4781 = vmatprep.subr.bf16.mxu0 %v4535
        %4782 = vmatpush1.bf16.msra.mxu0 %v4534
        %4783 = vmatprep.subr.bf16.mxu0 %v4543
        %4784 = vmatpush1.bf16.msra.mxu0 %v4542
        %4785 = vmatprep.subr.bf16.mxu0 %v4551
        %4786 = vmatpush1.bf16.msra.mxu0 %v4550
        %4787 = vmatprep.subr.bf16.mxu0 %v4559
        %4788 = vmatpush1.bf16.msra.mxu0 %v4558
        %4789 = vmatprep.subr.bf16.mxu0 %v4567
        %4790 = vmatpush1.bf16.msra.mxu0 %v4566
        %4791 = vmatprep.subr.bf16.mxu0 %v4575
        %4792 = vmatpush1.bf16.msra.mxu0 %v4574
        %4793 = vmatprep.subr.bf16.mxu0 %v4583
        %4794 = vmatpush1.bf16.msra.mxu0 %v4582
        %4795 = vmatprep.subr.bf16.mxu0 %v4591
        %4796 = vmatpush1.bf16.msra.mxu0 %v4590
        %4797 = vmatprep.mubr.bf16.mxu0 %v3955
        %4798 = vmatmul.mubr.bf16.gmra.mrb[0].mxu0 %v3954
        %v4799 = vpop.f32.mrb[0].mxu0
        %v4800 = vadd.f32 0.0, %v4799
        %v4801 = vpop.f32.mrb[0].mxu0
        %v4802 = vadd.f32 0.0, %v4801
        %v4803 = vpop.f32.mrb[0].mxu0
        %v4804 = vpop.f32.mrb[0].mxu0
        %4805 = vdwg.mxu0
        %4806 = vmatprep.subr.bf16.mxu0 %v4473
        %4807 = vmatpush1.bf16.msra.mxu0 %v4472
        %4808 = vmatprep.subr.bf16.mxu0 %v4481
        %4809 = vmatpush1.bf16.msra.mxu0 %v4480
        %4810 = vmatprep.subr.bf16.mxu0 %v4489
        %4811 = vmatpush1.bf16.msra.mxu0 %v4488
        %4812 = vmatprep.subr.bf16.mxu0 %v4497
        %4813 = vmatpush1.bf16.msra.mxu0 %v4496
        %4814 = vmatprep.subr.bf16.mxu0 %v4505
        %4815 = vmatpush1.bf16.msra.mxu0 %v4504
        %4816 = vmatprep.subr.bf16.mxu0 %v4513
        %4817 = vmatpush1.bf16.msra.mxu0 %v4512
        %4818 = vmatprep.subr.bf16.mxu0 %v4521
        %4819 = vmatpush1.bf16.msra.mxu0 %v4520
        %4820 = vmatprep.subr.bf16.mxu0 %v4529
        %4821 = vmatpush1.bf16.msra.mxu0 %v4528
        %4822 = vmatprep.subr.bf16.mxu0 %v4537
        %4823 = vmatpush1.bf16.msra.mxu0 %v4536
        %4824 = vmatprep.subr.bf16.mxu0 %v4545
        %4825 = vmatpush1.bf16.msra.mxu0 %v4544
        %4826 = vmatprep.subr.bf16.mxu0 %v4553
        %4827 = vmatpush1.bf16.msra.mxu0 %v4552
        %4828 = vmatprep.subr.bf16.mxu0 %v4561
        %4829 = vmatpush1.bf16.msra.mxu0 %v4560
        %4830 = vmatprep.subr.bf16.mxu0 %v4569
        %4831 = vmatpush1.bf16.msra.mxu0 %v4568
        %4832 = vmatprep.subr.bf16.mxu0 %v4577
        %4833 = vmatpush1.bf16.msra.mxu0 %v4576
        %4834 = vmatprep.subr.bf16.mxu0 %v4585
        %4835 = vmatpush1.bf16.msra.mxu0 %v4584
        %4836 = vmatprep.subr.bf16.mxu0 %v4593
        %4837 = vmatpush1.bf16.msra.mxu0 %v4592
        %4838 = vmatprep.mubr.bf16.mxu0 %v3955
        %4839 = vmatmul.mubr.bf16.gmra.mrb[0].mxu0 %v3954
        %v4840 = vpop.f32.mrb[0].mxu0
        %v4841 = vadd.f32 0.0, %v4840
        %v4842 = vpop.f32.mrb[0].mxu0
        %v4843 = vadd.f32 0.0, %v4842
        %v4844 = vpop.f32.mrb[0].mxu0
        %v4845 = vpop.f32.mrb[0].mxu0
        %4846 = vdwg.mxu0
        %4847 = vmatprep.subr.bf16.mxu0 %v4475
        %4848 = vmatpush1.bf16.msra.mxu0 %v4474
        %4849 = vmatprep.subr.bf16.mxu0 %v4483
        %4850 = vmatpush1.bf16.msra.mxu0 %v4482
        %4851 = vmatprep.subr.bf16.mxu0 %v4491
        %4852 = vmatpush1.bf16.msra.mxu0 %v4490
        %4853 = vmatprep.subr.bf16.mxu0 %v4499
        %4854 = vmatpush1.bf16.msra.mxu0 %v4498
        %4855 = vmatprep.subr.bf16.mxu0 %v4507
        %4856 = vmatpush1.bf16.msra.mxu0 %v4506
        %4857 = vmatprep.subr.bf16.mxu0 %v4515
        %4858 = vmatpush1.bf16.msra.mxu0 %v4514
        %4859 = vmatprep.subr.bf16.mxu0 %v4523
        %4860 = vmatpush1.bf16.msra.mxu0 %v4522
        %4861 = vmatprep.subr.bf16.mxu0 %v4531
        %4862 = vmatpush1.bf16.msra.mxu0 %v4530
        %4863 = vmatprep.subr.bf16.mxu0 %v4539
        %4864 = vmatpush1.bf16.msra.mxu0 %v4538
        %4865 = vmatprep.subr.bf16.mxu0 %v4547
        %4866 = vmatpush1.bf16.msra.mxu0 %v4546
        %4867 = vmatprep.subr.bf16.mxu0 %v4555
        %4868 = vmatpush1.bf16.msra.mxu0 %v4554
        %4869 = vmatprep.subr.bf16.mxu0 %v4563
        %4870 = vmatpush1.bf16.msra.mxu0 %v4562
        %4871 = vmatprep.subr.bf16.mxu0 %v4571
        %4872 = vmatpush1.bf16.msra.mxu0 %v4570
        %4873 = vmatprep.subr.bf16.mxu0 %v4579
        %4874 = vmatpush1.bf16.msra.mxu0 %v4578
        %4875 = vmatprep.subr.bf16.mxu0 %v4587
        %4876 = vmatpush1.bf16.msra.mxu0 %v4586
        %4877 = vmatprep.subr.bf16.mxu0 %v4595
        %4878 = vmatpush1.bf16.msra.mxu0 %v4594
        %4879 = vmatprep.mubr.bf16.mxu0 %v3955
        %4880 = vmatmul.mubr.bf16.gmra.mrb[0].mxu0 %v3954
        %v4881 = vpop.f32.mrb[0].mxu0
        %v4882 = vadd.f32 0.0, %v4881
        %v4883 = vpop.f32.mrb[0].mxu0
        %v4884 = vadd.f32 0.0, %v4883
        %v4885 = vpop.f32.mrb[0].mxu0
        %v4886 = vpop.f32.mrb[0].mxu0
        %4887 = vdwg.mxu0
        %v4888 = vld [vmem:[%s5] sm:$0x3]
        %v4889 = vld [vmem:[#allocation9] sm:$0xff]
        %v4890 = vld [vmem:[#allocation9 + $0x8] sm:$0xff]
        %v4891 = vld [vmem:[#allocation9 + $0x10] sm:$0xff]
        %v4892 = vld [vmem:[#allocation9 + $0x18] sm:$0xff]
        %v4893 = vld [vmem:[#allocation9 + $0x20] sm:$0xff]
        %v4894 = vld [vmem:[#allocation9 + $0x28] sm:$0xff]
        %v4895 = vld [vmem:[#allocation9 + $0x30] sm:$0xff]
        %v4896 = vld [vmem:[#allocation9 + $0x38] sm:$0xff]
        %v4897 = vld [vmem:[#allocation9 + $0x40] sm:$0x1]
        %v4898 = vld [vmem:[#allocation9 + $0x48] sm:$0x1]
        %v4899 = vld [vmem:[#allocation9 + $0x50] sm:$0x1]
        %v4900 = vld [vmem:[#allocation9 + $0x58] sm:$0x1]
        %v4901 = vld [vmem:[#allocation9 + $0x60] sm:$0x1]
        %v4902 = vld [vmem:[#allocation9 + $0x68] sm:$0x1]
        %v4903 = vld [vmem:[#allocation9 + $0x70] sm:$0x1]
        %v4904 = vld [vmem:[#allocation9 + $0x78] sm:$0x1]
        %4905 = vrot.lane.b32.xlu0 %v4759, 33
        %v4906 = vpop.permute.xlu0 %4905
        %4907 = vrot.lane.b32.xlu0 %v4761, 33
        %v4908 = vpop.permute.xlu0 %4907
        %4909 = vrot.lane.b32.xlu0 %v4800, 33
        %v4910 = vpop.permute.xlu0 %4909
        %4911 = vrot.lane.b32.xlu0 %v4802, 33
        %v4912 = vpop.permute.xlu0 %4911
        %4913 = vrot.lane.b32.xlu0 %v4841, 33
        %v4914 = vpop.permute.xlu0 %4913
        %4915 = vrot.lane.b32.xlu0 %v4843, 33
        %v4916 = vpop.permute.xlu0 %4915
        %4917 = vrot.lane.b32.xlu0 %v4882, 33
        %v4918 = vpop.permute.xlu0 %4917
        %4919 = vrot.lane.b32.xlu0 %v4884, 33
        %v4920 = vpop.permute.xlu0 %4919
        %v4921 = vsel %vm627, %v4918, %v4920
        %v4922 = vsel %vm627, %v4916, %v4918
        %v4923 = vsel %vm627, %v4914, %v4916
        %v4924 = vsel %vm627, %v4912, %v4914
        %v4925 = vsel %vm627, %v4910, %v4912
        %v4926 = vsel %vm627, %v4908, %v4910
        %v4927 = vsel %vm627, %v4906, %v4908
        %v4928 = vsel %vm627, %v4920, %v4906
        %v4929 = vlaneseq
        %v4930 = vshrl.u32 %v4929, 7
        %v4931 = vsub.s32 0, %v4930
        %v4932 = vrot.slane %v4889, %v4931
        %v4933 = vlaneseq
        %v4934 = vshrl.u32 %v4933, 7
        %v4935 = vsub.s32 0, %v4934
        %v4936 = vrot.slane %v4890, %v4935
        %v4937 = vlaneseq
        %v4938 = vshrl.u32 %v4937, 7
        %v4939 = vsub.s32 0, %v4938
        %v4940 = vrot.slane %v4891, %v4939
        %v4941 = vlaneseq
        %v4942 = vshrl.u32 %v4941, 7
        %v4943 = vsub.s32 0, %v4942
        %v4944 = vrot.slane %v4892, %v4943
        %v4945 = vlaneseq
        %v4946 = vshrl.u32 %v4945, 7
        %v4947 = vsub.s32 0, %v4946
        %v4948 = vrot.slane %v4893, %v4947
        %v4949 = vlaneseq
        %v4950 = vshrl.u32 %v4949, 7
        %v4951 = vsub.s32 0, %v4950
        %v4952 = vrot.slane %v4894, %v4951
        %v4953 = vlaneseq
        %v4954 = vshrl.u32 %v4953, 7
        %v4955 = vsub.s32 0, %v4954
        %v4956 = vrot.slane %v4895, %v4955
        %v4957 = vlaneseq
        %v4958 = vshrl.u32 %v4957, 7
        %v4959 = vsub.s32 0, %v4958
        %v4960 = vrot.slane %v4896, %v4959
        %v4961 = vmul.f32 %v4928, %v4932
        %v4962 = vmul.f32 %v4927, %v4936
        %v4963 = vmul.f32 %v4926, %v4940
        %v4964 = vmul.f32 %v4925, %v4944
        %v4965 = vmul.f32 %v4924, %v4948
        %v4966 = vmul.f32 %v4923, %v4952
        %v4967 = vmul.f32 %v4922, %v4956
        %v4968 = vmul.f32 %v4921, %v4960
        %4969 = vrot.lane.b32.xlu0 %v4759, 32
        %v4970 = vpop.permute.xlu0 %4969
        %4971 = vrot.lane.b32.xlu0 %v4761, 32
        %v4972 = vpop.permute.xlu0 %4971
        %4973 = vrot.lane.b32.xlu0 %v4800, 32
        %v4974 = vpop.permute.xlu0 %4973
        %4975 = vrot.lane.b32.xlu0 %v4802, 32
        %v4976 = vpop.permute.xlu0 %4975
        %4977 = vrot.lane.b32.xlu0 %v4841, 32
        %v4978 = vpop.permute.xlu0 %4977
        %4979 = vrot.lane.b32.xlu0 %v4843, 32
        %v4980 = vpop.permute.xlu0 %4979
        %4981 = vrot.lane.b32.xlu0 %v4882, 32
        %v4982 = vpop.permute.xlu0 %4981
        %4983 = vrot.lane.b32.xlu0 %v4884, 32
        %v4984 = vpop.permute.xlu0 %4983
        %v4985 = vsel %vm692, %v4982, %v4984
        %v4986 = vsel %vm692, %v4980, %v4982
        %v4987 = vsel %vm692, %v4978, %v4980
        %v4988 = vsel %vm692, %v4976, %v4978
        %v4989 = vsel %vm692, %v4974, %v4976
        %v4990 = vsel %vm692, %v4972, %v4974
        %v4991 = vsel %vm692, %v4970, %v4972
        %v4992 = vsel %vm692, %v4984, %v4970
        %v4993 = vlaneseq
        %v4994 = vshrl.u32 %v4993, 7
        %v4995 = vsub.s32 1, %v4994
        %v4996 = vrot.slane %v4889, %v4995
        %v4997 = vlaneseq
        %v4998 = vshrl.u32 %v4997, 7
        %v4999 = vsub.s32 1, %v4998
        %v5000 = vrot.slane %v4890, %v4999
        %v5001 = vlaneseq
        %v5002 = vshrl.u32 %v5001, 7
        %v5003 = vsub.s32 1, %v5002
        %v5004 = vrot.slane %v4891, %v5003
        %v5005 = vlaneseq
        %v5006 = vshrl.u32 %v5005, 7
        %v5007 = vsub.s32 1, %v5006
        %v5008 = vrot.slane %v4892, %v5007
        %v5009 = vlaneseq
        %v5010 = vshrl.u32 %v5009, 7
        %v5011 = vsub.s32 1, %v5010
        %v5012 = vrot.slane %v4893, %v5011
        %v5013 = vlaneseq
        %v5014 = vshrl.u32 %v5013, 7
        %v5015 = vsub.s32 1, %v5014
        %v5016 = vrot.slane %v4894, %v5015
        %v5017 = vlaneseq
        %v5018 = vshrl.u32 %v5017, 7
        %v5019 = vsub.s32 1, %v5018
        %v5020 = vrot.slane %v4895, %v5019
        %v5021 = vlaneseq
        %v5022 = vshrl.u32 %v5021, 7
        %v5023 = vsub.s32 1, %v5022
        %v5024 = vrot.slane %v4896, %v5023
        %v5025 = vmul.f32 %v4992, %v4996
        %v5026 = vmul.f32 %v4991, %v5000
        %v5027 = vmul.f32 %v4990, %v5004
        %v5028 = vmul.f32 %v4989, %v5008
        %v5029 = vmul.f32 %v4988, %v5012
        %v5030 = vmul.f32 %v4987, %v5016
        %v5031 = vmul.f32 %v4986, %v5020
        %v5032 = vmul.f32 %v4985, %v5024
        %5033 = vrot.lane.b32.xlu0 %v4759, 31
        %v5034 = vpop.permute.xlu0 %5033
        %5035 = vrot.lane.b32.xlu0 %v4761, 31
        %v5036 = vpop.permute.xlu0 %5035
        %5037 = vrot.lane.b32.xlu0 %v4800, 31
        %v5038 = vpop.permute.xlu0 %5037
        %5039 = vrot.lane.b32.xlu0 %v4802, 31
        %v5040 = vpop.permute.xlu0 %5039
        %5041 = vrot.lane.b32.xlu0 %v4841, 31
        %v5042 = vpop.permute.xlu0 %5041
        %5043 = vrot.lane.b32.xlu0 %v4843, 31
        %v5044 = vpop.permute.xlu0 %5043
        %5045 = vrot.lane.b32.xlu0 %v4882, 31
        %v5046 = vpop.permute.xlu0 %5045
        %5047 = vrot.lane.b32.xlu0 %v4884, 31
        %v5048 = vpop.permute.xlu0 %5047
        %v5049 = vsel %vm757, %v5046, %v5048
        %v5050 = vsel %vm757, %v5044, %v5046
        %v5051 = vsel %vm757, %v5042, %v5044
        %v5052 = vsel %vm757, %v5040, %v5042
        %v5053 = vsel %vm757, %v5038, %v5040
        %v5054 = vsel %vm757, %v5036, %v5038
        %v5055 = vsel %vm757, %v5034, %v5036
        %v5056 = vsel %vm757, %v5048, %v5034
        %v5057 = vlaneseq
        %v5058 = vshrl.u32 %v5057, 7
        %v5059 = vsub.s32 2, %v5058
        %v5060 = vrot.slane %v4889, %v5059
        %v5061 = vlaneseq
        %v5062 = vshrl.u32 %v5061, 7
        %v5063 = vsub.s32 2, %v5062
        %v5064 = vrot.slane %v4890, %v5063
        %v5065 = vlaneseq
        %v5066 = vshrl.u32 %v5065, 7
        %v5067 = vsub.s32 2, %v5066
        %v5068 = vrot.slane %v4891, %v5067
        %v5069 = vlaneseq
        %v5070 = vshrl.u32 %v5069, 7
        %v5071 = vsub.s32 2, %v5070
        %v5072 = vrot.slane %v4892, %v5071
        %v5073 = vlaneseq
        %v5074 = vshrl.u32 %v5073, 7
        %v5075 = vsub.s32 2, %v5074
        %v5076 = vrot.slane %v4893, %v5075
        %v5077 = vlaneseq
        %v5078 = vshrl.u32 %v5077, 7
        %v5079 = vsub.s32 2, %v5078
        %v5080 = vrot.slane %v4894, %v5079
        %v5081 = vlaneseq
        %v5082 = vshrl.u32 %v5081, 7
        %v5083 = vsub.s32 2, %v5082
        %v5084 = vrot.slane %v4895, %v5083
        %v5085 = vlaneseq
        %v5086 = vshrl.u32 %v5085, 7
        %v5087 = vsub.s32 2, %v5086
        %v5088 = vrot.slane %v4896, %v5087
        %v5089 = vmul.f32 %v5056, %v5060
        %v5090 = vmul.f32 %v5055, %v5064
        %v5091 = vmul.f32 %v5054, %v5068
        %v5092 = vmul.f32 %v5053, %v5072
        %v5093 = vmul.f32 %v5052, %v5076
        %v5094 = vmul.f32 %v5051, %v5080
        %v5095 = vmul.f32 %v5050, %v5084
        %v5096 = vmul.f32 %v5049, %v5088
        %5097 = vrot.lane.b32.xlu0 %v4759, 1
        %v5098 = vpop.permute.xlu0 %5097
        %5099 = vrot.lane.b32.xlu0 %v4761, 1
        %v5100 = vpop.permute.xlu0 %5099
        %5101 = vrot.lane.b32.xlu0 %v4800, 1
        %v5102 = vpop.permute.xlu0 %5101
        %5103 = vrot.lane.b32.xlu0 %v4802, 1
        %v5104 = vpop.permute.xlu0 %5103
        %5105 = vrot.lane.b32.xlu0 %v4841, 1
        %v5106 = vpop.permute.xlu0 %5105
        %5107 = vrot.lane.b32.xlu0 %v4843, 1
        %v5108 = vpop.permute.xlu0 %5107
        %5109 = vrot.lane.b32.xlu0 %v4882, 1
        %v5110 = vpop.permute.xlu0 %5109
        %5111 = vrot.lane.b32.xlu0 %v4884, 1
        %v5112 = vpop.permute.xlu0 %5111
        %v5113 = vsel %vm887, %v5110, %v5112
        %v5114 = vsel %vm887, %v5108, %v5110
        %v5115 = vsel %vm887, %v5106, %v5108
        %v5116 = vsel %vm887, %v5104, %v5106
        %v5117 = vsel %vm887, %v5102, %v5104
        %v5118 = vsel %vm887, %v5100, %v5102
        %v5119 = vsel %vm887, %v5098, %v5100
        %v5120 = vsel %vm887, %v5112, %v5098
        %v5121 = vlaneseq
        %v5122 = vshrl.u32 %v5121, 7
        %v5123 = vsub.s32 3, %v5122
        %v5124 = vrot.slane %v4889, %v5123
        %v5125 = vlaneseq
        %v5126 = vshrl.u32 %v5125, 7
        %v5127 = vsub.s32 3, %v5126
        %v5128 = vrot.slane %v4890, %v5127
        %v5129 = vlaneseq
        %v5130 = vshrl.u32 %v5129, 7
        %v5131 = vsub.s32 3, %v5130
        %v5132 = vrot.slane %v4891, %v5131
        %v5133 = vlaneseq
        %v5134 = vshrl.u32 %v5133, 7
        %v5135 = vsub.s32 3, %v5134
        %v5136 = vrot.slane %v4892, %v5135
        %v5137 = vlaneseq
        %v5138 = vshrl.u32 %v5137, 7
        %v5139 = vsub.s32 3, %v5138
        %v5140 = vrot.slane %v4893, %v5139
        %v5141 = vlaneseq
        %v5142 = vshrl.u32 %v5141, 7
        %v5143 = vsub.s32 3, %v5142
        %v5144 = vrot.slane %v4894, %v5143
        %v5145 = vlaneseq
        %v5146 = vshrl.u32 %v5145, 7
        %v5147 = vsub.s32 3, %v5146
        %v5148 = vrot.slane %v4895, %v5147
        %v5149 = vlaneseq
        %v5150 = vshrl.u32 %v5149, 7
        %v5151 = vsub.s32 3, %v5150
        %v5152 = vrot.slane %v4896, %v5151
        %v5153 = vmul.f32 %v5120, %v5124
        %v5154 = vmul.f32 %v5119, %v5128
        %v5155 = vmul.f32 %v5118, %v5132
        %v5156 = vmul.f32 %v5117, %v5136
        %v5157 = vmul.f32 %v5116, %v5140
        %v5158 = vmul.f32 %v5115, %v5144
        %v5159 = vmul.f32 %v5114, %v5148
        %v5160 = vmul.f32 %v5113, %v5152
        %5161 = vrot.lane.b32.xlu0 %v4759, 127
        %v5162 = vpop.permute.xlu0 %5161
        %5163 = vrot.lane.b32.xlu0 %v4761, 127
        %v5164 = vpop.permute.xlu0 %5163
        %5165 = vrot.lane.b32.xlu0 %v4800, 127
        %v5166 = vpop.permute.xlu0 %5165
        %5167 = vrot.lane.b32.xlu0 %v4802, 127
        %v5168 = vpop.permute.xlu0 %5167
        %5169 = vrot.lane.b32.xlu0 %v4841, 127
        %v5170 = vpop.permute.xlu0 %5169
        %5171 = vrot.lane.b32.xlu0 %v4843, 127
        %v5172 = vpop.permute.xlu0 %5171
        %5173 = vrot.lane.b32.xlu0 %v4882, 127
        %v5174 = vpop.permute.xlu0 %5173
        %5175 = vrot.lane.b32.xlu0 %v4884, 127
        %v5176 = vpop.permute.xlu0 %5175
        %v5177 = vsel %vm952, %v5174, %v5176
        %v5178 = vsel %vm952, %v5172, %v5174
        %v5179 = vsel %vm952, %v5170, %v5172
        %v5180 = vsel %vm952, %v5168, %v5170
        %v5181 = vsel %vm952, %v5166, %v5168
        %v5182 = vsel %vm952, %v5164, %v5166
        %v5183 = vsel %vm952, %v5162, %v5164
        %v5184 = vsel %vm952, %v5176, %v5162
        %v5185 = vlaneseq
        %v5186 = vshrl.u32 %v5185, 7
        %v5187 = vsub.s32 5, %v5186
        %v5188 = vrot.slane %v4889, %v5187
        %v5189 = vlaneseq
        %v5190 = vshrl.u32 %v5189, 7
        %v5191 = vsub.s32 5, %v5190
        %v5192 = vrot.slane %v4890, %v5191
        %v5193 = vlaneseq
        %v5194 = vshrl.u32 %v5193, 7
        %v5195 = vsub.s32 5, %v5194
        %v5196 = vrot.slane %v4891, %v5195
        %v5197 = vlaneseq
        %v5198 = vshrl.u32 %v5197, 7
        %v5199 = vsub.s32 5, %v5198
        %v5200 = vrot.slane %v4892, %v5199
        %v5201 = vlaneseq
        %v5202 = vshrl.u32 %v5201, 7
        %v5203 = vsub.s32 5, %v5202
        %v5204 = vrot.slane %v4893, %v5203
        %v5205 = vlaneseq
        %v5206 = vshrl.u32 %v5205, 7
        %v5207 = vsub.s32 5, %v5206
        %v5208 = vrot.slane %v4894, %v5207
        %v5209 = vlaneseq
        %v5210 = vshrl.u32 %v5209, 7
        %v5211 = vsub.s32 5, %v5210
        %v5212 = vrot.slane %v4895, %v5211
        %v5213 = vlaneseq
        %v5214 = vshrl.u32 %v5213, 7
        %v5215 = vsub.s32 5, %v5214
        %v5216 = vrot.slane %v4896, %v5215
        %v5217 = vmul.f32 %v5183, %v5188
        %v5218 = vmul.f32 %v5182, %v5192
        %v5219 = vmul.f32 %v5181, %v5196
        %v5220 = vmul.f32 %v5180, %v5200
        %v5221 = vmul.f32 %v5179, %v5204
        %v5222 = vmul.f32 %v5178, %v5208
        %v5223 = vmul.f32 %v5177, %v5212
        %v5224 = vmul.f32 %v5184, %v5216
        %5225 = vrot.lane.b32.xlu0 %v4759, 97
        %v5226 = vpop.permute.xlu0 %5225
        %5227 = vrot.lane.b32.xlu0 %v4761, 97
        %v5228 = vpop.permute.xlu0 %5227
        %5229 = vrot.lane.b32.xlu0 %v4800, 97
        %v5230 = vpop.permute.xlu0 %5229
        %5231 = vrot.lane.b32.xlu0 %v4802, 97
        %v5232 = vpop.permute.xlu0 %5231
        %5233 = vrot.lane.b32.xlu0 %v4841, 97
        %v5234 = vpop.permute.xlu0 %5233
        %5235 = vrot.lane.b32.xlu0 %v4843, 97
        %v5236 = vpop.permute.xlu0 %5235
        %5237 = vrot.lane.b32.xlu0 %v4882, 97
        %v5238 = vpop.permute.xlu0 %5237
        %5239 = vrot.lane.b32.xlu0 %v4884, 97
        %v5240 = vpop.permute.xlu0 %5239
        %v5241 = vsel %vm1082, %v5238, %v5240
        %v5242 = vsel %vm1082, %v5236, %v5238
        %v5243 = vsel %vm1082, %v5234, %v5236
        %v5244 = vsel %vm1082, %v5232, %v5234
        %v5245 = vsel %vm1082, %v5230, %v5232
        %v5246 = vsel %vm1082, %v5228, %v5230
        %v5247 = vsel %vm1082, %v5226, %v5228
        %v5248 = vsel %vm1082, %v5240, %v5226
        %v5249 = vlaneseq
        %v5250 = vshrl.u32 %v5249, 7
        %v5251 = vsub.s32 6, %v5250
        %v5252 = vrot.slane %v4889, %v5251
        %v5253 = vlaneseq
        %v5254 = vshrl.u32 %v5253, 7
        %v5255 = vsub.s32 6, %v5254
        %v5256 = vrot.slane %v4890, %v5255
        %v5257 = vlaneseq
        %v5258 = vshrl.u32 %v5257, 7
        %v5259 = vsub.s32 6, %v5258
        %v5260 = vrot.slane %v4891, %v5259
        %v5261 = vlaneseq
        %v5262 = vshrl.u32 %v5261, 7
        %v5263 = vsub.s32 6, %v5262
        %v5264 = vrot.slane %v4892, %v5263
        %v5265 = vlaneseq
        %v5266 = vshrl.u32 %v5265, 7
        %v5267 = vsub.s32 6, %v5266
        %v5268 = vrot.slane %v4893, %v5267
        %v5269 = vlaneseq
        %v5270 = vshrl.u32 %v5269, 7
        %v5271 = vsub.s32 6, %v5270
        %v5272 = vrot.slane %v4894, %v5271
        %v5273 = vlaneseq
        %v5274 = vshrl.u32 %v5273, 7
        %v5275 = vsub.s32 6, %v5274
        %v5276 = vrot.slane %v4895, %v5275
        %v5277 = vlaneseq
        %v5278 = vshrl.u32 %v5277, 7
        %v5279 = vsub.s32 6, %v5278
        %v5280 = vrot.slane %v4896, %v5279
        %v5281 = vmul.f32 %v5247, %v5252
        %v5282 = vmul.f32 %v5246, %v5256
        %v5283 = vmul.f32 %v5245, %v5260
        %v5284 = vmul.f32 %v5244, %v5264
        %v5285 = vmul.f32 %v5243, %v5268
        %v5286 = vmul.f32 %v5242, %v5272
        %v5287 = vmul.f32 %v5241, %v5276
        %v5288 = vmul.f32 %v5248, %v5280
        %5289 = vrot.lane.b32.xlu0 %v4759, 96
        %v5290 = vpop.permute.xlu0 %5289
        %5291 = vrot.lane.b32.xlu0 %v4761, 96
        %v5292 = vpop.permute.xlu0 %5291
        %5293 = vrot.lane.b32.xlu0 %v4800, 96
        %v5294 = vpop.permute.xlu0 %5293
        %5295 = vrot.lane.b32.xlu0 %v4802, 96
        %v5296 = vpop.permute.xlu0 %5295
        %5297 = vrot.lane.b32.xlu0 %v4841, 96
        %v5298 = vpop.permute.xlu0 %5297
        %5299 = vrot.lane.b32.xlu0 %v4843, 96
        %v5300 = vpop.permute.xlu0 %5299
        %5301 = vrot.lane.b32.xlu0 %v4882, 96
        %v5302 = vpop.permute.xlu0 %5301
        %5303 = vrot.lane.b32.xlu0 %v4884, 96
        %v5304 = vpop.permute.xlu0 %5303
        %v5305 = vsel %vm1147, %v5302, %v5304
        %v5306 = vsel %vm1147, %v5300, %v5302
        %v5307 = vsel %vm1147, %v5298, %v5300
        %v5308 = vsel %vm1147, %v5296, %v5298
        %v5309 = vsel %vm1147, %v5294, %v5296
        %v5310 = vsel %vm1147, %v5292, %v5294
        %v5311 = vsel %vm1147, %v5290, %v5292
        %v5312 = vsel %vm1147, %v5304, %v5290
        %v5313 = vlaneseq
        %v5314 = vshrl.u32 %v5313, 7
        %v5315 = vsub.s32 7, %v5314
        %v5316 = vrot.slane %v4889, %v5315
        %v5317 = vlaneseq
        %v5318 = vshrl.u32 %v5317, 7
        %v5319 = vsub.s32 7, %v5318
        %v5320 = vrot.slane %v4890, %v5319
        %v5321 = vlaneseq
        %v5322 = vshrl.u32 %v5321, 7
        %v5323 = vsub.s32 7, %v5322
        %v5324 = vrot.slane %v4891, %v5323
        %v5325 = vlaneseq
        %v5326 = vshrl.u32 %v5325, 7
        %v5327 = vsub.s32 7, %v5326
        %v5328 = vrot.slane %v4892, %v5327
        %v5329 = vlaneseq
        %v5330 = vshrl.u32 %v5329, 7
        %v5331 = vsub.s32 7, %v5330
        %v5332 = vrot.slane %v4893, %v5331
        %v5333 = vlaneseq
        %v5334 = vshrl.u32 %v5333, 7
        %v5335 = vsub.s32 7, %v5334
        %v5336 = vrot.slane %v4894, %v5335
        %v5337 = vlaneseq
        %v5338 = vshrl.u32 %v5337, 7
        %v5339 = vsub.s32 7, %v5338
        %v5340 = vrot.slane %v4895, %v5339
        %v5341 = vlaneseq
        %v5342 = vshrl.u32 %v5341, 7
        %v5343 = vsub.s32 7, %v5342
        %v5344 = vrot.slane %v4896, %v5343
        %v5345 = vmul.f32 %v5311, %v5316
        %v5346 = vmul.f32 %v5310, %v5320
        %v5347 = vmul.f32 %v5309, %v5324
        %v5348 = vmul.f32 %v5308, %v5328
        %v5349 = vmul.f32 %v5307, %v5332
        %v5350 = vmul.f32 %v5306, %v5336
        %v5351 = vmul.f32 %v5305, %v5340
        %v5352 = vmul.f32 %v5312, %v5344
        %5353 = vrot.lane.b32.xlu0 %v4759, 95
        %v5354 = vpop.permute.xlu0 %5353
        %5355 = vrot.lane.b32.xlu0 %v4761, 95
        %v5356 = vpop.permute.xlu0 %5355
        %5357 = vrot.lane.b32.xlu0 %v4800, 95
        %v5358 = vpop.permute.xlu0 %5357
        %5359 = vrot.lane.b32.xlu0 %v4802, 95
        %v5360 = vpop.permute.xlu0 %5359
        %5361 = vrot.lane.b32.xlu0 %v4841, 95
        %v5362 = vpop.permute.xlu0 %5361
        %5363 = vrot.lane.b32.xlu0 %v4843, 95
        %v5364 = vpop.permute.xlu0 %5363
        %5365 = vrot.lane.b32.xlu0 %v4882, 95
        %v5366 = vpop.permute.xlu0 %5365
        %5367 = vrot.lane.b32.xlu0 %v4884, 95
        %v5368 = vpop.permute.xlu0 %5367
        %v5369 = vsel %vm1212, %v5366, %v5368
        %v5370 = vsel %vm1212, %v5364, %v5366
        %v5371 = vsel %vm1212, %v5362, %v5364
        %v5372 = vsel %vm1212, %v5360, %v5362
        %v5373 = vsel %vm1212, %v5358, %v5360
        %v5374 = vsel %vm1212, %v5356, %v5358
        %v5375 = vsel %vm1212, %v5354, %v5356
        %v5376 = vsel %vm1212, %v5368, %v5354
        %v5377 = vlaneseq
        %v5378 = vshrl.u32 %v5377, 7
        %v5379 = vsub.s32 0, %v5378
        %v5380 = vrot.slane %v4897, %v5379
        %v5381 = vlaneseq
        %v5382 = vshrl.u32 %v5381, 7
        %v5383 = vsub.s32 0, %v5382
        %v5384 = vrot.slane %v4898, %v5383
        %v5385 = vlaneseq
        %v5386 = vshrl.u32 %v5385, 7
        %v5387 = vsub.s32 0, %v5386
        %v5388 = vrot.slane %v4899, %v5387
        %v5389 = vlaneseq
        %v5390 = vshrl.u32 %v5389, 7
        %v5391 = vsub.s32 0, %v5390
        %v5392 = vrot.slane %v4900, %v5391
        %v5393 = vlaneseq
        %v5394 = vshrl.u32 %v5393, 7
        %v5395 = vsub.s32 0, %v5394
        %v5396 = vrot.slane %v4901, %v5395
        %v5397 = vlaneseq
        %v5398 = vshrl.u32 %v5397, 7
        %v5399 = vsub.s32 0, %v5398
        %v5400 = vrot.slane %v4902, %v5399
        %v5401 = vlaneseq
        %v5402 = vshrl.u32 %v5401, 7
        %v5403 = vsub.s32 0, %v5402
        %v5404 = vrot.slane %v4903, %v5403
        %v5405 = vlaneseq
        %v5406 = vshrl.u32 %v5405, 7
        %v5407 = vsub.s32 0, %v5406
        %v5408 = vrot.slane %v4904, %v5407
        %v5409 = vmul.f32 %v5375, %v5380
        %v5410 = vmul.f32 %v5374, %v5384
        %v5411 = vmul.f32 %v5373, %v5388
        %v5412 = vmul.f32 %v5372, %v5392
        %v5413 = vmul.f32 %v5371, %v5396
        %v5414 = vmul.f32 %v5370, %v5400
        %v5415 = vmul.f32 %v5369, %v5404
        %v5416 = vmul.f32 %v5376, %v5408
        %v5417 = vpack.c.bf16 %v5025, %v4961
        %v5418 = vpack.c.bf16 %v5026, %v4962
        %v5419 = vpack.c.bf16 %v5027, %v4963
        %v5420 = vpack.c.bf16 %v5028, %v4964
        %v5421 = vpack.c.bf16 %v5029, %v4965
        %v5422 = vpack.c.bf16 %v5030, %v4966
        %v5423 = vpack.c.bf16 %v5031, %v4967
        %v5424 = vpack.c.bf16 %v5032, %v4968
        %v5425 = vpack.c.bf16 %v5153, %v5089
        %v5426 = vpack.c.bf16 %v5154, %v5090
        %v5427 = vpack.c.bf16 %v5155, %v5091
        %v5428 = vpack.c.bf16 %v5156, %v5092
        %v5429 = vpack.c.bf16 %v5157, %v5093
        %v5430 = vpack.c.bf16 %v5158, %v5094
        %v5431 = vpack.c.bf16 %v5159, %v5095
        %v5432 = vpack.c.bf16 %v5160, %v5096
        %v5433 = vpack.c.bf16 %v5217, %v4759
        %v5434 = vpack.c.bf16 %v5218, %v4761
        %v5435 = vpack.c.bf16 %v5219, %v4800
        %v5436 = vpack.c.bf16 %v5220, %v4802
        %v5437 = vpack.c.bf16 %v5221, %v4841
        %v5438 = vpack.c.bf16 %v5222, %v4843
        %v5439 = vpack.c.bf16 %v5223, %v4882
        %v5440 = vpack.c.bf16 %v5224, %v4884
        %v5441 = vpack.c.bf16 %v5345, %v5281
        %v5442 = vpack.c.bf16 %v5346, %v5282
        %v5443 = vpack.c.bf16 %v5347, %v5283
        %v5444 = vpack.c.bf16 %v5348, %v5284
        %v5445 = vpack.c.bf16 %v5349, %v5285
        %v5446 = vpack.c.bf16 %v5350, %v5286
        %v5447 = vpack.c.bf16 %v5351, %v5287
        %v5448 = vpack.c.bf16 %v5352, %v5288
        %v5449 = vpack.c.bf16 %v5409, %v5409
        %v5450 = vpack.c.bf16 %v5410, %v5410
        %v5451 = vpack.c.bf16 %v5411, %v5411
        %v5452 = vpack.c.bf16 %v5412, %v5412
        %v5453 = vpack.c.bf16 %v5413, %v5413
        %v5454 = vpack.c.bf16 %v5414, %v5414
        %v5455 = vpack.c.bf16 %v5415, %v5415
        %v5456 = vpack.c.bf16 %v5416, %v5416
        %vm5457 = vcmask 588800
        %v5459 = vsel %vm5457, %v4888, 0
        %vm5461 = vcmask 1043456
        %v5463 = vsel %vm5461, %v5449, 0
        %v5466 = vsel %vm5461, %v5450, 0
        %v5469 = vsel %vm5461, %v5451, 0
        %v5472 = vsel %vm5461, %v5452, 0
        %v5475 = vsel %vm5461, %v5453, 0
        %v5478 = vsel %vm5461, %v5454, 0
        %v5481 = vsel %vm5461, %v5455, 0
        %v5484 = vsel %vm5461, %v5456, 0
        %5486 = vmatprep.subr.bf16.mxu0 %v5418
        %5487 = vmatpush1.bf16.msra.mxu0 %v5417
        %5488 = vmatprep.subr.bf16.mxu0 %v5426
        %5489 = vmatpush1.bf16.msra.mxu0 %v5425
        %5490 = vmatprep.subr.bf16.mxu0 %v5434
        %5491 = vmatpush1.bf16.msra.mxu0 %v5433
        %5492 = vmatprep.subr.bf16.mxu0 %v5442
        %5493 = vmatpush1.bf16.msra.mxu0 %v5441
        %5494 = vmatprep.subr.bf16.mxu0 %v5466
        %5495 = vmatpush1.bf16.msra.mxu0 %v5463
        %5496 = vmatprep.subr.bf16.mxu0 0
        %5497 = vmatpush1.bf16.msra.mxu0 0
        %5498 = vmatprep.subr.bf16.mxu0 0
        %5499 = vmatpush1.bf16.msra.mxu0 0
        %5500 = vmatprep.subr.bf16.mxu0 0
        %5501 = vmatpush1.bf16.msra.mxu0 0
        %5502 = vmatprep.subr.bf16.mxu0 0
        %5503 = vmatpush1.bf16.msra.mxu0 0
        %5504 = vmatprep.subr.bf16.mxu0 0
        %5505 = vmatpush1.bf16.msra.mxu0 0
        %5506 = vmatprep.subr.bf16.mxu0 0
        %5507 = vmatpush1.bf16.msra.mxu0 0
        %5508 = vmatprep.subr.bf16.mxu0 0
        %5509 = vmatpush1.bf16.msra.mxu0 0
        %5510 = vmatprep.subr.bf16.mxu0 0
        %5511 = vmatpush1.bf16.msra.mxu0 0
        %5512 = vmatprep.subr.bf16.mxu0 0
        %5513 = vmatpush1.bf16.msra.mxu0 0
        %5514 = vmatprep.subr.bf16.mxu0 0
        %5515 = vmatpush1.bf16.msra.mxu0 0
        %5516 = vmatprep.subr.bf16.mxu0 0
        %5517 = vmatpush1.bf16.msra.mxu0 0
        %5518 = vmatprep.mubr.bf16.mxu0 0
        %5519 = vmatmul.mubr.bf16.gmra.mrb[0].mxu0 %v5459
        %v5520 = vpop.f32.mrb[0].mxu0
        %v5521 = vadd.f32 0.0, %v5520
        %v5522 = vpop.f32.mrb[0].mxu0
        %v5523 = vadd.f32 0.0, %v5522
        %v5524 = vpop.f32.mrb[0].mxu0
        %v5525 = vpop.f32.mrb[0].mxu0
        %5526 = vdwg.mxu0
        %5527 = vmatprep.subr.bf16.mxu0 %v5420
        %5528 = vmatpush1.bf16.msra.mxu0 %v5419
        %5529 = vmatprep.subr.bf16.mxu0 %v5428
        %5530 = vmatpush1.bf16.msra.mxu0 %v5427
        %5531 = vmatprep.subr.bf16.mxu0 %v5436
        %5532 = vmatpush1.bf16.msra.mxu0 %v5435
        %5533 = vmatprep.subr.bf16.mxu0 %v5444
        %5534 = vmatpush1.bf16.msra.mxu0 %v5443
        %5535 = vmatprep.subr.bf16.mxu0 %v5472
        %5536 = vmatpush1.bf16.msra.mxu0 %v5469
        %5537 = vmatprep.subr.bf16.mxu0 0
        %5538 = vmatpush1.bf16.msra.mxu0 0
        %5539 = vmatprep.subr.bf16.mxu0 0
        %5540 = vmatpush1.bf16.msra.mxu0 0
        %5541 = vmatprep.subr.bf16.mxu0 0
        %5542 = vmatpush1.bf16.msra.mxu0 0
        %5543 = vmatprep.subr.bf16.mxu0 0
        %5544 = vmatpush1.bf16.msra.mxu0 0
        %5545 = vmatprep.subr.bf16.mxu0 0
        %5546 = vmatpush1.bf16.msra.mxu0 0
        %5547 = vmatprep.subr.bf16.mxu0 0
        %5548 = vmatpush1.bf16.msra.mxu0 0
        %5549 = vmatprep.subr.bf16.mxu0 0
        %5550 = vmatpush1.bf16.msra.mxu0 0
        %5551 = vmatprep.subr.bf16.mxu0 0
        %5552 = vmatpush1.bf16.msra.mxu0 0
        %5553 = vmatprep.subr.bf16.mxu0 0
        %5554 = vmatpush1.bf16.msra.mxu0 0
        %5555 = vmatprep.subr.bf16.mxu0 0
        %5556 = vmatpush1.bf16.msra.mxu0 0
        %5557 = vmatprep.subr.bf16.mxu0 0
        %5558 = vmatpush1.bf16.msra.mxu0 0
        %5559 = vmatprep.mubr.bf16.mxu0 0
        %5560 = vmatmul.mubr.bf16.gmra.mrb[0].mxu0 %v5459
        %v5561 = vpop.f32.mrb[0].mxu0
        %v5562 = vadd.f32 0.0, %v5561
        %v5563 = vpop.f32.mrb[0].mxu0
        %v5564 = vadd.f32 0.0, %v5563
        %v5565 = vpop.f32.mrb[0].mxu0
        %v5566 = vpop.f32.mrb[0].mxu0
        %5567 = vdwg.mxu0
        %5568 = vmatprep.subr.bf16.mxu0 %v5422
        %5569 = vmatpush1.bf16.msra.mxu0 %v5421
        %5570 = vmatprep.subr.bf16.mxu0 %v5430
        %5571 = vmatpush1.bf16.msra.mxu0 %v5429
        %5572 = vmatprep.subr.bf16.mxu0 %v5438
        %5573 = vmatpush1.bf16.msra.mxu0 %v5437
        %5574 = vmatprep.subr.bf16.mxu0 %v5446
        %5575 = vmatpush1.bf16.msra.mxu0 %v5445
        %5576 = vmatprep.subr.bf16.mxu0 %v5478
        %5577 = vmatpush1.bf16.msra.mxu0 %v5475
        %5578 = vmatprep.subr.bf16.mxu0 0
        %5579 = vmatpush1.bf16.msra.mxu0 0
        %5580 = vmatprep.subr.bf16.mxu0 0
        %5581 = vmatpush1.bf16.msra.mxu0 0
        %5582 = vmatprep.subr.bf16.mxu0 0
        %5583 = vmatpush1.bf16.msra.mxu0 0
        %5584 = vmatprep.subr.bf16.mxu0 0
        %5585 = vmatpush1.bf16.msra.mxu0 0
        %5586 = vmatprep.subr.bf16.mxu0 0
        %5587 = vmatpush1.bf16.msra.mxu0 0
        %5588 = vmatprep.subr.bf16.mxu0 0
        %5589 = vmatpush1.bf16.msra.mxu0 0
        %5590 = vmatprep.subr.bf16.mxu0 0
        %5591 = vmatpush1.bf16.msra.mxu0 0
        %5592 = vmatprep.subr.bf16.mxu0 0
        %5593 = vmatpush1.bf16.msra.mxu0 0
        %5594 = vmatprep.subr.bf16.mxu0 0
        %5595 = vmatpush1.bf16.msra.mxu0 0
        %5596 = vmatprep.subr.bf16.mxu0 0
        %5597 = vmatpush1.bf16.msra.mxu0 0
        %5598 = vmatprep.subr.bf16.mxu0 0
        %5599 = vmatpush1.bf16.msra.mxu0 0
        %5600 = vmatprep.mubr.bf16.mxu0 0
        %5601 = vmatmul.mubr.bf16.gmra.mrb[0].mxu0 %v5459
        %v5602 = vpop.f32.mrb[0].mxu0
        %v5603 = vadd.f32 0.0, %v5602
        %v5604 = vpop.f32.mrb[0].mxu0
        %v5605 = vadd.f32 0.0, %v5604
        %v5606 = vpop.f32.mrb[0].mxu0
        %v5607 = vpop.f32.mrb[0].mxu0
        %5608 = vdwg.mxu0
        %5609 = vmatprep.subr.bf16.mxu0 %v5424
        %5610 = vmatpush1.bf16.msra.mxu0 %v5423
        %5611 = vmatprep.subr.bf16.mxu0 %v5432
        %5612 = vmatpush1.bf16.msra.mxu0 %v5431
        %5613 = vmatprep.subr.bf16.mxu0 %v5440
        %5614 = vmatpush1.bf16.msra.mxu0 %v5439
        %5615 = vmatprep.subr.bf16.mxu0 %v5448
        %5616 = vmatpush1.bf16.msra.mxu0 %v5447
        %5617 = vmatprep.subr.bf16.mxu0 %v5484
        %5618 = vmatpush1.bf16.msra.mxu0 %v5481
        %5619 = vmatprep.subr.bf16.mxu0 0
        %5620 = vmatpush1.bf16.msra.mxu0 0
        %5621 = vmatprep.subr.bf16.mxu0 0
        %5622 = vmatpush1.bf16.msra.mxu0 0
        %5623 = vmatprep.subr.bf16.mxu0 0
        %5624 = vmatpush1.bf16.msra.mxu0 0
        %5625 = vmatprep.subr.bf16.mxu0 0
        %5626 = vmatpush1.bf16.msra.mxu0 0
        %5627 = vmatprep.subr.bf16.mxu0 0
        %5628 = vmatpush1.bf16.msra.mxu0 0
        %5629 = vmatprep.subr.bf16.mxu0 0
        %5630 = vmatpush1.bf16.msra.mxu0 0
        %5631 = vmatprep.subr.bf16.mxu0 0
        %5632 = vmatpush1.bf16.msra.mxu0 0
        %5633 = vmatprep.subr.bf16.mxu0 0
        %5634 = vmatpush1.bf16.msra.mxu0 0
        %5635 = vmatprep.subr.bf16.mxu0 0
        %5636 = vmatpush1.bf16.msra.mxu0 0
        %5637 = vmatprep.subr.bf16.mxu0 0
        %5638 = vmatpush1.bf16.msra.mxu0 0
        %5639 = vmatprep.subr.bf16.mxu0 0
        %5640 = vmatpush1.bf16.msra.mxu0 0
        %5641 = vmatprep.mubr.bf16.mxu0 0
        %5642 = vmatmul.mubr.bf16.gmra.mrb[0].mxu0 %v5459
        %v5643 = vpop.f32.mrb[0].mxu0
        %v5644 = vadd.f32 0.0, %v5643
        %v5645 = vpop.f32.mrb[0].mxu0
        %v5646 = vadd.f32 0.0, %v5645
        %v5647 = vpop.f32.mrb[0].mxu0
        %v5648 = vpop.f32.mrb[0].mxu0
        %5649 = vdwg.mxu0
        %v5650 = vtanh.pop %v5521
        %v5651 = vtanh.pop %v5523
        %v5652 = vtanh.pop %v5562
        %v5653 = vtanh.pop %v5564
        %v5654 = vtanh.pop %v5603
        %v5655 = vtanh.pop %v5605
        %v5656 = vtanh.pop %v5644
        %v5657 = vtanh.pop %v5646
        %v5666 = vcombine.low %v5650, %v5651
        %v5667 = vcombine.low %v5652, %v5653
        %v5668 = vcombine.low %v5654, %v5655
        %v5669 = vcombine.low %v5656, %v5657
        %5674 = vst [vmem:[%s582] sm:$0x77] %v5666
        %5675 = vst [vmem:[%s582 + $0x8] sm:$0x77] %v5667
        %5676 = vst [vmem:[%s582 + $0x10] sm:$0x77] %v5668
        %5677 = vst [vmem:[%s582 + $0x18] sm:$0x77] %v5669
        %p5678 = scmp.lt.s32.totalorder %s30, 1
        %s5679 = scalar_select %p5678, %s30, 1
        %s5680 = smul.addr %s5679, 8
        %s5681 = smul.addr %s5680, 4
        %s5682 = scalar_lea.vmem %s15, %s5681
        // Predicated region
        $region105: #{cycle_generator_forward.1} parent=79 // pred_check
          %p5683 = pneg %p368
        $region106: #{cycle_generator_forward.1} parent=79 // pred_check_branch
          %5685 = sbr.rel (%p5683) target = $region108
        $region107: #{cycle_generator_forward.1} parent=79 // pred_region
          _
        $region108: #{cycle_generator_forward.1} parent=79 // pred_fallthru
          _
      $region80: #{cycle_generator_forward.1} parent=5 // pred_fallthru
        _
      %p5686 = scmp.le.s32.totalorder 2, %s25
      // Predicated region
      $region109: #{cycle_generator_forward.1} parent=5 // pred_check
        %p5687 = pneg %p5686
      $region110: #{cycle_generator_forward.1} parent=5 // pred_check_branch
        %5689 = sbr.rel (%p5687) target = $region112
      $region111: #{cycle_generator_forward.1} parent=5 // pred_region
        %s5690 = ssub.s32 %s25, 2
        // Predicated region
        $region113: #{cycle_generator_forward.1} parent=111 // pred_check
          %p5691 = pneg %p374
        $region114: #{cycle_generator_forward.1} parent=111 // pred_check_branch
          %5693 = sbr.rel (%p5691) target = $region116
        $region115: #{cycle_generator_forward.1} parent=111 // pred_region
          %p5694 = scmp.lt.s32.totalorder %s31, 1
          %s5695 = scalar_select %p5694, %s31, 1
          %s5696 = smul.addr %s5695, 8
          %s5697 = smul.addr %s5696, 4
          %s5698 = scalar_lea.vmem %s15, %s5697
        $region116: #{cycle_generator_forward.1} parent=111 // pred_fallthru
          _
      $region112: #{cycle_generator_forward.1} parent=5 // pred_fallthru
        _
    $region6: #{cycle_generator_forward.1} parent=1 // loop_footer
      %s29 = sadd.s32 1, %s25
    $region7: #{cycle_generator_forward.1} parent=1 // loop_footer_branch
      %24 = sbr.rel target = $region3
    $region8: #{cycle_generator_forward.1} parent=1 // loop_exit
      _
    %5699 = vsyncpa [#allocation3], 1
    %s5700 = scalar_lea.sflag [#allocation3], 1
    %5701 = vsyncpa %s5700, 1
    %5702 = vsyncpa [#allocation5], 1
    %5703 = vsyncpa [#allocation8], 1
    %5704 = vsyncpa [#allocation11], 1

</llo_original>
